<compile_context>
chip_gen: v5e
topology: v5e:2x2
jax: 0.10.0
libtpu: 0.0.40
codegen_flags: <defaults>
</compile_context>

<pallas_src>
import functools

import numpy as np
import jax
import jax.numpy as jnp
from jax.experimental import pallas as pl
from jax.experimental.pallas import tpu as pltpu

_VMEM = pl.BlockSpec(memory_space=pltpu.MemorySpace.VMEM)
_VMEM_LIMIT = 32 * 1024 * 1024  # safe scoped limit on v5e/v6e/v7x; needs <2 MiB


# ---------------------------------------------------------------------------
# Fused Pallas kernel: whole forward pass, VMEM resident
# ---------------------------------------------------------------------------
def _lsnet_fused_kernel(*refs, num_classes, dims):
    n_stage = len(dims)
    idx = 0
    tok_ref = refs[idx]; idx += 1
    sel_refs = refs[idx:idx + n_stage - 1]; idx += n_stage - 1   # (4,Tn,To) each
    pool_ref = refs[idx]; idx += 1                                # (B, Tf)
    stage_refs = [refs[idx + 4 * i: idx + 4 * (i + 1)] for i in range(n_stage)]
    idx += 4 * n_stage
    head_w_ref, head_b_ref = refs[idx], refs[idx + 1]
    feat_ref, head_ref = refs[idx + 2], refs[idx + 3]

    def mm(a, b):  # bf16 MXU matmul, f32 accumulation
        return jnp.dot(a.astype(jnp.bfloat16), b.astype(jnp.bfloat16),
                       preferred_element_type=jnp.float32)

    # ---- stage 0: patch-embed projection + pointwise MLP + residual --------
    w1, b1, w2, b2 = stage_refs[0]
    h = jnp.maximum(mm(tok_ref[...], w1[...]) + b1[...], 0.0)
    f = h + jnp.maximum(mm(h, w2[...]) + b2[...], 0.0)

    # ---- stages 1..n-1: 2x2 patch-merge folded as 4 selection matmuls ------
    for i in range(1, n_stage):
        w1, b1, w2, b2 = stage_refs[i]
        s_ref = sel_refs[i - 1]
        d_prev = dims[i - 1]
        w1_v = w1[...]                                   # (4*d_prev, d_i)
        acc = None
        for k in range(4):                               # offsets (0,0)(0,1)(1,0)(1,1)
            part = mm(mm(s_ref[k], f), w1_v[k * d_prev:(k + 1) * d_prev, :])
            acc = part if acc is None else acc + part
        h = acc + b1[...]
        f = h + jnp.maximum(mm(h, w2[...]) + b2[...], 0.0)

    feat_ref[...] = f.astype(feat_ref.dtype)

    # ---- global average pool (matmul) + BN-folded concatenated heads -------
    pooled = mm(pool_ref[...], f)                        # (B, C)
    z = mm(pooled, head_w_ref[...]) + head_b_ref[...]    # (B, num_classes+1)
    col = jax.lax.broadcasted_iota(jnp.int32, z.shape, 1)
    head_ref[...] = jnp.where(col >= num_classes,
                              jax.nn.sigmoid(z), z).astype(head_ref.dtype)


# ---------------------------------------------------------------------------
# Compile-time constant helpers (selection / pooling matrices)
# ---------------------------------------------------------------------------
def _merge_select(b, hc, wc, dtype=jnp.bfloat16):
    """S_k[(b,yn,xn), (b,y,x)] = 1 iff y=2yn+ph, x=2xn+pw with k=2*ph+pw."""
    hn, wn = hc // 2, wc // 2
    mats = np.zeros((4, b * hn * wn, b * hc * wc), np.float32)
    bi, yn, xn = np.meshgrid(np.arange(b), np.arange(hn), np.arange(wn),
                             indexing="ij")
    rn = ((bi * hn + yn) * wn + xn).ravel()
    for ph in range(2):
        for pw in range(2):
            ro = ((bi * hc + 2 * yn + ph) * wc + (2 * xn + pw)).ravel()
            mats[ph * 2 + pw, rn, ro] = 1.0
    return jnp.asarray(mats, dtype)


def _pool_mat(b, t_per_b, dtype=jnp.bfloat16):
    m = np.zeros((b, b * t_per_b), np.float32)
    for bi in range(b):
        m[bi, bi * t_per_b:(bi + 1) * t_per_b] = 1.0 / t_per_b
    return jnp.asarray(m, dtype)


# ---------------------------------------------------------------------------
# Parameter init / prep (matches _init_weights: trunc_normal std=0.02, zero
# bias; BN gamma=1, beta=0, running_mean=0, running_var=1, eps=1e-5).
# Eval-mode BN (applied BEFORE the head Linear, as in the PyTorch Sequential)
# is folded exactly into the head Linear weights.
# ---------------------------------------------------------------------------
def _fold_bn_linear(head, eps=1e-5):
    s = head["gamma"] * jax.lax.rsqrt(head["var"] + eps)   # (1, C)
    t = head["beta"] - head["mean"] * s                    # (1, C)
    w = head["w"] * s.reshape(-1, 1)                       # (C, out)
    b = head["b"] + t @ head["w"]                          # (1, out)
    return w, b


def init_params(key, in_ch=3, dims=(16, 32, 48, 64), patch=2, num_classes=5):
    keys = jax.random.split(key, 2 * len(dims) + 2)

    def trunc(k, shape, std=0.02):
        return (std * jax.random.truncated_normal(k, -2.0, 2.0, shape)
                ).astype(jnp.float32)

    stages = []
    for i, d in enumerate(dims):
        k_in = patch * patch * in_ch if i == 0 else 4 * dims[i - 1]
        stages.append({
            "w1": trunc(keys[2 * i], (k_in, d)).astype(jnp.bfloat16),
            "b1": jnp.zeros((1, d), jnp.float32),
            "w2": trunc(keys[2 * i + 1], (d, d)).astype(jnp.bfloat16),
            "b2": jnp.zeros((1, d), jnp.float32),
        })

    feat = dims[-1]

    def raw_head(kw, out_dim):
        return {"gamma": jnp.ones((1, feat), jnp.float32),
                "beta": jnp.zeros((1, feat), jnp.float32),
                "mean": jnp.zeros((1, feat), jnp.float32),
                "var": jnp.ones((1, feat), jnp.float32),
                "w": trunc(kw, (feat, out_dim)),
                "b": jnp.zeros((1, out_dim), jnp.float32)}

    wc, bc = _fold_bn_linear(raw_head(keys[-2], num_classes))
    wl, bl = _fold_bn_linear(raw_head(keys[-1], 1))

    return {
        "stages": stages,
        # concatenated (cls | logic) head: one matmul, sigmoid on last column
        "head_w": jnp.concatenate([wc, wl], axis=1).astype(jnp.bfloat16),
        "head_b": jnp.concatenate([bc, bl], axis=1),
    }


# ---------------------------------------------------------------------------
# Forward
# ---------------------------------------------------------------------------
def lsnet_multi_task_forward(params, x_nchw, patch=2, use_pallas=True):
    b, c, h, w = x_nchw.shape
    dims = tuple(int(st["w1"].shape[1]) for st in params["stages"])
    n_stage = len(dims)
    num_classes = int(params["head_w"].shape[1]) - 1

    # backbone.patch_embed patchify: one-time XLA rearrange of the raw input
    x = jnp.transpose(x_nchw, (0, 2, 3, 1))                  # NCHW -> NHWC
    hc, wc = h // patch, w // patch
    tok = x.reshape(b, hc, patch, wc, patch, c).transpose(0, 1, 3, 2, 4, 5)
    tok = tok.reshape(b * hc * wc, patch * patch * c)

    # spatial sizes entering each stage (halved by every patch-merge)
    hs, ws = [hc], [wc]
    for _ in range(n_stage - 1):
        hs.append(hs[-1] // 2)
        ws.append(ws[-1] // 2)
    hf, wf = hs[-1], ws[-1]

    if use_pallas:
        sel = [_merge_select(b, hs[i - 1], ws[i - 1]) for i in range(1, n_stage)]
        pool = _pool_mat(b, hf * wf)
        stage_args = []
        for st in params["stages"]:
            stage_args += [st["w1"], st["b1"], st["w2"], st["b2"]]
        n_in = 1 + len(sel) + 1 + len(stage_args) + 2

        feat_tok, head_out = pl.pallas_call(
            functools.partial(_lsnet_fused_kernel,
                              num_classes=num_classes, dims=dims),
            out_shape=(
                jax.ShapeDtypeStruct((b * hf * wf, dims[-1]), jnp.float32),
                jax.ShapeDtypeStruct((b, num_classes + 1), jnp.float32),
            ),
            in_specs=[_VMEM] * n_in,
            out_specs=(_VMEM, _VMEM),
            compiler_params=pltpu.CompilerParams(vmem_limit_bytes=_VMEM_LIMIT),
        )(tok.astype(jnp.bfloat16), *sel, pool, *stage_args,
          params["head_w"], params["head_b"])

        cls_out = head_out[:, :num_classes]
        logic_out = head_out[:, num_classes:]
    else:
        # pure-JAX f32 reference (uses the reshape/transpose merge; identical
        # math to the in-kernel selection-matmul formulation)
        f = tok.astype(jnp.float32)
        st = params["stages"][0]
        h1 = jnp.maximum(f @ st["w1"].astype(jnp.float32) + st["b1"], 0.0)
        f = h1 + jnp.maximum(h1 @ st["w2"].astype(jnp.float32) + st["b2"], 0.0)
        dcur, hcur, wcur = dims[0], hc, wc
        for i in range(1, n_stage):
            st = params["stages"][i]
            f = f.reshape(b, hcur, wcur, dcur)
            f = f.reshape(b, hcur // 2, 2, wcur // 2, 2, dcur)
            f = f.transpose(0, 1, 3, 2, 4, 5)
            hcur //= 2
            wcur //= 2
            x_in = f.reshape(b * hcur * wcur, 4 * dcur)
            dcur = dims[i]
            h1 = x_in @ st["w1"].astype(jnp.float32) + st["b1"]
            f = h1 + jnp.maximum(h1 @ st["w2"].astype(jnp.float32) + st["b2"], 0.0)
        feat_tok = f
        pooled = jnp.mean(f.reshape(b, hcur * wcur, dcur), axis=1)
        z = pooled @ params["head_w"].astype(jnp.float32) + params["head_b"]
        cls_out = z[:, :num_classes]
        logic_out = jax.nn.sigmoid(z[:, num_classes:])

    feat = feat_tok.reshape(b, hf, wf, dims[-1])
    feature_maps = jnp.transpose(feat, (0, 3, 1, 2))          # NHWC -> NCHW
    return {"classification": cls_out, "logic": logic_out,
            "features": feature_maps}


if __name__ == "__main__":
    key = jax.random.PRNGKey(0)
    pkey, xkey = jax.random.split(key)

    params = init_params(pkey, in_ch=3, dims=(16, 32, 48, 64),
                         patch=2, num_classes=5)
    x = jax.random.normal(xkey, (2, 3, 32, 32), dtype=jnp.float32)   # NCHW

    fwd = jax.jit(lsnet_multi_task_forward)
    out = fwd(params, x)
    jax.block_until_ready(out)

    # shape / range sanity checks
    assert out["classification"].shape == (2, 5)
    assert out["logic"].shape == (2, 1)
    assert out["features"].shape == (2, 64, 2, 2)
    assert bool(jnp.all((out["logic"] >= 0.0) & (out["logic"] <= 1.0)))

    # pure-JAX f32 reference (same params; deltas only from bf16 MXU operands)
    ref = lsnet_multi_task_forward(params, x, use_pallas=False)
    assert bool(jnp.max(jnp.abs(out["classification"]
                                - ref["classification"])) < 5e-2)
    assert bool(jnp.max(jnp.abs(out["logic"] - ref["logic"])) < 5e-2)
    assert bool(jnp.max(jnp.abs(out["features"] - ref["features"])) < 5e-2)

    print("KERNEL_OK")
</pallas_src>

<mosaic_0001>
module attributes {stable_mosaic.version = 11 : i64} {
  func.func @_lsnet_fused_kernel(%arg0: memref<512x12xbf16, #tpu.memory_space<vmem>>, %arg1: memref<4x128x512xbf16, #tpu.memory_space<vmem>>, %arg2: memref<4x32x128xbf16, #tpu.memory_space<vmem>>, %arg3: memref<4x8x32xbf16, #tpu.memory_space<vmem>>, %arg4: memref<2x8xbf16, #tpu.memory_space<vmem>>, %arg5: memref<12x16xbf16, #tpu.memory_space<vmem>>, %arg6: memref<1x16xf32, #tpu.memory_space<vmem>>, %arg7: memref<16x16xbf16, #tpu.memory_space<vmem>>, %arg8: memref<1x16xf32, #tpu.memory_space<vmem>>, %arg9: memref<64x32xbf16, #tpu.memory_space<vmem>>, %arg10: memref<1x32xf32, #tpu.memory_space<vmem>>, %arg11: memref<32x32xbf16, #tpu.memory_space<vmem>>, %arg12: memref<1x32xf32, #tpu.memory_space<vmem>>, %arg13: memref<128x48xbf16, #tpu.memory_space<vmem>>, %arg14: memref<1x48xf32, #tpu.memory_space<vmem>>, %arg15: memref<48x48xbf16, #tpu.memory_space<vmem>>, %arg16: memref<1x48xf32, #tpu.memory_space<vmem>>, %arg17: memref<192x64xbf16, #tpu.memory_space<vmem>>, %arg18: memref<1x64xf32, #tpu.memory_space<vmem>>, %arg19: memref<64x64xbf16, #tpu.memory_space<vmem>>, %arg20: memref<1x64xf32, #tpu.memory_space<vmem>>, %arg21: memref<64x6xbf16, #tpu.memory_space<vmem>>, %arg22: memref<1x6xf32, #tpu.memory_space<vmem>>, %arg23: memref<8x64xf32, #tpu.memory_space<vmem>>, %arg24: memref<2x6xf32, #tpu.memory_space<vmem>>) attributes {dimension_semantics = [], scalar_prefetch = 0 : i64, scratch_operands = 0 : i64, tpu.core_type = #tpu.core_type<tc>} {
    %c0 = arith.constant 0 : index
    %c0_0 = arith.constant 0 : index
    %0 = vector.load %arg0[%c0, %c0_0] : memref<512x12xbf16, #tpu.memory_space<vmem>>, vector<512x12xbf16>
    %c0_1 = arith.constant 0 : index
    %c0_2 = arith.constant 0 : index
    %1 = vector.load %arg5[%c0_1, %c0_2] : memref<12x16xbf16, #tpu.memory_space<vmem>>, vector<12x16xbf16>
    %cst = arith.constant dense<0.000000e+00> : vector<512x16xf32>
    %2 = tpu.matmul %0, %1, %cst {dimension_numbers = #tpu.dot_dimension_numbers<[1], [0], [0], [1], [0, 0, 1, 1], [], []>} : vector<512x12xbf16>, vector<12x16xbf16>, vector<512x16xf32> -> vector<512x16xf32>
    %c0_3 = arith.constant 0 : index
    %c0_4 = arith.constant 0 : index
    %3 = vector.load %arg6[%c0_3, %c0_4] : memref<1x16xf32, #tpu.memory_space<vmem>>, vector<1x16xf32>
    %4 = vector.broadcast %3 : vector<1x16xf32> to vector<512x16xf32>
    %5 = arith.addf %2, %4 : vector<512x16xf32>
    %cst_5 = arith.constant 0.000000e+00 : f32
    %6 = vector.broadcast %cst_5 : f32 to vector<512x16xf32>
    %7 = arith.maximumf %5, %6 : vector<512x16xf32>
    %c0_6 = arith.constant 0 : index
    %c0_7 = arith.constant 0 : index
    %8 = vector.load %arg7[%c0_6, %c0_7] : memref<16x16xbf16, #tpu.memory_space<vmem>>, vector<16x16xbf16>
    %9 = arith.truncf %7 : vector<512x16xf32> to vector<512x16xbf16>
    %cst_8 = arith.constant dense<0.000000e+00> : vector<512x16xf32>
    %10 = tpu.matmul %9, %8, %cst_8 {dimension_numbers = #tpu.dot_dimension_numbers<[1], [0], [0], [1], [0, 0, 1, 1], [], []>} : vector<512x16xbf16>, vector<16x16xbf16>, vector<512x16xf32> -> vector<512x16xf32>
    %c0_9 = arith.constant 0 : index
    %c0_10 = arith.constant 0 : index
    %11 = vector.load %arg8[%c0_9, %c0_10] : memref<1x16xf32, #tpu.memory_space<vmem>>, vector<1x16xf32>
    %12 = vector.broadcast %11 : vector<1x16xf32> to vector<512x16xf32>
    %13 = arith.addf %10, %12 : vector<512x16xf32>
    %cst_11 = arith.constant 0.000000e+00 : f32
    %14 = vector.broadcast %cst_11 : f32 to vector<512x16xf32>
    %15 = arith.maximumf %13, %14 : vector<512x16xf32>
    %16 = arith.addf %7, %15 : vector<512x16xf32>
    %c0_12 = arith.constant 0 : index
    %c0_13 = arith.constant 0 : index
    %17 = vector.load %arg9[%c0_12, %c0_13] : memref<64x32xbf16, #tpu.memory_space<vmem>>, vector<64x32xbf16>
    %c0_14 = arith.constant 0 : index
    %c0_15 = arith.constant 0 : index
    %c0_16 = arith.constant 0 : index
    %18 = vector.load %arg1[%c0_14, %c0_15, %c0_16] : memref<4x128x512xbf16, #tpu.memory_space<vmem>>, vector<1x128x512xbf16>
    %19 = vector.shape_cast %18 : vector<1x128x512xbf16> to vector<128x512xbf16>
    %20 = arith.truncf %16 : vector<512x16xf32> to vector<512x16xbf16>
    %cst_17 = arith.constant dense<0.000000e+00> : vector<128x16xf32>
    %21 = tpu.matmul %19, %20, %cst_17 {dimension_numbers = #tpu.dot_dimension_numbers<[1], [0], [0], [1], [0, 0, 1, 1], [], []>} : vector<128x512xbf16>, vector<512x16xbf16>, vector<128x16xf32> -> vector<128x16xf32>
    %22 = vector.extract_strided_slice %17 {offsets = [0, 0], sizes = [16, 32], strides = [1, 1]} : vector<64x32xbf16> to vector<16x32xbf16>
    %23 = arith.truncf %21 : vector<128x16xf32> to vector<128x16xbf16>
    %cst_18 = arith.constant dense<0.000000e+00> : vector<128x32xf32>
    %24 = tpu.matmul %23, %22, %cst_18 {dimension_numbers = #tpu.dot_dimension_numbers<[1], [0], [0], [1], [0, 0, 1, 1], [], []>} : vector<128x16xbf16>, vector<16x32xbf16>, vector<128x32xf32> -> vector<128x32xf32>
    %c1 = arith.constant 1 : index
    %c0_19 = arith.constant 0 : index
    %c0_20 = arith.constant 0 : index
    %25 = vector.load %arg1[%c1, %c0_19, %c0_20] : memref<4x128x512xbf16, #tpu.memory_space<vmem>>, vector<1x128x512xbf16>
    %26 = vector.shape_cast %25 : vector<1x128x512xbf16> to vector<128x512xbf16>
    %27 = arith.truncf %16 : vector<512x16xf32> to vector<512x16xbf16>
    %cst_21 = arith.constant dense<0.000000e+00> : vector<128x16xf32>
    %28 = tpu.matmul %26, %27, %cst_21 {dimension_numbers = #tpu.dot_dimension_numbers<[1], [0], [0], [1], [0, 0, 1, 1], [], []>} : vector<128x512xbf16>, vector<512x16xbf16>, vector<128x16xf32> -> vector<128x16xf32>
    %29 = vector.extract_strided_slice %17 {offsets = [16, 0], sizes = [16, 32], strides = [1, 1]} : vector<64x32xbf16> to vector<16x32xbf16>
    %30 = arith.truncf %28 : vector<128x16xf32> to vector<128x16xbf16>
    %cst_22 = arith.constant dense<0.000000e+00> : vector<128x32xf32>
    %31 = tpu.matmul %30, %29, %cst_22 {dimension_numbers = #tpu.dot_dimension_numbers<[1], [0], [0], [1], [0, 0, 1, 1], [], []>} : vector<128x16xbf16>, vector<16x32xbf16>, vector<128x32xf32> -> vector<128x32xf32>
    %32 = arith.addf %24, %31 : vector<128x32xf32>
    %c2 = arith.constant 2 : index
    %c0_23 = arith.constant 0 : index
    %c0_24 = arith.constant 0 : index
    %33 = vector.load %arg1[%c2, %c0_23, %c0_24] : memref<4x128x512xbf16, #tpu.memory_space<vmem>>, vector<1x128x512xbf16>
    %34 = vector.shape_cast %33 : vector<1x128x512xbf16> to vector<128x512xbf16>
    %35 = arith.truncf %16 : vector<512x16xf32> to vector<512x16xbf16>
    %cst_25 = arith.constant dense<0.000000e+00> : vector<128x16xf32>
    %36 = tpu.matmul %34, %35, %cst_25 {dimension_numbers = #tpu.dot_dimension_numbers<[1], [0], [0], [1], [0, 0, 1, 1], [], []>} : vector<128x512xbf16>, vector<512x16xbf16>, vector<128x16xf32> -> vector<128x16xf32>
    %37 = vector.extract_strided_slice %17 {offsets = [32, 0], sizes = [16, 32], strides = [1, 1]} : vector<64x32xbf16> to vector<16x32xbf16>
    %38 = arith.truncf %36 : vector<128x16xf32> to vector<128x16xbf16>
    %cst_26 = arith.constant dense<0.000000e+00> : vector<128x32xf32>
    %39 = tpu.matmul %38, %37, %cst_26 {dimension_numbers = #tpu.dot_dimension_numbers<[1], [0], [0], [1], [0, 0, 1, 1], [], []>} : vector<128x16xbf16>, vector<16x32xbf16>, vector<128x32xf32> -> vector<128x32xf32>
    %40 = arith.addf %32, %39 : vector<128x32xf32>
    %c3 = arith.constant 3 : index
    %c0_27 = arith.constant 0 : index
    %c0_28 = arith.constant 0 : index
    %41 = vector.load %arg1[%c3, %c0_27, %c0_28] : memref<4x128x512xbf16, #tpu.memory_space<vmem>>, vector<1x128x512xbf16>
    %42 = vector.shape_cast %41 : vector<1x128x512xbf16> to vector<128x512xbf16>
    %43 = arith.truncf %16 : vector<512x16xf32> to vector<512x16xbf16>
    %cst_29 = arith.constant dense<0.000000e+00> : vector<128x16xf32>
    %44 = tpu.matmul %42, %43, %cst_29 {dimension_numbers = #tpu.dot_dimension_numbers<[1], [0], [0], [1], [0, 0, 1, 1], [], []>} : vector<128x512xbf16>, vector<512x16xbf16>, vector<128x16xf32> -> vector<128x16xf32>
    %45 = vector.extract_strided_slice %17 {offsets = [48, 0], sizes = [16, 32], strides = [1, 1]} : vector<64x32xbf16> to vector<16x32xbf16>
    %46 = arith.truncf %44 : vector<128x16xf32> to vector<128x16xbf16>
    %cst_30 = arith.constant dense<0.000000e+00> : vector<128x32xf32>
    %47 = tpu.matmul %46, %45, %cst_30 {dimension_numbers = #tpu.dot_dimension_numbers<[1], [0], [0], [1], [0, 0, 1, 1], [], []>} : vector<128x16xbf16>, vector<16x32xbf16>, vector<128x32xf32> -> vector<128x32xf32>
    %48 = arith.addf %40, %47 : vector<128x32xf32>
    %c0_31 = arith.constant 0 : index
    %c0_32 = arith.constant 0 : index
    %49 = vector.load %arg10[%c0_31, %c0_32] : memref<1x32xf32, #tpu.memory_space<vmem>>, vector<1x32xf32>
    %50 = vector.broadcast %49 : vector<1x32xf32> to vector<128x32xf32>
    %51 = arith.addf %48, %50 : vector<128x32xf32>
    %c0_33 = arith.constant 0 : index
    %c0_34 = arith.constant 0 : index
    %52 = vector.load %arg11[%c0_33, %c0_34] : memref<32x32xbf16, #tpu.memory_space<vmem>>, vector<32x32xbf16>
    %53 = arith.truncf %51 : vector<128x32xf32> to vector<128x32xbf16>
    %cst_35 = arith.constant dense<0.000000e+00> : vector<128x32xf32>
    %54 = tpu.matmul %53, %52, %cst_35 {dimension_numbers = #tpu.dot_dimension_numbers<[1], [0], [0], [1], [0, 0, 1, 1], [], []>} : vector<128x32xbf16>, vector<32x32xbf16>, vector<128x32xf32> -> vector<128x32xf32>
    %c0_36 = arith.constant 0 : index
    %c0_37 = arith.constant 0 : index
    %55 = vector.load %arg12[%c0_36, %c0_37] : memref<1x32xf32, #tpu.memory_space<vmem>>, vector<1x32xf32>
    %56 = vector.broadcast %55 : vector<1x32xf32> to vector<128x32xf32>
    %57 = arith.addf %54, %56 : vector<128x32xf32>
    %cst_38 = arith.constant 0.000000e+00 : f32
    %58 = vector.broadcast %cst_38 : f32 to vector<128x32xf32>
    %59 = arith.maximumf %57, %58 : vector<128x32xf32>
    %60 = arith.addf %51, %59 : vector<128x32xf32>
    %c0_39 = arith.constant 0 : index
    %c0_40 = arith.constant 0 : index
    %61 = vector.load %arg13[%c0_39, %c0_40] : memref<128x48xbf16, #tpu.memory_space<vmem>>, vector<128x48xbf16>
    %c0_41 = arith.constant 0 : index
    %c0_42 = arith.constant 0 : index
    %c0_43 = arith.constant 0 : index
    %62 = vector.load %arg2[%c0_41, %c0_42, %c0_43] : memref<4x32x128xbf16, #tpu.memory_space<vmem>>, vector<1x32x128xbf16>
    %63 = vector.shape_cast %62 : vector<1x32x128xbf16> to vector<32x128xbf16>
    %64 = arith.truncf %60 : vector<128x32xf32> to vector<128x32xbf16>
    %cst_44 = arith.constant dense<0.000000e+00> : vector<32x32xf32>
    %65 = tpu.matmul %63, %64, %cst_44 {dimension_numbers = #tpu.dot_dimension_numbers<[1], [0], [0], [1], [0, 0, 1, 1], [], []>} : vector<32x128xbf16>, vector<128x32xbf16>, vector<32x32xf32> -> vector<32x32xf32>
    %66 = vector.extract_strided_slice %61 {offsets = [0, 0], sizes = [32, 48], strides = [1, 1]} : vector<128x48xbf16> to vector<32x48xbf16>
    %67 = arith.truncf %65 : vector<32x32xf32> to vector<32x32xbf16>
    %cst_45 = arith.constant dense<0.000000e+00> : vector<32x48xf32>
    %68 = tpu.matmul %67, %66, %cst_45 {dimension_numbers = #tpu.dot_dimension_numbers<[1], [0], [0], [1], [0, 0, 1, 1], [], []>} : vector<32x32xbf16>, vector<32x48xbf16>, vector<32x48xf32> -> vector<32x48xf32>
    %c1_46 = arith.constant 1 : index
    %c0_47 = arith.constant 0 : index
    %c0_48 = arith.constant 0 : index
    %69 = vector.load %arg2[%c1_46, %c0_47, %c0_48] : memref<4x32x128xbf16, #tpu.memory_space<vmem>>, vector<1x32x128xbf16>
    %70 = vector.shape_cast %69 : vector<1x32x128xbf16> to vector<32x128xbf16>
    %71 = arith.truncf %60 : vector<128x32xf32> to vector<128x32xbf16>
    %cst_49 = arith.constant dense<0.000000e+00> : vector<32x32xf32>
    %72 = tpu.matmul %70, %71, %cst_49 {dimension_numbers = #tpu.dot_dimension_numbers<[1], [0], [0], [1], [0, 0, 1, 1], [], []>} : vector<32x128xbf16>, vector<128x32xbf16>, vector<32x32xf32> -> vector<32x32xf32>
    %73 = vector.extract_strided_slice %61 {offsets = [32, 0], sizes = [32, 48], strides = [1, 1]} : vector<128x48xbf16> to vector<32x48xbf16>
    %74 = arith.truncf %72 : vector<32x32xf32> to vector<32x32xbf16>
    %cst_50 = arith.constant dense<0.000000e+00> : vector<32x48xf32>
    %75 = tpu.matmul %74, %73, %cst_50 {dimension_numbers = #tpu.dot_dimension_numbers<[1], [0], [0], [1], [0, 0, 1, 1], [], []>} : vector<32x32xbf16>, vector<32x48xbf16>, vector<32x48xf32> -> vector<32x48xf32>
    %76 = arith.addf %68, %75 : vector<32x48xf32>
    %c2_51 = arith.constant 2 : index
    %c0_52 = arith.constant 0 : index
    %c0_53 = arith.constant 0 : index
    %77 = vector.load %arg2[%c2_51, %c0_52, %c0_53] : memref<4x32x128xbf16, #tpu.memory_space<vmem>>, vector<1x32x128xbf16>
    %78 = vector.shape_cast %77 : vector<1x32x128xbf16> to vector<32x128xbf16>
    %79 = arith.truncf %60 : vector<128x32xf32> to vector<128x32xbf16>
    %cst_54 = arith.constant dense<0.000000e+00> : vector<32x32xf32>
    %80 = tpu.matmul %78, %79, %cst_54 {dimension_numbers = #tpu.dot_dimension_numbers<[1], [0], [0], [1], [0, 0, 1, 1], [], []>} : vector<32x128xbf16>, vector<128x32xbf16>, vector<32x32xf32> -> vector<32x32xf32>
    %81 = vector.extract_strided_slice %61 {offsets = [64, 0], sizes = [32, 48], strides = [1, 1]} : vector<128x48xbf16> to vector<32x48xbf16>
    %82 = arith.truncf %80 : vector<32x32xf32> to vector<32x32xbf16>
    %cst_55 = arith.constant dense<0.000000e+00> : vector<32x48xf32>
    %83 = tpu.matmul %82, %81, %cst_55 {dimension_numbers = #tpu.dot_dimension_numbers<[1], [0], [0], [1], [0, 0, 1, 1], [], []>} : vector<32x32xbf16>, vector<32x48xbf16>, vector<32x48xf32> -> vector<32x48xf32>
    %84 = arith.addf %76, %83 : vector<32x48xf32>
    %c3_56 = arith.constant 3 : index
    %c0_57 = arith.constant 0 : index
    %c0_58 = arith.constant 0 : index
    %85 = vector.load %arg2[%c3_56, %c0_57, %c0_58] : memref<4x32x128xbf16, #tpu.memory_space<vmem>>, vector<1x32x128xbf16>
    %86 = vector.shape_cast %85 : vector<1x32x128xbf16> to vector<32x128xbf16>
    %87 = arith.truncf %60 : vector<128x32xf32> to vector<128x32xbf16>
    %cst_59 = arith.constant dense<0.000000e+00> : vector<32x32xf32>
    %88 = tpu.matmul %86, %87, %cst_59 {dimension_numbers = #tpu.dot_dimension_numbers<[1], [0], [0], [1], [0, 0, 1, 1], [], []>} : vector<32x128xbf16>, vector<128x32xbf16>, vector<32x32xf32> -> vector<32x32xf32>
    %89 = vector.extract_strided_slice %61 {offsets = [96, 0], sizes = [32, 48], strides = [1, 1]} : vector<128x48xbf16> to vector<32x48xbf16>
    %90 = arith.truncf %88 : vector<32x32xf32> to vector<32x32xbf16>
    %cst_60 = arith.constant dense<0.000000e+00> : vector<32x48xf32>
    %91 = tpu.matmul %90, %89, %cst_60 {dimension_numbers = #tpu.dot_dimension_numbers<[1], [0], [0], [1], [0, 0, 1, 1], [], []>} : vector<32x32xbf16>, vector<32x48xbf16>, vector<32x48xf32> -> vector<32x48xf32>
    %92 = arith.addf %84, %91 : vector<32x48xf32>
    %c0_61 = arith.constant 0 : index
    %c0_62 = arith.constant 0 : index
    %93 = vector.load %arg14[%c0_61, %c0_62] : memref<1x48xf32, #tpu.memory_space<vmem>>, vector<1x48xf32>
    %94 = vector.broadcast %93 : vector<1x48xf32> to vector<32x48xf32>
    %95 = arith.addf %92, %94 : vector<32x48xf32>
    %c0_63 = arith.constant 0 : index
    %c0_64 = arith.constant 0 : index
    %96 = vector.load %arg15[%c0_63, %c0_64] : memref<48x48xbf16, #tpu.memory_space<vmem>>, vector<48x48xbf16>
    %97 = arith.truncf %95 : vector<32x48xf32> to vector<32x48xbf16>
    %cst_65 = arith.constant dense<0.000000e+00> : vector<32x48xf32>
    %98 = tpu.matmul %97, %96, %cst_65 {dimension_numbers = #tpu.dot_dimension_numbers<[1], [0], [0], [1], [0, 0, 1, 1], [], []>} : vector<32x48xbf16>, vector<48x48xbf16>, vector<32x48xf32> -> vector<32x48xf32>
    %c0_66 = arith.constant 0 : index
    %c0_67 = arith.constant 0 : index
    %99 = vector.load %arg16[%c0_66, %c0_67] : memref<1x48xf32, #tpu.memory_space<vmem>>, vector<1x48xf32>
    %100 = vector.broadcast %99 : vector<1x48xf32> to vector<32x48xf32>
    %101 = arith.addf %98, %100 : vector<32x48xf32>
    %cst_68 = arith.constant 0.000000e+00 : f32
    %102 = vector.broadcast %cst_68 : f32 to vector<32x48xf32>
    %103 = arith.maximumf %101, %102 : vector<32x48xf32>
    %104 = arith.addf %95, %103 : vector<32x48xf32>
    %c0_69 = arith.constant 0 : index
    %c0_70 = arith.constant 0 : index
    %105 = vector.load %arg17[%c0_69, %c0_70] : memref<192x64xbf16, #tpu.memory_space<vmem>>, vector<192x64xbf16>
    %c0_71 = arith.constant 0 : index
    %c0_72 = arith.constant 0 : index
    %c0_73 = arith.constant 0 : index
    %106 = vector.load %arg3[%c0_71, %c0_72, %c0_73] : memref<4x8x32xbf16, #tpu.memory_space<vmem>>, vector<1x8x32xbf16>
    %107 = vector.shape_cast %106 : vector<1x8x32xbf16> to vector<8x32xbf16>
    %108 = arith.truncf %104 : vector<32x48xf32> to vector<32x48xbf16>
    %cst_74 = arith.constant dense<0.000000e+00> : vector<8x48xf32>
    %109 = tpu.matmul %107, %108, %cst_74 {dimension_numbers = #tpu.dot_dimension_numbers<[1], [0], [0], [1], [0, 0, 1, 1], [], []>} : vector<8x32xbf16>, vector<32x48xbf16>, vector<8x48xf32> -> vector<8x48xf32>
    %110 = vector.extract_strided_slice %105 {offsets = [0, 0], sizes = [48, 64], strides = [1, 1]} : vector<192x64xbf16> to vector<48x64xbf16>
    %111 = arith.truncf %109 : vector<8x48xf32> to vector<8x48xbf16>
    %cst_75 = arith.constant dense<0.000000e+00> : vector<8x64xf32>
    %112 = tpu.matmul %111, %110, %cst_75 {dimension_numbers = #tpu.dot_dimension_numbers<[1], [0], [0], [1], [0, 0, 1, 1], [], []>} : vector<8x48xbf16>, vector<48x64xbf16>, vector<8x64xf32> -> vector<8x64xf32>
    %c1_76 = arith.constant 1 : index
    %c0_77 = arith.constant 0 : index
    %c0_78 = arith.constant 0 : index
    %113 = vector.load %arg3[%c1_76, %c0_77, %c0_78] : memref<4x8x32xbf16, #tpu.memory_space<vmem>>, vector<1x8x32xbf16>
    %114 = vector.shape_cast %113 : vector<1x8x32xbf16> to vector<8x32xbf16>
    %115 = arith.truncf %104 : vector<32x48xf32> to vector<32x48xbf16>
    %cst_79 = arith.constant dense<0.000000e+00> : vector<8x48xf32>
    %116 = tpu.matmul %114, %115, %cst_79 {dimension_numbers = #tpu.dot_dimension_numbers<[1], [0], [0], [1], [0, 0, 1, 1], [], []>} : vector<8x32xbf16>, vector<32x48xbf16>, vector<8x48xf32> -> vector<8x48xf32>
    %117 = vector.extract_strided_slice %105 {offsets = [48, 0], sizes = [48, 64], strides = [1, 1]} : vector<192x64xbf16> to vector<48x64xbf16>
    %118 = arith.truncf %116 : vector<8x48xf32> to vector<8x48xbf16>
    %cst_80 = arith.constant dense<0.000000e+00> : vector<8x64xf32>
    %119 = tpu.matmul %118, %117, %cst_80 {dimension_numbers = #tpu.dot_dimension_numbers<[1], [0], [0], [1], [0, 0, 1, 1], [], []>} : vector<8x48xbf16>, vector<48x64xbf16>, vector<8x64xf32> -> vector<8x64xf32>
    %120 = arith.addf %112, %119 : vector<8x64xf32>
    %c2_81 = arith.constant 2 : index
    %c0_82 = arith.constant 0 : index
    %c0_83 = arith.constant 0 : index
    %121 = vector.load %arg3[%c2_81, %c0_82, %c0_83] : memref<4x8x32xbf16, #tpu.memory_space<vmem>>, vector<1x8x32xbf16>
    %122 = vector.shape_cast %121 : vector<1x8x32xbf16> to vector<8x32xbf16>
    %123 = arith.truncf %104 : vector<32x48xf32> to vector<32x48xbf16>
    %cst_84 = arith.constant dense<0.000000e+00> : vector<8x48xf32>
    %124 = tpu.matmul %122, %123, %cst_84 {dimension_numbers = #tpu.dot_dimension_numbers<[1], [0], [0], [1], [0, 0, 1, 1], [], []>} : vector<8x32xbf16>, vector<32x48xbf16>, vector<8x48xf32> -> vector<8x48xf32>
    %125 = vector.extract_strided_slice %105 {offsets = [96, 0], sizes = [48, 64], strides = [1, 1]} : vector<192x64xbf16> to vector<48x64xbf16>
    %126 = arith.truncf %124 : vector<8x48xf32> to vector<8x48xbf16>
    %cst_85 = arith.constant dense<0.000000e+00> : vector<8x64xf32>
    %127 = tpu.matmul %126, %125, %cst_85 {dimension_numbers = #tpu.dot_dimension_numbers<[1], [0], [0], [1], [0, 0, 1, 1], [], []>} : vector<8x48xbf16>, vector<48x64xbf16>, vector<8x64xf32> -> vector<8x64xf32>
    %128 = arith.addf %120, %127 : vector<8x64xf32>
    %c3_86 = arith.constant 3 : index
    %c0_87 = arith.constant 0 : index
    %c0_88 = arith.constant 0 : index
    %129 = vector.load %arg3[%c3_86, %c0_87, %c0_88] : memref<4x8x32xbf16, #tpu.memory_space<vmem>>, vector<1x8x32xbf16>
    %130 = vector.shape_cast %129 : vector<1x8x32xbf16> to vector<8x32xbf16>
    %131 = arith.truncf %104 : vector<32x48xf32> to vector<32x48xbf16>
    %cst_89 = arith.constant dense<0.000000e+00> : vector<8x48xf32>
    %132 = tpu.matmul %130, %131, %cst_89 {dimension_numbers = #tpu.dot_dimension_numbers<[1], [0], [0], [1], [0, 0, 1, 1], [], []>} : vector<8x32xbf16>, vector<32x48xbf16>, vector<8x48xf32> -> vector<8x48xf32>
    %133 = vector.extract_strided_slice %105 {offsets = [144, 0], sizes = [48, 64], strides = [1, 1]} : vector<192x64xbf16> to vector<48x64xbf16>
    %134 = arith.truncf %132 : vector<8x48xf32> to vector<8x48xbf16>
    %cst_90 = arith.constant dense<0.000000e+00> : vector<8x64xf32>
    %135 = tpu.matmul %134, %133, %cst_90 {dimension_numbers = #tpu.dot_dimension_numbers<[1], [0], [0], [1], [0, 0, 1, 1], [], []>} : vector<8x48xbf16>, vector<48x64xbf16>, vector<8x64xf32> -> vector<8x64xf32>
    %136 = arith.addf %128, %135 : vector<8x64xf32>
    %c0_91 = arith.constant 0 : index
    %c0_92 = arith.constant 0 : index
    %137 = vector.load %arg18[%c0_91, %c0_92] : memref<1x64xf32, #tpu.memory_space<vmem>>, vector<1x64xf32>
    %138 = vector.broadcast %137 : vector<1x64xf32> to vector<8x64xf32>
    %139 = arith.addf %136, %138 : vector<8x64xf32>
    %c0_93 = arith.constant 0 : index
    %c0_94 = arith.constant 0 : index
    %140 = vector.load %arg19[%c0_93, %c0_94] : memref<64x64xbf16, #tpu.memory_space<vmem>>, vector<64x64xbf16>
    %141 = arith.truncf %139 : vector<8x64xf32> to vector<8x64xbf16>
    %cst_95 = arith.constant dense<0.000000e+00> : vector<8x64xf32>
    %142 = tpu.matmul %141, %140, %cst_95 {dimension_numbers = #tpu.dot_dimension_numbers<[1], [0], [0], [1], [0, 0, 1, 1], [], []>} : vector<8x64xbf16>, vector<64x64xbf16>, vector<8x64xf32> -> vector<8x64xf32>
    %c0_96 = arith.constant 0 : index
    %c0_97 = arith.constant 0 : index
    %143 = vector.load %arg20[%c0_96, %c0_97] : memref<1x64xf32, #tpu.memory_space<vmem>>, vector<1x64xf32>
    %144 = vector.broadcast %143 : vector<1x64xf32> to vector<8x64xf32>
    %145 = arith.addf %142, %144 : vector<8x64xf32>
    %cst_98 = arith.constant 0.000000e+00 : f32
    %146 = vector.broadcast %cst_98 : f32 to vector<8x64xf32>
    %147 = arith.maximumf %145, %146 : vector<8x64xf32>
    %148 = arith.addf %139, %147 : vector<8x64xf32>
    %c0_99 = arith.constant 0 : index
    %c0_100 = arith.constant 0 : index
    %149 = vector.load %arg23[%c0_99, %c0_100] : memref<8x64xf32, #tpu.memory_space<vmem>>, vector<8x64xf32>
    tpu.vector_store %arg23[%c0_99, %c0_100], %148 {strides = array<i32>} : memref<8x64xf32, #tpu.memory_space<vmem>>, vector<8x64xf32>,
    %c0_101 = arith.constant 0 : index
    %c0_102 = arith.constant 0 : index
    %150 = vector.load %arg4[%c0_101, %c0_102] : memref<2x8xbf16, #tpu.memory_space<vmem>>, vector<2x8xbf16>
    %151 = arith.truncf %148 : vector<8x64xf32> to vector<8x64xbf16>
    %cst_103 = arith.constant dense<0.000000e+00> : vector<2x64xf32>
    %152 = tpu.matmul %150, %151, %cst_103 {dimension_numbers = #tpu.dot_dimension_numbers<[1], [0], [0], [1], [0, 0, 1, 1], [], []>} : vector<2x8xbf16>, vector<8x64xbf16>, vector<2x64xf32> -> vector<2x64xf32>
    %c0_104 = arith.constant 0 : index
    %c0_105 = arith.constant 0 : index
    %153 = vector.load %arg21[%c0_104, %c0_105] : memref<64x6xbf16, #tpu.memory_space<vmem>>, vector<64x6xbf16>
    %154 = arith.truncf %152 : vector<2x64xf32> to vector<2x64xbf16>
    %cst_106 = arith.constant dense<0.000000e+00> : vector<2x6xf32>
    %155 = tpu.matmul %154, %153, %cst_106 {dimension_numbers = #tpu.dot_dimension_numbers<[1], [0], [0], [1], [0, 0, 1, 1], [], []>} : vector<2x64xbf16>, vector<64x6xbf16>, vector<2x6xf32> -> vector<2x6xf32>
    %c0_107 = arith.constant 0 : index
    %c0_108 = arith.constant 0 : index
    %156 = vector.load %arg22[%c0_107, %c0_108] : memref<1x6xf32, #tpu.memory_space<vmem>>, vector<1x6xf32>
    %157 = vector.broadcast %156 : vector<1x6xf32> to vector<2x6xf32>
    %158 = arith.addf %155, %157 : vector<2x6xf32>
    %159 = tpu.iota {dimensions = array<i32: 1>} : vector<2x6xi32>
    %c5_i32 = arith.constant 5 : i32
    %160 = vector.broadcast %c5_i32 : i32 to vector<2x6xi32>
    %161 = arith.cmpi sge, %159, %160 : vector<2x6xi32>
    %162 = arith.negf %158 : vector<2x6xf32>
    %163 = math.exp %162 : vector<2x6xf32>
    %cst_109 = arith.constant 1.000000e+00 : f32
    %164 = vector.broadcast %cst_109 : f32 to vector<2x6xf32>
    %165 = arith.addf %164, %163 : vector<2x6xf32>
    %166 = arith.divf %164, %165 : vector<2x6xf32>
    %167 = arith.select %161, %166, %158 : vector<2x6xi1>, vector<2x6xf32>
    %c0_110 = arith.constant 0 : index
    %c0_111 = arith.constant 0 : index
    %168 = vector.load %arg24[%c0_110, %c0_111] : memref<2x6xf32, #tpu.memory_space<vmem>>, vector<2x6xf32>
    tpu.vector_store %arg24[%c0_110, %c0_111], %167 {strides = array<i32>} : memref<2x6xf32, #tpu.memory_space<vmem>>, vector<2x6xf32>,
    return
  }
}

</mosaic_0001>

<llo_original>
// kernel: lsnet_multi_task_forward.1
$region0: #{lsnet_multi_task_forward.1}
  #allocation0 [shape = 'u32[]', space=smem, size = 0x4, offset = 0x4, fixed_abs, tag = 'smem constant byte address 0x4 - core index']
  #allocation1 [shape = 'u32[72,128]{1,0:T(1,128)}', space=vmem, size = 0x9000, scoped, tag = 'internal scratch']
  %s0 = inlined_call_operand.vmem [shape: bf16[512,12], index: 0, kind: input, shape index: {}]
  %s1 = inlined_call_operand.vmem [shape: bf16[4,128,512], index: 1, kind: input, shape index: {}]
  %s2 = inlined_call_operand.vmem [shape: bf16[4,32,128], index: 2, kind: input, shape index: {}]
  %s3 = inlined_call_operand.vmem [shape: bf16[4,8,32], index: 3, kind: input, shape index: {}]
  %s4 = inlined_call_operand.vmem [shape: bf16[2,8], index: 4, kind: input, shape index: {}]
  %s5 = inlined_call_operand.vmem [shape: bf16[12,16], index: 5, kind: input, shape index: {}]
  %s6 = inlined_call_operand.vmem [shape: f32[1,16], index: 6, kind: input, shape index: {}]
  %s7 = inlined_call_operand.vmem [shape: bf16[16,16], index: 7, kind: input, shape index: {}]
  %s8 = inlined_call_operand.vmem [shape: f32[1,16], index: 8, kind: input, shape index: {}]
  %s9 = inlined_call_operand.vmem [shape: bf16[64,32], index: 9, kind: input, shape index: {}]
  %s10 = inlined_call_operand.vmem [shape: f32[1,32], index: 10, kind: input, shape index: {}]
  %s11 = inlined_call_operand.vmem [shape: bf16[32,32], index: 11, kind: input, shape index: {}]
  %s12 = inlined_call_operand.vmem [shape: f32[1,32], index: 12, kind: input, shape index: {}]
  %s13 = inlined_call_operand.vmem [shape: bf16[128,48], index: 13, kind: input, shape index: {}]
  %s14 = inlined_call_operand.vmem [shape: f32[1,48], index: 14, kind: input, shape index: {}]
  %s15 = inlined_call_operand.vmem [shape: bf16[48,48], index: 15, kind: input, shape index: {}]
  %s16 = inlined_call_operand.vmem [shape: f32[1,48], index: 16, kind: input, shape index: {}]
  %s17 = inlined_call_operand.vmem [shape: bf16[192,64], index: 17, kind: input, shape index: {}]
  %s18 = inlined_call_operand.vmem [shape: f32[1,64], index: 18, kind: input, shape index: {}]
  %s19 = inlined_call_operand.vmem [shape: bf16[64,64], index: 19, kind: input, shape index: {}]
  %s20 = inlined_call_operand.vmem [shape: f32[1,64], index: 20, kind: input, shape index: {}]
  %s21 = inlined_call_operand.vmem [shape: bf16[64,6], index: 21, kind: input, shape index: {}]
  %s22 = inlined_call_operand.vmem [shape: f32[1,6], index: 22, kind: input, shape index: {}]
  %s23 = inlined_call_operand.hbm [shape: f32[8,64], index: 23, kind: output, shape index: {0}]
  %s24 = inlined_call_operand.vmem [shape: f32[2,6], index: 24, kind: output, shape index: {1}]
  %25 = xla_tuple %s23, %s24
  %s26 = sld [smem:[#allocation0]]
  $region110: #{lsnet_multi_task_forward.1} parent=0
    _
  %s28 = ssub.s32 1, %s26
  %s29 = scalar_select 0, %s28, %s26
  $region1: #{lsnet_multi_task_forward.1} parent=0
    #allocation2 [shape = 'u8[4096]{0}', space=vmem, size = 0x1000, scoped, tag = 'output window, operand 0, single buffered']
    #allocation3 [shape = 's32[1]{0}', space=sflag, size = 0x4, scoped, tag = 'scoped memory for lsnet_multi_task_forward.1']
    %30 = vsyncpa [#allocation3], 0
    // Predicated region
    $region2: #{lsnet_multi_task_forward.1} parent=1 // pred_check
      _
    $region3: #{lsnet_multi_task_forward.1} parent=1 // pred_check_branch
      %32 = sbr.rel (0) target = $region5
    $region4: #{lsnet_multi_task_forward.1} parent=1 // pred_region
      _
    $region5: #{lsnet_multi_task_forward.1} parent=1 // pred_fallthru
      _
    // Predicated region
    $region6: #{lsnet_multi_task_forward.1} parent=1 // pred_check
      _
    $region7: #{lsnet_multi_task_forward.1} parent=1 // pred_check_branch
      %34 = sbr.rel (0) target = $region9
    $region8: #{lsnet_multi_task_forward.1} parent=1 // pred_region
      _
    $region9: #{lsnet_multi_task_forward.1} parent=1 // pred_fallthru
      _
    // Predicated region
    $region10: #{lsnet_multi_task_forward.1} parent=1 // pred_check
      _
    $region11: #{lsnet_multi_task_forward.1} parent=1 // pred_check_branch
      %36 = sbr.rel (0) target = $region13
    $region12: #{lsnet_multi_task_forward.1} parent=1 // pred_region
      _
    $region13: #{lsnet_multi_task_forward.1} parent=1 // pred_fallthru
      _
    // Predicated region
    $region14: #{lsnet_multi_task_forward.1} parent=1 // pred_check
      _
    $region15: #{lsnet_multi_task_forward.1} parent=1 // pred_check_branch
      %38 = sbr.rel (0) target = $region17
    $region16: #{lsnet_multi_task_forward.1} parent=1 // pred_region
      _
    $region17: #{lsnet_multi_task_forward.1} parent=1 // pred_fallthru
      _
    // Predicated region
    $region18: #{lsnet_multi_task_forward.1} parent=1 // pred_check
      _
    $region19: #{lsnet_multi_task_forward.1} parent=1 // pred_check_branch
      %40 = sbr.rel (0) target = $region21
    $region20: #{lsnet_multi_task_forward.1} parent=1 // pred_region
      _
    $region21: #{lsnet_multi_task_forward.1} parent=1 // pred_fallthru
      _
    // Predicated region
    $region22: #{lsnet_multi_task_forward.1} parent=1 // pred_check
      _
    $region23: #{lsnet_multi_task_forward.1} parent=1 // pred_check_branch
      %42 = sbr.rel (0) target = $region25
    $region24: #{lsnet_multi_task_forward.1} parent=1 // pred_region
      _
    $region25: #{lsnet_multi_task_forward.1} parent=1 // pred_fallthru
      _
    // Predicated region
    $region26: #{lsnet_multi_task_forward.1} parent=1 // pred_check
      _
    $region27: #{lsnet_multi_task_forward.1} parent=1 // pred_check_branch
      %44 = sbr.rel (0) target = $region29
    $region28: #{lsnet_multi_task_forward.1} parent=1 // pred_region
      _
    $region29: #{lsnet_multi_task_forward.1} parent=1 // pred_fallthru
      _
    // Predicated region
    $region30: #{lsnet_multi_task_forward.1} parent=1 // pred_check
      _
    $region31: #{lsnet_multi_task_forward.1} parent=1 // pred_check_branch
      %46 = sbr.rel (0) target = $region33
    $region32: #{lsnet_multi_task_forward.1} parent=1 // pred_region
      _
    $region33: #{lsnet_multi_task_forward.1} parent=1 // pred_fallthru
      _
    // Predicated region
    $region34: #{lsnet_multi_task_forward.1} parent=1 // pred_check
      _
    $region35: #{lsnet_multi_task_forward.1} parent=1 // pred_check_branch
      %48 = sbr.rel (0) target = $region37
    $region36: #{lsnet_multi_task_forward.1} parent=1 // pred_region
      _
    $region37: #{lsnet_multi_task_forward.1} parent=1 // pred_fallthru
      _
    // Predicated region
    $region38: #{lsnet_multi_task_forward.1} parent=1 // pred_check
      _
    $region39: #{lsnet_multi_task_forward.1} parent=1 // pred_check_branch
      %50 = sbr.rel (0) target = $region41
    $region40: #{lsnet_multi_task_forward.1} parent=1 // pred_region
      _
    $region41: #{lsnet_multi_task_forward.1} parent=1 // pred_fallthru
      _
    // Predicated region
    $region42: #{lsnet_multi_task_forward.1} parent=1 // pred_check
      _
    $region43: #{lsnet_multi_task_forward.1} parent=1 // pred_check_branch
      %52 = sbr.rel (0) target = $region45
    $region44: #{lsnet_multi_task_forward.1} parent=1 // pred_region
      _
    $region45: #{lsnet_multi_task_forward.1} parent=1 // pred_fallthru
      _
    // Predicated region
    $region46: #{lsnet_multi_task_forward.1} parent=1 // pred_check
      _
    $region47: #{lsnet_multi_task_forward.1} parent=1 // pred_check_branch
      %54 = sbr.rel (0) target = $region49
    $region48: #{lsnet_multi_task_forward.1} parent=1 // pred_region
      _
    $region49: #{lsnet_multi_task_forward.1} parent=1 // pred_fallthru
      _
    // Predicated region
    $region50: #{lsnet_multi_task_forward.1} parent=1 // pred_check
      _
    $region51: #{lsnet_multi_task_forward.1} parent=1 // pred_check_branch
      %56 = sbr.rel (0) target = $region53
    $region52: #{lsnet_multi_task_forward.1} parent=1 // pred_region
      _
    $region53: #{lsnet_multi_task_forward.1} parent=1 // pred_fallthru
      _
    // Predicated region
    $region54: #{lsnet_multi_task_forward.1} parent=1 // pred_check
      _
    $region55: #{lsnet_multi_task_forward.1} parent=1 // pred_check_branch
      %58 = sbr.rel (0) target = $region57
    $region56: #{lsnet_multi_task_forward.1} parent=1 // pred_region
      _
    $region57: #{lsnet_multi_task_forward.1} parent=1 // pred_fallthru
      _
    // Predicated region
    $region58: #{lsnet_multi_task_forward.1} parent=1 // pred_check
      _
    $region59: #{lsnet_multi_task_forward.1} parent=1 // pred_check_branch
      %60 = sbr.rel (0) target = $region61
    $region60: #{lsnet_multi_task_forward.1} parent=1 // pred_region
      _
    $region61: #{lsnet_multi_task_forward.1} parent=1 // pred_fallthru
      _
    // Predicated region
    $region62: #{lsnet_multi_task_forward.1} parent=1 // pred_check
      _
    $region63: #{lsnet_multi_task_forward.1} parent=1 // pred_check_branch
      %62 = sbr.rel (0) target = $region65
    $region64: #{lsnet_multi_task_forward.1} parent=1 // pred_region
      _
    $region65: #{lsnet_multi_task_forward.1} parent=1 // pred_fallthru
      _
    // Predicated region
    $region66: #{lsnet_multi_task_forward.1} parent=1 // pred_check
      _
    $region67: #{lsnet_multi_task_forward.1} parent=1 // pred_check_branch
      %64 = sbr.rel (0) target = $region69
    $region68: #{lsnet_multi_task_forward.1} parent=1 // pred_region
      _
    $region69: #{lsnet_multi_task_forward.1} parent=1 // pred_fallthru
      _
    // Predicated region
    $region70: #{lsnet_multi_task_forward.1} parent=1 // pred_check
      _
    $region71: #{lsnet_multi_task_forward.1} parent=1 // pred_check_branch
      %66 = sbr.rel (0) target = $region73
    $region72: #{lsnet_multi_task_forward.1} parent=1 // pred_region
      _
    $region73: #{lsnet_multi_task_forward.1} parent=1 // pred_fallthru
      _
    // Predicated region
    $region74: #{lsnet_multi_task_forward.1} parent=1 // pred_check
      _
    $region75: #{lsnet_multi_task_forward.1} parent=1 // pred_check_branch
      %68 = sbr.rel (0) target = $region77
    $region76: #{lsnet_multi_task_forward.1} parent=1 // pred_region
      _
    $region77: #{lsnet_multi_task_forward.1} parent=1 // pred_fallthru
      _
    // Predicated region
    $region78: #{lsnet_multi_task_forward.1} parent=1 // pred_check
      _
    $region79: #{lsnet_multi_task_forward.1} parent=1 // pred_check_branch
      %70 = sbr.rel (0) target = $region81
    $region80: #{lsnet_multi_task_forward.1} parent=1 // pred_region
      _
    $region81: #{lsnet_multi_task_forward.1} parent=1 // pred_fallthru
      _
    // Predicated region
    $region82: #{lsnet_multi_task_forward.1} parent=1 // pred_check
      _
    $region83: #{lsnet_multi_task_forward.1} parent=1 // pred_check_branch
      %72 = sbr.rel (0) target = $region85
    $region84: #{lsnet_multi_task_forward.1} parent=1 // pred_region
      _
    $region85: #{lsnet_multi_task_forward.1} parent=1 // pred_fallthru
      _
    // Predicated region
    $region86: #{lsnet_multi_task_forward.1} parent=1 // pred_check
      _
    $region87: #{lsnet_multi_task_forward.1} parent=1 // pred_check_branch
      %74 = sbr.rel (0) target = $region89
    $region88: #{lsnet_multi_task_forward.1} parent=1 // pred_region
      _
    $region89: #{lsnet_multi_task_forward.1} parent=1 // pred_fallthru
      _
    // Predicated region
    $region90: #{lsnet_multi_task_forward.1} parent=1 // pred_check
      _
    $region91: #{lsnet_multi_task_forward.1} parent=1 // pred_check_branch
      %76 = sbr.rel (0) target = $region93
    $region92: #{lsnet_multi_task_forward.1} parent=1 // pred_region
      _
    $region93: #{lsnet_multi_task_forward.1} parent=1 // pred_fallthru
      _
    %v78 = vld [vmem:[%s0] sm:$0xf]
    %v79 = vld [vmem:[%s0 + $0x4] sm:$0xf]
    %v80 = vld [vmem:[%s0 + $0x8] sm:$0xf]
    %v81 = vld [vmem:[%s0 + $0xc] sm:$0xf]
    %v82 = vld [vmem:[%s0 + $0x10] sm:$0xf]
    %v83 = vld [vmem:[%s0 + $0x14] sm:$0xf]
    %v84 = vld [vmem:[%s0 + $0x18] sm:$0xf]
    %v85 = vld [vmem:[%s0 + $0x1c] sm:$0xf]
    %v86 = vld [vmem:[%s0 + $0x20] sm:$0xf]
    %v87 = vld [vmem:[%s0 + $0x24] sm:$0xf]
    %v88 = vld [vmem:[%s0 + $0x28] sm:$0xf]
    %v89 = vld [vmem:[%s0 + $0x2c] sm:$0xf]
    %v90 = vld [vmem:[%s0 + $0x30] sm:$0xf]
    %v91 = vld [vmem:[%s0 + $0x34] sm:$0xf]
    %v92 = vld [vmem:[%s0 + $0x38] sm:$0xf]
    %v93 = vld [vmem:[%s0 + $0x3c] sm:$0xf]
    %v94 = vld [vmem:[%s0 + $0x40] sm:$0xf]
    %v95 = vld [vmem:[%s0 + $0x44] sm:$0xf]
    %v96 = vld [vmem:[%s0 + $0x48] sm:$0xf]
    %v97 = vld [vmem:[%s0 + $0x4c] sm:$0xf]
    %v98 = vld [vmem:[%s0 + $0x50] sm:$0xf]
    %v99 = vld [vmem:[%s0 + $0x54] sm:$0xf]
    %v100 = vld [vmem:[%s0 + $0x58] sm:$0xf]
    %v101 = vld [vmem:[%s0 + $0x5c] sm:$0xf]
    %v102 = vld [vmem:[%s0 + $0x60] sm:$0xf]
    %v103 = vld [vmem:[%s0 + $0x64] sm:$0xf]
    %v104 = vld [vmem:[%s0 + $0x68] sm:$0xf]
    %v105 = vld [vmem:[%s0 + $0x6c] sm:$0xf]
    %v106 = vld [vmem:[%s0 + $0x70] sm:$0xf]
    %v107 = vld [vmem:[%s0 + $0x74] sm:$0xf]
    %v108 = vld [vmem:[%s0 + $0x78] sm:$0xf]
    %v109 = vld [vmem:[%s0 + $0x7c] sm:$0xf]
    %v110 = vld [vmem:[%s0 + $0x80] sm:$0xf]
    %v111 = vld [vmem:[%s0 + $0x84] sm:$0xf]
    %v112 = vld [vmem:[%s0 + $0x88] sm:$0xf]
    %v113 = vld [vmem:[%s0 + $0x8c] sm:$0xf]
    %v114 = vld [vmem:[%s0 + $0x90] sm:$0xf]
    %v115 = vld [vmem:[%s0 + $0x94] sm:$0xf]
    %v116 = vld [vmem:[%s0 + $0x98] sm:$0xf]
    %v117 = vld [vmem:[%s0 + $0x9c] sm:$0xf]
    %v118 = vld [vmem:[%s0 + $0xa0] sm:$0xf]
    %v119 = vld [vmem:[%s0 + $0xa4] sm:$0xf]
    %v120 = vld [vmem:[%s0 + $0xa8] sm:$0xf]
    %v121 = vld [vmem:[%s0 + $0xac] sm:$0xf]
    %v122 = vld [vmem:[%s0 + $0xb0] sm:$0xf]
    %v123 = vld [vmem:[%s0 + $0xb4] sm:$0xf]
    %v124 = vld [vmem:[%s0 + $0xb8] sm:$0xf]
    %v125 = vld [vmem:[%s0 + $0xbc] sm:$0xf]
    %v126 = vld [vmem:[%s0 + $0xc0] sm:$0xf]
    %v127 = vld [vmem:[%s0 + $0xc4] sm:$0xf]
    %v128 = vld [vmem:[%s0 + $0xc8] sm:$0xf]
    %v129 = vld [vmem:[%s0 + $0xcc] sm:$0xf]
    %v130 = vld [vmem:[%s0 + $0xd0] sm:$0xf]
    %v131 = vld [vmem:[%s0 + $0xd4] sm:$0xf]
    %v132 = vld [vmem:[%s0 + $0xd8] sm:$0xf]
    %v133 = vld [vmem:[%s0 + $0xdc] sm:$0xf]
    %v134 = vld [vmem:[%s0 + $0xe0] sm:$0xf]
    %v135 = vld [vmem:[%s0 + $0xe4] sm:$0xf]
    %v136 = vld [vmem:[%s0 + $0xe8] sm:$0xf]
    %v137 = vld [vmem:[%s0 + $0xec] sm:$0xf]
    %v138 = vld [vmem:[%s0 + $0xf0] sm:$0xf]
    %v139 = vld [vmem:[%s0 + $0xf4] sm:$0xf]
    %v140 = vld [vmem:[%s0 + $0xf8] sm:$0xf]
    %v141 = vld [vmem:[%s0 + $0xfc] sm:$0xf]
    %v142 = vld [vmem:[%s5] sm:$0xf]
    %v143 = vld [vmem:[%s5 + $0x4] sm:$0x3]
    %v144 = vld [vmem:[%s6] sm:$0x1]
    %v146 = vperm.slane %v144, 0
    %v212 = vunpack.c.l.b16 %v78
    %v213 = vunpack.c.l.b16 %v79
    %v214 = vunpack.c.l.b16 %v80
    %v215 = vunpack.c.l.b16 %v81
    %v216 = vunpack.c.l.b16 %v82
    %v217 = vunpack.c.l.b16 %v83
    %v218 = vunpack.c.l.b16 %v84
    %v219 = vunpack.c.l.b16 %v85
    %v220 = vunpack.c.l.b16 %v86
    %v221 = vunpack.c.l.b16 %v87
    %v222 = vunpack.c.l.b16 %v88
    %v223 = vunpack.c.l.b16 %v89
    %v224 = vunpack.c.l.b16 %v90
    %v225 = vunpack.c.l.b16 %v91
    %v226 = vunpack.c.l.b16 %v92
    %v227 = vunpack.c.l.b16 %v93
    %v228 = vunpack.c.l.b16 %v94
    %v229 = vunpack.c.l.b16 %v95
    %v230 = vunpack.c.l.b16 %v96
    %v231 = vunpack.c.l.b16 %v97
    %v232 = vunpack.c.l.b16 %v98
    %v233 = vunpack.c.l.b16 %v99
    %v234 = vunpack.c.l.b16 %v100
    %v235 = vunpack.c.l.b16 %v101
    %v236 = vunpack.c.l.b16 %v102
    %v237 = vunpack.c.l.b16 %v103
    %v238 = vunpack.c.l.b16 %v104
    %v239 = vunpack.c.l.b16 %v105
    %v240 = vunpack.c.l.b16 %v106
    %v241 = vunpack.c.l.b16 %v107
    %v242 = vunpack.c.l.b16 %v108
    %v243 = vunpack.c.l.b16 %v109
    %v244 = vunpack.c.l.b16 %v110
    %v245 = vunpack.c.l.b16 %v111
    %v246 = vunpack.c.l.b16 %v112
    %v247 = vunpack.c.l.b16 %v113
    %v248 = vunpack.c.l.b16 %v114
    %v249 = vunpack.c.l.b16 %v115
    %v250 = vunpack.c.l.b16 %v116
    %v251 = vunpack.c.l.b16 %v117
    %v252 = vunpack.c.l.b16 %v118
    %v253 = vunpack.c.l.b16 %v119
    %v254 = vunpack.c.l.b16 %v120
    %v255 = vunpack.c.l.b16 %v121
    %v256 = vunpack.c.l.b16 %v122
    %v257 = vunpack.c.l.b16 %v123
    %v258 = vunpack.c.l.b16 %v124
    %v259 = vunpack.c.l.b16 %v125
    %v260 = vunpack.c.l.b16 %v126
    %v261 = vunpack.c.l.b16 %v127
    %v262 = vunpack.c.l.b16 %v128
    %v263 = vunpack.c.l.b16 %v129
    %v264 = vunpack.c.l.b16 %v130
    %v265 = vunpack.c.l.b16 %v131
    %v266 = vunpack.c.l.b16 %v132
    %v267 = vunpack.c.l.b16 %v133
    %v268 = vunpack.c.l.b16 %v134
    %v269 = vunpack.c.l.b16 %v135
    %v270 = vunpack.c.l.b16 %v136
    %v271 = vunpack.c.l.b16 %v137
    %v272 = vunpack.c.l.b16 %v138
    %v273 = vunpack.c.l.b16 %v139
    %v274 = vunpack.c.l.b16 %v140
    %v275 = vunpack.c.l.b16 %v141
    %v276 = vpack.c.b16 %v213, %v212
    %v277 = vpack.c.b16 %v215, %v214
    %v278 = vpack.c.b16 %v217, %v216
    %v279 = vpack.c.b16 %v219, %v218
    %v280 = vpack.c.b16 %v221, %v220
    %v281 = vpack.c.b16 %v223, %v222
    %v282 = vpack.c.b16 %v225, %v224
    %v283 = vpack.c.b16 %v227, %v226
    %v284 = vpack.c.b16 %v229, %v228
    %v285 = vpack.c.b16 %v231, %v230
    %v286 = vpack.c.b16 %v233, %v232
    %v287 = vpack.c.b16 %v235, %v234
    %v288 = vpack.c.b16 %v237, %v236
    %v289 = vpack.c.b16 %v239, %v238
    %v290 = vpack.c.b16 %v241, %v240
    %v291 = vpack.c.b16 %v243, %v242
    %v292 = vpack.c.b16 %v245, %v244
    %v293 = vpack.c.b16 %v247, %v246
    %v294 = vpack.c.b16 %v249, %v248
    %v295 = vpack.c.b16 %v251, %v250
    %v296 = vpack.c.b16 %v253, %v252
    %v297 = vpack.c.b16 %v255, %v254
    %v298 = vpack.c.b16 %v257, %v256
    %v299 = vpack.c.b16 %v259, %v258
    %v300 = vpack.c.b16 %v261, %v260
    %v301 = vpack.c.b16 %v263, %v262
    %v302 = vpack.c.b16 %v265, %v264
    %v303 = vpack.c.b16 %v267, %v266
    %v304 = vpack.c.b16 %v269, %v268
    %v305 = vpack.c.b16 %v271, %v270
    %v306 = vpack.c.b16 %v273, %v272
    %v307 = vpack.c.b16 %v275, %v274
    %v310 = vunpack.c.l.b16 %v142
    %v311 = vunpack.c.l.b16 %v143
    %v312 = vpack.c.b16 %v311, %v310
    %vm313 = vcmask 97280
    %v315 = vsel %vm313, %v276, 0
    %v318 = vsel %vm313, %v277, 0
    %v321 = vsel %vm313, %v278, 0
    %v324 = vsel %vm313, %v279, 0
    %v327 = vsel %vm313, %v280, 0
    %v330 = vsel %vm313, %v281, 0
    %v333 = vsel %vm313, %v282, 0
    %v336 = vsel %vm313, %v283, 0
    %v339 = vsel %vm313, %v284, 0
    %v342 = vsel %vm313, %v285, 0
    %v345 = vsel %vm313, %v286, 0
    %v348 = vsel %vm313, %v287, 0
    %v351 = vsel %vm313, %v288, 0
    %v354 = vsel %vm313, %v289, 0
    %v357 = vsel %vm313, %v290, 0
    %v360 = vsel %vm313, %v291, 0
    %v363 = vsel %vm313, %v292, 0
    %v366 = vsel %vm313, %v293, 0
    %v369 = vsel %vm313, %v294, 0
    %v372 = vsel %vm313, %v295, 0
    %v375 = vsel %vm313, %v296, 0
    %v378 = vsel %vm313, %v297, 0
    %v381 = vsel %vm313, %v298, 0
    %v384 = vsel %vm313, %v299, 0
    %v387 = vsel %vm313, %v300, 0
    %v390 = vsel %vm313, %v301, 0
    %v393 = vsel %vm313, %v302, 0
    %v396 = vsel %vm313, %v303, 0
    %v399 = vsel %vm313, %v304, 0
    %v402 = vsel %vm313, %v305, 0
    %v405 = vsel %vm313, %v306, 0
    %v408 = vsel %vm313, %v307, 0
    %vm410 = vcmask 1045504
    %v412 = vsel %vm410, %v312, 0
    %414 = vmatpush.bf16.msra.mxu0 0
    %415 = vmatpush.bf16.msra.mxu0 0
    %416 = vmatpush.bf16.msra.mxu0 0
    %417 = vmatpush.bf16.msra.mxu0 0
    %418 = vmatpush.bf16.msra.mxu0 0
    %419 = vmatpush.bf16.msra.mxu0 0
    %420 = vmatpush.bf16.msra.mxu0 0
    %421 = vmatpush.bf16.msra.mxu0 %v412
    %422 = vmatmul.bf16.gmra.mxu0 %v315
    %v423 = vpop.f32.mrf.mxu0
    %v424 = vadd.f32 %v146, %v423
    %v425 = vpop.f32.mrf.mxu0
    %v426 = vadd.f32 %v146, %v425
    %427 = vmatmul.bf16.gmra.mxu0 %v318
    %v428 = vpop.f32.mrf.mxu0
    %v429 = vadd.f32 %v146, %v428
    %v430 = vpop.f32.mrf.mxu0
    %v431 = vadd.f32 %v146, %v430
    %432 = vmatmul.bf16.gmra.mxu0 %v321
    %v433 = vpop.f32.mrf.mxu0
    %v434 = vadd.f32 %v146, %v433
    %v435 = vpop.f32.mrf.mxu0
    %v436 = vadd.f32 %v146, %v435
    %437 = vmatmul.bf16.gmra.mxu0 %v324
    %v438 = vpop.f32.mrf.mxu0
    %v439 = vadd.f32 %v146, %v438
    %v440 = vpop.f32.mrf.mxu0
    %v441 = vadd.f32 %v146, %v440
    %442 = vmatmul.bf16.gmra.mxu0 %v327
    %v443 = vpop.f32.mrf.mxu0
    %v444 = vadd.f32 %v146, %v443
    %v445 = vpop.f32.mrf.mxu0
    %v446 = vadd.f32 %v146, %v445
    %447 = vmatmul.bf16.gmra.mxu0 %v330
    %v448 = vpop.f32.mrf.mxu0
    %v449 = vadd.f32 %v146, %v448
    %v450 = vpop.f32.mrf.mxu0
    %v451 = vadd.f32 %v146, %v450
    %452 = vmatmul.bf16.gmra.mxu0 %v333
    %v453 = vpop.f32.mrf.mxu0
    %v454 = vadd.f32 %v146, %v453
    %v455 = vpop.f32.mrf.mxu0
    %v456 = vadd.f32 %v146, %v455
    %457 = vmatmul.bf16.gmra.mxu0 %v336
    %v458 = vpop.f32.mrf.mxu0
    %v459 = vadd.f32 %v146, %v458
    %v460 = vpop.f32.mrf.mxu0
    %v461 = vadd.f32 %v146, %v460
    %462 = vmatmul.bf16.gmra.mxu0 %v339
    %v463 = vpop.f32.mrf.mxu0
    %v464 = vadd.f32 %v146, %v463
    %v465 = vpop.f32.mrf.mxu0
    %v466 = vadd.f32 %v146, %v465
    %467 = vmatmul.bf16.gmra.mxu0 %v342
    %v468 = vpop.f32.mrf.mxu0
    %v469 = vadd.f32 %v146, %v468
    %v470 = vpop.f32.mrf.mxu0
    %v471 = vadd.f32 %v146, %v470
    %472 = vmatmul.bf16.gmra.mxu0 %v345
    %v473 = vpop.f32.mrf.mxu0
    %v474 = vadd.f32 %v146, %v473
    %v475 = vpop.f32.mrf.mxu0
    %v476 = vadd.f32 %v146, %v475
    %477 = vmatmul.bf16.gmra.mxu0 %v348
    %v478 = vpop.f32.mrf.mxu0
    %v479 = vadd.f32 %v146, %v478
    %v480 = vpop.f32.mrf.mxu0
    %v481 = vadd.f32 %v146, %v480
    %482 = vmatmul.bf16.gmra.mxu0 %v351
    %v483 = vpop.f32.mrf.mxu0
    %v484 = vadd.f32 %v146, %v483
    %v485 = vpop.f32.mrf.mxu0
    %v486 = vadd.f32 %v146, %v485
    %487 = vmatmul.bf16.gmra.mxu0 %v354
    %v488 = vpop.f32.mrf.mxu0
    %v489 = vadd.f32 %v146, %v488
    %v490 = vpop.f32.mrf.mxu0
    %v491 = vadd.f32 %v146, %v490
    %492 = vmatmul.bf16.gmra.mxu0 %v357
    %v493 = vpop.f32.mrf.mxu0
    %v494 = vadd.f32 %v146, %v493
    %v495 = vpop.f32.mrf.mxu0
    %v496 = vadd.f32 %v146, %v495
    %497 = vmatmul.bf16.gmra.mxu0 %v360
    %v498 = vpop.f32.mrf.mxu0
    %v499 = vadd.f32 %v146, %v498
    %v500 = vpop.f32.mrf.mxu0
    %v501 = vadd.f32 %v146, %v500
    %502 = vmatmul.bf16.gmra.mxu0 %v363
    %v503 = vpop.f32.mrf.mxu0
    %v504 = vadd.f32 %v146, %v503
    %v505 = vpop.f32.mrf.mxu0
    %v506 = vadd.f32 %v146, %v505
    %507 = vmatmul.bf16.gmra.mxu0 %v366
    %v508 = vpop.f32.mrf.mxu0
    %v509 = vadd.f32 %v146, %v508
    %v510 = vpop.f32.mrf.mxu0
    %v511 = vadd.f32 %v146, %v510
    %512 = vmatmul.bf16.gmra.mxu0 %v369
    %v513 = vpop.f32.mrf.mxu0
    %v514 = vadd.f32 %v146, %v513
    %v515 = vpop.f32.mrf.mxu0
    %v516 = vadd.f32 %v146, %v515
    %517 = vmatmul.bf16.gmra.mxu0 %v372
    %v518 = vpop.f32.mrf.mxu0
    %v519 = vadd.f32 %v146, %v518
    %v520 = vpop.f32.mrf.mxu0
    %v521 = vadd.f32 %v146, %v520
    %522 = vmatmul.bf16.gmra.mxu0 %v375
    %v523 = vpop.f32.mrf.mxu0
    %v524 = vadd.f32 %v146, %v523
    %v525 = vpop.f32.mrf.mxu0
    %v526 = vadd.f32 %v146, %v525
    %527 = vmatmul.bf16.gmra.mxu0 %v378
    %v528 = vpop.f32.mrf.mxu0
    %v529 = vadd.f32 %v146, %v528
    %v530 = vpop.f32.mrf.mxu0
    %v531 = vadd.f32 %v146, %v530
    %532 = vmatmul.bf16.gmra.mxu0 %v381
    %v533 = vpop.f32.mrf.mxu0
    %v534 = vadd.f32 %v146, %v533
    %v535 = vpop.f32.mrf.mxu0
    %v536 = vadd.f32 %v146, %v535
    %537 = vmatmul.bf16.gmra.mxu0 %v384
    %v538 = vpop.f32.mrf.mxu0
    %v539 = vadd.f32 %v146, %v538
    %v540 = vpop.f32.mrf.mxu0
    %v541 = vadd.f32 %v146, %v540
    %542 = vmatmul.bf16.gmra.mxu0 %v387
    %v543 = vpop.f32.mrf.mxu0
    %v544 = vadd.f32 %v146, %v543
    %v545 = vpop.f32.mrf.mxu0
    %v546 = vadd.f32 %v146, %v545
    %547 = vmatmul.bf16.gmra.mxu0 %v390
    %v548 = vpop.f32.mrf.mxu0
    %v549 = vadd.f32 %v146, %v548
    %v550 = vpop.f32.mrf.mxu0
    %v551 = vadd.f32 %v146, %v550
    %552 = vmatmul.bf16.gmra.mxu0 %v393
    %v553 = vpop.f32.mrf.mxu0
    %v554 = vadd.f32 %v146, %v553
    %v555 = vpop.f32.mrf.mxu0
    %v556 = vadd.f32 %v146, %v555
    %557 = vmatmul.bf16.gmra.mxu0 %v396
    %v558 = vpop.f32.mrf.mxu0
    %v559 = vadd.f32 %v146, %v558
    %v560 = vpop.f32.mrf.mxu0
    %v561 = vadd.f32 %v146, %v560
    %562 = vmatmul.bf16.gmra.mxu0 %v399
    %v563 = vpop.f32.mrf.mxu0
    %v564 = vadd.f32 %v146, %v563
    %v565 = vpop.f32.mrf.mxu0
    %v566 = vadd.f32 %v146, %v565
    %567 = vmatmul.bf16.gmra.mxu0 %v402
    %v568 = vpop.f32.mrf.mxu0
    %v569 = vadd.f32 %v146, %v568
    %v570 = vpop.f32.mrf.mxu0
    %v571 = vadd.f32 %v146, %v570
    %572 = vmatmul.bf16.gmra.mxu0 %v405
    %v573 = vpop.f32.mrf.mxu0
    %v574 = vadd.f32 %v146, %v573
    %v575 = vpop.f32.mrf.mxu0
    %v576 = vadd.f32 %v146, %v575
    %577 = vmatmul.bf16.gmra.mxu0 %v408
    %v578 = vpop.f32.mrf.mxu0
    %v579 = vadd.f32 %v146, %v578
    %v580 = vpop.f32.mrf.mxu0
    %v581 = vadd.f32 %v146, %v580
    %582 = vdwg.mxu0
    %v583 = vmax.f32 %v424, 0.0
    %v584 = vmax.f32 %v426, 0.0
    %v585 = vmax.f32 %v429, 0.0
    %v586 = vmax.f32 %v431, 0.0
    %v587 = vmax.f32 %v434, 0.0
    %v588 = vmax.f32 %v436, 0.0
    %v589 = vmax.f32 %v439, 0.0
    %v590 = vmax.f32 %v441, 0.0
    %v591 = vmax.f32 %v444, 0.0
    %v592 = vmax.f32 %v446, 0.0
    %v593 = vmax.f32 %v449, 0.0
    %v594 = vmax.f32 %v451, 0.0
    %v595 = vmax.f32 %v454, 0.0
    %v596 = vmax.f32 %v456, 0.0
    %v597 = vmax.f32 %v459, 0.0
    %v598 = vmax.f32 %v461, 0.0
    %v599 = vmax.f32 %v464, 0.0
    %v600 = vmax.f32 %v466, 0.0
    %v601 = vmax.f32 %v469, 0.0
    %v602 = vmax.f32 %v471, 0.0
    %v603 = vmax.f32 %v474, 0.0
    %v604 = vmax.f32 %v476, 0.0
    %v605 = vmax.f32 %v479, 0.0
    %v606 = vmax.f32 %v481, 0.0
    %v607 = vmax.f32 %v484, 0.0
    %v608 = vmax.f32 %v486, 0.0
    %v609 = vmax.f32 %v489, 0.0
    %v610 = vmax.f32 %v491, 0.0
    %v611 = vmax.f32 %v494, 0.0
    %v612 = vmax.f32 %v496, 0.0
    %v613 = vmax.f32 %v499, 0.0
    %v614 = vmax.f32 %v501, 0.0
    %v615 = vmax.f32 %v504, 0.0
    %v616 = vmax.f32 %v506, 0.0
    %v617 = vmax.f32 %v509, 0.0
    %v618 = vmax.f32 %v511, 0.0
    %v619 = vmax.f32 %v514, 0.0
    %v620 = vmax.f32 %v516, 0.0
    %v621 = vmax.f32 %v519, 0.0
    %v622 = vmax.f32 %v521, 0.0
    %v623 = vmax.f32 %v524, 0.0
    %v624 = vmax.f32 %v526, 0.0
    %v625 = vmax.f32 %v529, 0.0
    %v626 = vmax.f32 %v531, 0.0
    %v627 = vmax.f32 %v534, 0.0
    %v628 = vmax.f32 %v536, 0.0
    %v629 = vmax.f32 %v539, 0.0
    %v630 = vmax.f32 %v541, 0.0
    %v631 = vmax.f32 %v544, 0.0
    %v632 = vmax.f32 %v546, 0.0
    %v633 = vmax.f32 %v549, 0.0
    %v634 = vmax.f32 %v551, 0.0
    %v635 = vmax.f32 %v554, 0.0
    %v636 = vmax.f32 %v556, 0.0
    %v637 = vmax.f32 %v559, 0.0
    %v638 = vmax.f32 %v561, 0.0
    %v639 = vmax.f32 %v564, 0.0
    %v640 = vmax.f32 %v566, 0.0
    %v641 = vmax.f32 %v569, 0.0
    %v642 = vmax.f32 %v571, 0.0
    %v643 = vmax.f32 %v574, 0.0
    %v644 = vmax.f32 %v576, 0.0
    %v645 = vmax.f32 %v579, 0.0
    %v646 = vmax.f32 %v581, 0.0
    %v647 = vld [vmem:[%s7] sm:$0xf]
    %v648 = vld [vmem:[%s7 + $0x4] sm:$0xf]
    %v649 = vpack.c.bf16 %v584, %v583
    %v650 = vpack.c.bf16 %v586, %v585
    %v651 = vpack.c.bf16 %v588, %v587
    %v652 = vpack.c.bf16 %v590, %v589
    %v653 = vpack.c.bf16 %v592, %v591
    %v654 = vpack.c.bf16 %v594, %v593
    %v655 = vpack.c.bf16 %v596, %v595
    %v656 = vpack.c.bf16 %v598, %v597
    %v657 = vpack.c.bf16 %v600, %v599
    %v658 = vpack.c.bf16 %v602, %v601
    %v659 = vpack.c.bf16 %v604, %v603
    %v660 = vpack.c.bf16 %v606, %v605
    %v661 = vpack.c.bf16 %v608, %v607
    %v662 = vpack.c.bf16 %v610, %v609
    %v663 = vpack.c.bf16 %v612, %v611
    %v664 = vpack.c.bf16 %v614, %v613
    %v665 = vpack.c.bf16 %v616, %v615
    %v666 = vpack.c.bf16 %v618, %v617
    %v667 = vpack.c.bf16 %v620, %v619
    %v668 = vpack.c.bf16 %v622, %v621
    %v669 = vpack.c.bf16 %v624, %v623
    %v670 = vpack.c.bf16 %v626, %v625
    %v671 = vpack.c.bf16 %v628, %v627
    %v672 = vpack.c.bf16 %v630, %v629
    %v673 = vpack.c.bf16 %v632, %v631
    %v674 = vpack.c.bf16 %v634, %v633
    %v675 = vpack.c.bf16 %v636, %v635
    %v676 = vpack.c.bf16 %v638, %v637
    %v677 = vpack.c.bf16 %v640, %v639
    %v678 = vpack.c.bf16 %v642, %v641
    %v679 = vpack.c.bf16 %v644, %v643
    %v680 = vpack.c.bf16 %v646, %v645
    %v681 = vld [vmem:[%s8] sm:$0x1]
    %v683 = vperm.slane %v681, 0
    %v687 = vunpack.c.l.b16 %v647
    %v688 = vunpack.c.l.b16 %v648
    %v689 = vpack.c.b16 %v688, %v687
    %vm691 = vcmask 130048
    %v693 = vsel %vm691, %v649, 0
    %v696 = vsel %vm691, %v650, 0
    %v699 = vsel %vm691, %v651, 0
    %v702 = vsel %vm691, %v652, 0
    %v705 = vsel %vm691, %v653, 0
    %v708 = vsel %vm691, %v654, 0
    %v711 = vsel %vm691, %v655, 0
    %v714 = vsel %vm691, %v656, 0
    %v717 = vsel %vm691, %v657, 0
    %v720 = vsel %vm691, %v658, 0
    %v723 = vsel %vm691, %v659, 0
    %v726 = vsel %vm691, %v660, 0
    %v729 = vsel %vm691, %v661, 0
    %v732 = vsel %vm691, %v662, 0
    %v735 = vsel %vm691, %v663, 0
    %v738 = vsel %vm691, %v664, 0
    %v741 = vsel %vm691, %v665, 0
    %v744 = vsel %vm691, %v666, 0
    %v747 = vsel %vm691, %v667, 0
    %v750 = vsel %vm691, %v668, 0
    %v753 = vsel %vm691, %v669, 0
    %v756 = vsel %vm691, %v670, 0
    %v759 = vsel %vm691, %v671, 0
    %v762 = vsel %vm691, %v672, 0
    %v765 = vsel %vm691, %v673, 0
    %v768 = vsel %vm691, %v674, 0
    %v771 = vsel %vm691, %v675, 0
    %v774 = vsel %vm691, %v676, 0
    %v777 = vsel %vm691, %v677, 0
    %v780 = vsel %vm691, %v678, 0
    %v783 = vsel %vm691, %v679, 0
    %v786 = vsel %vm691, %v680, 0
    %788 = vmatpush.bf16.msra.mxu0 0
    %789 = vmatpush.bf16.msra.mxu0 0
    %790 = vmatpush.bf16.msra.mxu0 0
    %791 = vmatpush.bf16.msra.mxu0 0
    %792 = vmatpush.bf16.msra.mxu0 0
    %793 = vmatpush.bf16.msra.mxu0 0
    %794 = vmatpush.bf16.msra.mxu0 0
    %795 = vmatpush.bf16.msra.mxu0 %v689
    %796 = vmatmul.bf16.gmra.mxu0 %v693
    %v797 = vpop.f32.mrf.mxu0
    %v798 = vadd.f32 %v683, %v797
    %v799 = vpop.f32.mrf.mxu0
    %v800 = vadd.f32 %v683, %v799
    %801 = vmatmul.bf16.gmra.mxu0 %v696
    %v802 = vpop.f32.mrf.mxu0
    %v803 = vadd.f32 %v683, %v802
    %v804 = vpop.f32.mrf.mxu0
    %v805 = vadd.f32 %v683, %v804
    %806 = vmatmul.bf16.gmra.mxu0 %v699
    %v807 = vpop.f32.mrf.mxu0
    %v808 = vadd.f32 %v683, %v807
    %v809 = vpop.f32.mrf.mxu0
    %v810 = vadd.f32 %v683, %v809
    %811 = vmatmul.bf16.gmra.mxu0 %v702
    %v812 = vpop.f32.mrf.mxu0
    %v813 = vadd.f32 %v683, %v812
    %v814 = vpop.f32.mrf.mxu0
    %v815 = vadd.f32 %v683, %v814
    %816 = vmatmul.bf16.gmra.mxu0 %v705
    %v817 = vpop.f32.mrf.mxu0
    %v818 = vadd.f32 %v683, %v817
    %v819 = vpop.f32.mrf.mxu0
    %v820 = vadd.f32 %v683, %v819
    %821 = vmatmul.bf16.gmra.mxu0 %v708
    %v822 = vpop.f32.mrf.mxu0
    %v823 = vadd.f32 %v683, %v822
    %v824 = vpop.f32.mrf.mxu0
    %v825 = vadd.f32 %v683, %v824
    %826 = vmatmul.bf16.gmra.mxu0 %v711
    %v827 = vpop.f32.mrf.mxu0
    %v828 = vadd.f32 %v683, %v827
    %v829 = vpop.f32.mrf.mxu0
    %v830 = vadd.f32 %v683, %v829
    %831 = vmatmul.bf16.gmra.mxu0 %v714
    %v832 = vpop.f32.mrf.mxu0
    %v833 = vadd.f32 %v683, %v832
    %v834 = vpop.f32.mrf.mxu0
    %v835 = vadd.f32 %v683, %v834
    %836 = vmatmul.bf16.gmra.mxu0 %v717
    %v837 = vpop.f32.mrf.mxu0
    %v838 = vadd.f32 %v683, %v837
    %v839 = vpop.f32.mrf.mxu0
    %v840 = vadd.f32 %v683, %v839
    %841 = vmatmul.bf16.gmra.mxu0 %v720
    %v842 = vpop.f32.mrf.mxu0
    %v843 = vadd.f32 %v683, %v842
    %v844 = vpop.f32.mrf.mxu0
    %v845 = vadd.f32 %v683, %v844
    %846 = vmatmul.bf16.gmra.mxu0 %v723
    %v847 = vpop.f32.mrf.mxu0
    %v848 = vadd.f32 %v683, %v847
    %v849 = vpop.f32.mrf.mxu0
    %v850 = vadd.f32 %v683, %v849
    %851 = vmatmul.bf16.gmra.mxu0 %v726
    %v852 = vpop.f32.mrf.mxu0
    %v853 = vadd.f32 %v683, %v852
    %v854 = vpop.f32.mrf.mxu0
    %v855 = vadd.f32 %v683, %v854
    %856 = vmatmul.bf16.gmra.mxu0 %v729
    %v857 = vpop.f32.mrf.mxu0
    %v858 = vadd.f32 %v683, %v857
    %v859 = vpop.f32.mrf.mxu0
    %v860 = vadd.f32 %v683, %v859
    %861 = vmatmul.bf16.gmra.mxu0 %v732
    %v862 = vpop.f32.mrf.mxu0
    %v863 = vadd.f32 %v683, %v862
    %v864 = vpop.f32.mrf.mxu0
    %v865 = vadd.f32 %v683, %v864
    %866 = vmatmul.bf16.gmra.mxu0 %v735
    %v867 = vpop.f32.mrf.mxu0
    %v868 = vadd.f32 %v683, %v867
    %v869 = vpop.f32.mrf.mxu0
    %v870 = vadd.f32 %v683, %v869
    %871 = vmatmul.bf16.gmra.mxu0 %v738
    %v872 = vpop.f32.mrf.mxu0
    %v873 = vadd.f32 %v683, %v872
    %v874 = vpop.f32.mrf.mxu0
    %v875 = vadd.f32 %v683, %v874
    %876 = vmatmul.bf16.gmra.mxu0 %v741
    %v877 = vpop.f32.mrf.mxu0
    %v878 = vadd.f32 %v683, %v877
    %v879 = vpop.f32.mrf.mxu0
    %v880 = vadd.f32 %v683, %v879
    %881 = vmatmul.bf16.gmra.mxu0 %v744
    %v882 = vpop.f32.mrf.mxu0
    %v883 = vadd.f32 %v683, %v882
    %v884 = vpop.f32.mrf.mxu0
    %v885 = vadd.f32 %v683, %v884
    %886 = vmatmul.bf16.gmra.mxu0 %v747
    %v887 = vpop.f32.mrf.mxu0
    %v888 = vadd.f32 %v683, %v887
    %v889 = vpop.f32.mrf.mxu0
    %v890 = vadd.f32 %v683, %v889
    %891 = vmatmul.bf16.gmra.mxu0 %v750
    %v892 = vpop.f32.mrf.mxu0
    %v893 = vadd.f32 %v683, %v892
    %v894 = vpop.f32.mrf.mxu0
    %v895 = vadd.f32 %v683, %v894
    %896 = vmatmul.bf16.gmra.mxu0 %v753
    %v897 = vpop.f32.mrf.mxu0
    %v898 = vadd.f32 %v683, %v897
    %v899 = vpop.f32.mrf.mxu0
    %v900 = vadd.f32 %v683, %v899
    %901 = vmatmul.bf16.gmra.mxu0 %v756
    %v902 = vpop.f32.mrf.mxu0
    %v903 = vadd.f32 %v683, %v902
    %v904 = vpop.f32.mrf.mxu0
    %v905 = vadd.f32 %v683, %v904
    %906 = vmatmul.bf16.gmra.mxu0 %v759
    %v907 = vpop.f32.mrf.mxu0
    %v908 = vadd.f32 %v683, %v907
    %v909 = vpop.f32.mrf.mxu0
    %v910 = vadd.f32 %v683, %v909
    %911 = vmatmul.bf16.gmra.mxu0 %v762
    %v912 = vpop.f32.mrf.mxu0
    %v913 = vadd.f32 %v683, %v912
    %v914 = vpop.f32.mrf.mxu0
    %v915 = vadd.f32 %v683, %v914
    %916 = vmatmul.bf16.gmra.mxu0 %v765
    %v917 = vpop.f32.mrf.mxu0
    %v918 = vadd.f32 %v683, %v917
    %v919 = vpop.f32.mrf.mxu0
    %v920 = vadd.f32 %v683, %v919
    %921 = vmatmul.bf16.gmra.mxu0 %v768
    %v922 = vpop.f32.mrf.mxu0
    %v923 = vadd.f32 %v683, %v922
    %v924 = vpop.f32.mrf.mxu0
    %v925 = vadd.f32 %v683, %v924
    %926 = vmatmul.bf16.gmra.mxu0 %v771
    %v927 = vpop.f32.mrf.mxu0
    %v928 = vadd.f32 %v683, %v927
    %v929 = vpop.f32.mrf.mxu0
    %v930 = vadd.f32 %v683, %v929
    %931 = vmatmul.bf16.gmra.mxu0 %v774
    %v932 = vpop.f32.mrf.mxu0
    %v933 = vadd.f32 %v683, %v932
    %v934 = vpop.f32.mrf.mxu0
    %v935 = vadd.f32 %v683, %v934
    %936 = vmatmul.bf16.gmra.mxu0 %v777
    %v937 = vpop.f32.mrf.mxu0
    %v938 = vadd.f32 %v683, %v937
    %v939 = vpop.f32.mrf.mxu0
    %v940 = vadd.f32 %v683, %v939
    %941 = vmatmul.bf16.gmra.mxu0 %v780
    %v942 = vpop.f32.mrf.mxu0
    %v943 = vadd.f32 %v683, %v942
    %v944 = vpop.f32.mrf.mxu0
    %v945 = vadd.f32 %v683, %v944
    %946 = vmatmul.bf16.gmra.mxu0 %v783
    %v947 = vpop.f32.mrf.mxu0
    %v948 = vadd.f32 %v683, %v947
    %v949 = vpop.f32.mrf.mxu0
    %v950 = vadd.f32 %v683, %v949
    %951 = vmatmul.bf16.gmra.mxu0 %v786
    %v952 = vpop.f32.mrf.mxu0
    %v953 = vadd.f32 %v683, %v952
    %v954 = vpop.f32.mrf.mxu0
    %v955 = vadd.f32 %v683, %v954
    %956 = vdwg.mxu0
    %v957 = vmax.f32 %v798, 0.0
    %v958 = vmax.f32 %v800, 0.0
    %v959 = vmax.f32 %v803, 0.0
    %v960 = vmax.f32 %v805, 0.0
    %v961 = vmax.f32 %v808, 0.0
    %v962 = vmax.f32 %v810, 0.0
    %v963 = vmax.f32 %v813, 0.0
    %v964 = vmax.f32 %v815, 0.0
    %v965 = vmax.f32 %v818, 0.0
    %v966 = vmax.f32 %v820, 0.0
    %v967 = vmax.f32 %v823, 0.0
    %v968 = vmax.f32 %v825, 0.0
    %v969 = vmax.f32 %v828, 0.0
    %v970 = vmax.f32 %v830, 0.0
    %v971 = vmax.f32 %v833, 0.0
    %v972 = vmax.f32 %v835, 0.0
    %v973 = vmax.f32 %v838, 0.0
    %v974 = vmax.f32 %v840, 0.0
    %v975 = vmax.f32 %v843, 0.0
    %v976 = vmax.f32 %v845, 0.0
    %v977 = vmax.f32 %v848, 0.0
    %v978 = vmax.f32 %v850, 0.0
    %v979 = vmax.f32 %v853, 0.0
    %v980 = vmax.f32 %v855, 0.0
    %v981 = vmax.f32 %v858, 0.0
    %v982 = vmax.f32 %v860, 0.0
    %v983 = vmax.f32 %v863, 0.0
    %v984 = vmax.f32 %v865, 0.0
    %v985 = vmax.f32 %v868, 0.0
    %v986 = vmax.f32 %v870, 0.0
    %v987 = vmax.f32 %v873, 0.0
    %v988 = vmax.f32 %v875, 0.0
    %v989 = vmax.f32 %v878, 0.0
    %v990 = vmax.f32 %v880, 0.0
    %v991 = vmax.f32 %v883, 0.0
    %v992 = vmax.f32 %v885, 0.0
    %v993 = vmax.f32 %v888, 0.0
    %v994 = vmax.f32 %v890, 0.0
    %v995 = vmax.f32 %v893, 0.0
    %v996 = vmax.f32 %v895, 0.0
    %v997 = vmax.f32 %v898, 0.0
    %v998 = vmax.f32 %v900, 0.0
    %v999 = vmax.f32 %v903, 0.0
    %v1000 = vmax.f32 %v905, 0.0
    %v1001 = vmax.f32 %v908, 0.0
    %v1002 = vmax.f32 %v910, 0.0
    %v1003 = vmax.f32 %v913, 0.0
    %v1004 = vmax.f32 %v915, 0.0
    %v1005 = vmax.f32 %v918, 0.0
    %v1006 = vmax.f32 %v920, 0.0
    %v1007 = vmax.f32 %v923, 0.0
    %v1008 = vmax.f32 %v925, 0.0
    %v1009 = vmax.f32 %v928, 0.0
    %v1010 = vmax.f32 %v930, 0.0
    %v1011 = vmax.f32 %v933, 0.0
    %v1012 = vmax.f32 %v935, 0.0
    %v1013 = vmax.f32 %v938, 0.0
    %v1014 = vmax.f32 %v940, 0.0
    %v1015 = vmax.f32 %v943, 0.0
    %v1016 = vmax.f32 %v945, 0.0
    %v1017 = vmax.f32 %v948, 0.0
    %v1018 = vmax.f32 %v950, 0.0
    %v1019 = vmax.f32 %v953, 0.0
    %v1020 = vmax.f32 %v955, 0.0
    %v1021 = vadd.f32 %v583, %v957
    %v1022 = vadd.f32 %v584, %v958
    %v1023 = vadd.f32 %v585, %v959
    %v1024 = vadd.f32 %v586, %v960
    %v1025 = vadd.f32 %v587, %v961
    %v1026 = vadd.f32 %v588, %v962
    %v1027 = vadd.f32 %v589, %v963
    %v1028 = vadd.f32 %v590, %v964
    %v1029 = vadd.f32 %v591, %v965
    %v1030 = vadd.f32 %v592, %v966
    %v1031 = vadd.f32 %v593, %v967
    %v1032 = vadd.f32 %v594, %v968
    %v1033 = vadd.f32 %v595, %v969
    %v1034 = vadd.f32 %v596, %v970
    %v1035 = vadd.f32 %v597, %v971
    %v1036 = vadd.f32 %v598, %v972
    %v1037 = vadd.f32 %v599, %v973
    %v1038 = vadd.f32 %v600, %v974
    %v1039 = vadd.f32 %v601, %v975
    %v1040 = vadd.f32 %v602, %v976
    %v1041 = vadd.f32 %v603, %v977
    %v1042 = vadd.f32 %v604, %v978
    %v1043 = vadd.f32 %v605, %v979
    %v1044 = vadd.f32 %v606, %v980
    %v1045 = vadd.f32 %v607, %v981
    %v1046 = vadd.f32 %v608, %v982
    %v1047 = vadd.f32 %v609, %v983
    %v1048 = vadd.f32 %v610, %v984
    %v1049 = vadd.f32 %v611, %v985
    %v1050 = vadd.f32 %v612, %v986
    %v1051 = vadd.f32 %v613, %v987
    %v1052 = vadd.f32 %v614, %v988
    %v1053 = vadd.f32 %v615, %v989
    %v1054 = vadd.f32 %v616, %v990
    %v1055 = vadd.f32 %v617, %v991
    %v1056 = vadd.f32 %v618, %v992
    %v1057 = vadd.f32 %v619, %v993
    %v1058 = vadd.f32 %v620, %v994
    %v1059 = vadd.f32 %v621, %v995
    %v1060 = vadd.f32 %v622, %v996
    %v1061 = vadd.f32 %v623, %v997
    %v1062 = vadd.f32 %v624, %v998
    %v1063 = vadd.f32 %v625, %v999
    %v1064 = vadd.f32 %v626, %v1000
    %v1065 = vadd.f32 %v627, %v1001
    %v1066 = vadd.f32 %v628, %v1002
    %v1067 = vadd.f32 %v629, %v1003
    %v1068 = vadd.f32 %v630, %v1004
    %v1069 = vadd.f32 %v631, %v1005
    %v1070 = vadd.f32 %v632, %v1006
    %v1071 = vadd.f32 %v633, %v1007
    %v1072 = vadd.f32 %v634, %v1008
    %v1073 = vadd.f32 %v635, %v1009
    %v1074 = vadd.f32 %v636, %v1010
    %v1075 = vadd.f32 %v637, %v1011
    %v1076 = vadd.f32 %v638, %v1012
    %v1077 = vadd.f32 %v639, %v1013
    %v1078 = vadd.f32 %v640, %v1014
    %v1079 = vadd.f32 %v641, %v1015
    %v1080 = vadd.f32 %v642, %v1016
    %v1081 = vadd.f32 %v643, %v1017
    %v1082 = vadd.f32 %v644, %v1018
    %v1083 = vadd.f32 %v645, %v1019
    %v1084 = vadd.f32 %v646, %v1020
    %v1085 = vld [vmem:[%s9] sm:$0xf]
    %v1086 = vld [vmem:[%s9 + $0x4] sm:$0xf]
    %v1087 = vld [vmem:[%s9 + $0x8] sm:$0xf]
    %v1088 = vld [vmem:[%s9 + $0xc] sm:$0xf]
    %v1089 = vld [vmem:[%s9 + $0x10] sm:$0xf]
    %v1090 = vld [vmem:[%s9 + $0x14] sm:$0xf]
    %v1091 = vld [vmem:[%s9 + $0x18] sm:$0xf]
    %v1092 = vld [vmem:[%s9 + $0x1c] sm:$0xf]
    %v1093 = vld [vmem:[%s1] sm:$0xff]
    %v1094 = vld [vmem:[%s1 + $0x8] sm:$0xff]
    %v1095 = vld [vmem:[%s1 + $0x10] sm:$0xff]
    %v1096 = vld [vmem:[%s1 + $0x18] sm:$0xff]
    %v1097 = vld [vmem:[%s1 + $0x20] sm:$0xff]
    %v1098 = vld [vmem:[%s1 + $0x28] sm:$0xff]
    %v1099 = vld [vmem:[%s1 + $0x30] sm:$0xff]
    %v1100 = vld [vmem:[%s1 + $0x38] sm:$0xff]
    %v1101 = vld [vmem:[%s1 + $0x40] sm:$0xff]
    %v1102 = vld [vmem:[%s1 + $0x48] sm:$0xff]
    %v1103 = vld [vmem:[%s1 + $0x50] sm:$0xff]
    %v1104 = vld [vmem:[%s1 + $0x58] sm:$0xff]
    %v1105 = vld [vmem:[%s1 + $0x60] sm:$0xff]
    %v1106 = vld [vmem:[%s1 + $0x68] sm:$0xff]
    %v1107 = vld [vmem:[%s1 + $0x70] sm:$0xff]
    %v1108 = vld [vmem:[%s1 + $0x78] sm:$0xff]
    %v1109 = vld [vmem:[%s1 + $0x80] sm:$0xff]
    %v1110 = vld [vmem:[%s1 + $0x88] sm:$0xff]
    %v1111 = vld [vmem:[%s1 + $0x90] sm:$0xff]
    %v1112 = vld [vmem:[%s1 + $0x98] sm:$0xff]
    %v1113 = vld [vmem:[%s1 + $0xa0] sm:$0xff]
    %v1114 = vld [vmem:[%s1 + $0xa8] sm:$0xff]
    %v1115 = vld [vmem:[%s1 + $0xb0] sm:$0xff]
    %v1116 = vld [vmem:[%s1 + $0xb8] sm:$0xff]
    %v1117 = vld [vmem:[%s1 + $0xc0] sm:$0xff]
    %v1118 = vld [vmem:[%s1 + $0xc8] sm:$0xff]
    %v1119 = vld [vmem:[%s1 + $0xd0] sm:$0xff]
    %v1120 = vld [vmem:[%s1 + $0xd8] sm:$0xff]
    %v1121 = vld [vmem:[%s1 + $0xe0] sm:$0xff]
    %v1122 = vld [vmem:[%s1 + $0xe8] sm:$0xff]
    %v1123 = vld [vmem:[%s1 + $0xf0] sm:$0xff]
    %v1124 = vld [vmem:[%s1 + $0xf8] sm:$0xff]
    %v1125 = vpack.c.bf16 %v1022, %v1021
    %v1126 = vpack.c.bf16 %v1024, %v1023
    %v1127 = vpack.c.bf16 %v1026, %v1025
    %v1128 = vpack.c.bf16 %v1028, %v1027
    %v1129 = vpack.c.bf16 %v1030, %v1029
    %v1130 = vpack.c.bf16 %v1032, %v1031
    %v1131 = vpack.c.bf16 %v1034, %v1033
    %v1132 = vpack.c.bf16 %v1036, %v1035
    %v1133 = vpack.c.bf16 %v1038, %v1037
    %v1134 = vpack.c.bf16 %v1040, %v1039
    %v1135 = vpack.c.bf16 %v1042, %v1041
    %v1136 = vpack.c.bf16 %v1044, %v1043
    %v1137 = vpack.c.bf16 %v1046, %v1045
    %v1138 = vpack.c.bf16 %v1048, %v1047
    %v1139 = vpack.c.bf16 %v1050, %v1049
    %v1140 = vpack.c.bf16 %v1052, %v1051
    %v1141 = vpack.c.bf16 %v1054, %v1053
    %v1142 = vpack.c.bf16 %v1056, %v1055
    %v1143 = vpack.c.bf16 %v1058, %v1057
    %v1144 = vpack.c.bf16 %v1060, %v1059
    %v1145 = vpack.c.bf16 %v1062, %v1061
    %v1146 = vpack.c.bf16 %v1064, %v1063
    %v1147 = vpack.c.bf16 %v1066, %v1065
    %v1148 = vpack.c.bf16 %v1068, %v1067
    %v1149 = vpack.c.bf16 %v1070, %v1069
    %v1150 = vpack.c.bf16 %v1072, %v1071
    %v1151 = vpack.c.bf16 %v1074, %v1073
    %v1152 = vpack.c.bf16 %v1076, %v1075
    %v1153 = vpack.c.bf16 %v1078, %v1077
    %v1154 = vpack.c.bf16 %v1080, %v1079
    %v1155 = vpack.c.bf16 %v1082, %v1081
    %v1156 = vpack.c.bf16 %v1084, %v1083
    %v1189 = vunpack.c.l.b16 %v1093
    %v1190 = vunpack.c.h.b16 %v1093
    %v1191 = vunpack.c.l.b16 %v1094
    %v1192 = vunpack.c.h.b16 %v1094
    %v1193 = vunpack.c.l.b16 %v1095
    %v1194 = vunpack.c.h.b16 %v1095
    %v1195 = vunpack.c.l.b16 %v1096
    %v1196 = vunpack.c.h.b16 %v1096
    %v1197 = vunpack.c.l.b16 %v1097
    %v1198 = vunpack.c.h.b16 %v1097
    %v1199 = vunpack.c.l.b16 %v1098
    %v1200 = vunpack.c.h.b16 %v1098
    %v1201 = vunpack.c.l.b16 %v1099
    %v1202 = vunpack.c.h.b16 %v1099
    %v1203 = vunpack.c.l.b16 %v1100
    %v1204 = vunpack.c.h.b16 %v1100
    %v1205 = vunpack.c.l.b16 %v1101
    %v1206 = vunpack.c.h.b16 %v1101
    %v1207 = vunpack.c.l.b16 %v1102
    %v1208 = vunpack.c.h.b16 %v1102
    %v1209 = vunpack.c.l.b16 %v1103
    %v1210 = vunpack.c.h.b16 %v1103
    %v1211 = vunpack.c.l.b16 %v1104
    %v1212 = vunpack.c.h.b16 %v1104
    %v1213 = vunpack.c.l.b16 %v1105
    %v1214 = vunpack.c.h.b16 %v1105
    %v1215 = vunpack.c.l.b16 %v1106
    %v1216 = vunpack.c.h.b16 %v1106
    %v1217 = vunpack.c.l.b16 %v1107
    %v1218 = vunpack.c.h.b16 %v1107
    %v1219 = vunpack.c.l.b16 %v1108
    %v1220 = vunpack.c.h.b16 %v1108
    %v1221 = vunpack.c.l.b16 %v1109
    %v1222 = vunpack.c.h.b16 %v1109
    %v1223 = vunpack.c.l.b16 %v1110
    %v1224 = vunpack.c.h.b16 %v1110
    %v1225 = vunpack.c.l.b16 %v1111
    %v1226 = vunpack.c.h.b16 %v1111
    %v1227 = vunpack.c.l.b16 %v1112
    %v1228 = vunpack.c.h.b16 %v1112
    %v1229 = vunpack.c.l.b16 %v1113
    %v1230 = vunpack.c.h.b16 %v1113
    %v1231 = vunpack.c.l.b16 %v1114
    %v1232 = vunpack.c.h.b16 %v1114
    %v1233 = vunpack.c.l.b16 %v1115
    %v1234 = vunpack.c.h.b16 %v1115
    %v1235 = vunpack.c.l.b16 %v1116
    %v1236 = vunpack.c.h.b16 %v1116
    %v1237 = vunpack.c.l.b16 %v1117
    %v1238 = vunpack.c.h.b16 %v1117
    %v1239 = vunpack.c.l.b16 %v1118
    %v1240 = vunpack.c.h.b16 %v1118
    %v1241 = vunpack.c.l.b16 %v1119
    %v1242 = vunpack.c.h.b16 %v1119
    %v1243 = vunpack.c.l.b16 %v1120
    %v1244 = vunpack.c.h.b16 %v1120
    %v1245 = vunpack.c.l.b16 %v1121
    %v1246 = vunpack.c.h.b16 %v1121
    %v1247 = vunpack.c.l.b16 %v1122
    %v1248 = vunpack.c.h.b16 %v1122
    %v1249 = vunpack.c.l.b16 %v1123
    %v1250 = vunpack.c.h.b16 %v1123
    %v1251 = vunpack.c.l.b16 %v1124
    %v1252 = vunpack.c.h.b16 %v1124
    %v1253 = vpack.c.b16 %v1193, %v1189
    %v1254 = vpack.c.b16 %v1194, %v1190
    %v1255 = vpack.c.b16 %v1195, %v1191
    %v1256 = vpack.c.b16 %v1196, %v1192
    %v1257 = vpack.c.b16 %v1201, %v1197
    %v1258 = vpack.c.b16 %v1202, %v1198
    %v1259 = vpack.c.b16 %v1203, %v1199
    %v1260 = vpack.c.b16 %v1204, %v1200
    %v1261 = vpack.c.b16 %v1209, %v1205
    %v1262 = vpack.c.b16 %v1210, %v1206
    %v1263 = vpack.c.b16 %v1211, %v1207
    %v1264 = vpack.c.b16 %v1212, %v1208
    %v1265 = vpack.c.b16 %v1217, %v1213
    %v1266 = vpack.c.b16 %v1218, %v1214
    %v1267 = vpack.c.b16 %v1219, %v1215
    %v1268 = vpack.c.b16 %v1220, %v1216
    %v1269 = vpack.c.b16 %v1225, %v1221
    %v1270 = vpack.c.b16 %v1226, %v1222
    %v1271 = vpack.c.b16 %v1227, %v1223
    %v1272 = vpack.c.b16 %v1228, %v1224
    %v1273 = vpack.c.b16 %v1233, %v1229
    %v1274 = vpack.c.b16 %v1234, %v1230
    %v1275 = vpack.c.b16 %v1235, %v1231
    %v1276 = vpack.c.b16 %v1236, %v1232
    %v1277 = vpack.c.b16 %v1241, %v1237
    %v1278 = vpack.c.b16 %v1242, %v1238
    %v1279 = vpack.c.b16 %v1243, %v1239
    %v1280 = vpack.c.b16 %v1244, %v1240
    %v1281 = vpack.c.b16 %v1249, %v1245
    %v1282 = vpack.c.b16 %v1250, %v1246
    %v1283 = vpack.c.b16 %v1251, %v1247
    %v1284 = vpack.c.b16 %v1252, %v1248
    %1317 = vmatpush.bf16.msra.mxu0 %v1132
    %1318 = vmatpush.bf16.msra.mxu0 %v1131
    %1319 = vmatpush.bf16.msra.mxu0 %v1130
    %1320 = vmatpush.bf16.msra.mxu0 %v1129
    %1321 = vmatpush.bf16.msra.mxu0 %v1128
    %1322 = vmatpush.bf16.msra.mxu0 %v1127
    %1323 = vmatpush.bf16.msra.mxu0 %v1126
    %1324 = vmatpush.bf16.msra.mxu0 %v1125
    %1325 = vmatmul.bf16.gmra.mxu0 %v1253
    %v1326 = vpop.f32.mrf.mxu0
    %v1327 = vadd.f32 0.0, %v1326
    %v1328 = vpop.f32.mrf.mxu0
    %v1329 = vadd.f32 0.0, %v1328
    %1330 = vmatmul.bf16.gmra.mxu0 %v1257
    %v1331 = vpop.f32.mrf.mxu0
    %v1332 = vadd.f32 0.0, %v1331
    %v1333 = vpop.f32.mrf.mxu0
    %v1334 = vadd.f32 0.0, %v1333
    %1335 = vmatmul.bf16.gmra.mxu0 %v1261
    %v1336 = vpop.f32.mrf.mxu0
    %v1337 = vadd.f32 0.0, %v1336
    %v1338 = vpop.f32.mrf.mxu0
    %v1339 = vadd.f32 0.0, %v1338
    %1340 = vmatmul.bf16.gmra.mxu0 %v1265
    %v1341 = vpop.f32.mrf.mxu0
    %v1342 = vadd.f32 0.0, %v1341
    %v1343 = vpop.f32.mrf.mxu0
    %v1344 = vadd.f32 0.0, %v1343
    %1345 = vmatmul.bf16.gmra.mxu0 %v1269
    %v1346 = vpop.f32.mrf.mxu0
    %v1347 = vadd.f32 0.0, %v1346
    %v1348 = vpop.f32.mrf.mxu0
    %v1349 = vadd.f32 0.0, %v1348
    %1350 = vmatmul.bf16.gmra.mxu0 %v1273
    %v1351 = vpop.f32.mrf.mxu0
    %v1352 = vadd.f32 0.0, %v1351
    %v1353 = vpop.f32.mrf.mxu0
    %v1354 = vadd.f32 0.0, %v1353
    %1355 = vmatmul.bf16.gmra.mxu0 %v1277
    %v1356 = vpop.f32.mrf.mxu0
    %v1357 = vadd.f32 0.0, %v1356
    %v1358 = vpop.f32.mrf.mxu0
    %v1359 = vadd.f32 0.0, %v1358
    %1360 = vmatmul.bf16.gmra.mxu0 %v1281
    %v1361 = vpop.f32.mrf.mxu0
    %v1362 = vadd.f32 0.0, %v1361
    %v1363 = vpop.f32.mrf.mxu0
    %v1364 = vadd.f32 0.0, %v1363
    %1365 = vdwg.mxu0
    %1366 = vmatpush.bf16.msra.mxu0 %v1140
    %1367 = vmatpush.bf16.msra.mxu0 %v1139
    %1368 = vmatpush.bf16.msra.mxu0 %v1138
    %1369 = vmatpush.bf16.msra.mxu0 %v1137
    %1370 = vmatpush.bf16.msra.mxu0 %v1136
    %1371 = vmatpush.bf16.msra.mxu0 %v1135
    %1372 = vmatpush.bf16.msra.mxu0 %v1134
    %1373 = vmatpush.bf16.msra.mxu0 %v1133
    %1374 = vmatmul.bf16.gmra.mxu0 %v1254
    %v1375 = vpop.f32.mrf.mxu0
    %v1376 = vadd.f32 %v1327, %v1375
    %v1377 = vpop.f32.mrf.mxu0
    %v1378 = vadd.f32 %v1329, %v1377
    %1379 = vmatmul.bf16.gmra.mxu0 %v1258
    %v1380 = vpop.f32.mrf.mxu0
    %v1381 = vadd.f32 %v1332, %v1380
    %v1382 = vpop.f32.mrf.mxu0
    %v1383 = vadd.f32 %v1334, %v1382
    %1384 = vmatmul.bf16.gmra.mxu0 %v1262
    %v1385 = vpop.f32.mrf.mxu0
    %v1386 = vadd.f32 %v1337, %v1385
    %v1387 = vpop.f32.mrf.mxu0
    %v1388 = vadd.f32 %v1339, %v1387
    %1389 = vmatmul.bf16.gmra.mxu0 %v1266
    %v1390 = vpop.f32.mrf.mxu0
    %v1391 = vadd.f32 %v1342, %v1390
    %v1392 = vpop.f32.mrf.mxu0
    %v1393 = vadd.f32 %v1344, %v1392
    %1394 = vmatmul.bf16.gmra.mxu0 %v1270
    %v1395 = vpop.f32.mrf.mxu0
    %v1396 = vadd.f32 %v1347, %v1395
    %v1397 = vpop.f32.mrf.mxu0
    %v1398 = vadd.f32 %v1349, %v1397
    %1399 = vmatmul.bf16.gmra.mxu0 %v1274
    %v1400 = vpop.f32.mrf.mxu0
    %v1401 = vadd.f32 %v1352, %v1400
    %v1402 = vpop.f32.mrf.mxu0
    %v1403 = vadd.f32 %v1354, %v1402
    %1404 = vmatmul.bf16.gmra.mxu0 %v1278
    %v1405 = vpop.f32.mrf.mxu0
    %v1406 = vadd.f32 %v1357, %v1405
    %v1407 = vpop.f32.mrf.mxu0
    %v1408 = vadd.f32 %v1359, %v1407
    %1409 = vmatmul.bf16.gmra.mxu0 %v1282
    %v1410 = vpop.f32.mrf.mxu0
    %v1411 = vadd.f32 %v1362, %v1410
    %v1412 = vpop.f32.mrf.mxu0
    %v1413 = vadd.f32 %v1364, %v1412
    %1414 = vdwg.mxu0
    %1415 = vmatpush.bf16.msra.mxu0 %v1148
    %1416 = vmatpush.bf16.msra.mxu0 %v1147
    %1417 = vmatpush.bf16.msra.mxu0 %v1146
    %1418 = vmatpush.bf16.msra.mxu0 %v1145
    %1419 = vmatpush.bf16.msra.mxu0 %v1144
    %1420 = vmatpush.bf16.msra.mxu0 %v1143
    %1421 = vmatpush.bf16.msra.mxu0 %v1142
    %1422 = vmatpush.bf16.msra.mxu0 %v1141
    %1423 = vmatmul.bf16.gmra.mxu0 %v1255
    %v1424 = vpop.f32.mrf.mxu0
    %v1425 = vadd.f32 %v1376, %v1424
    %v1426 = vpop.f32.mrf.mxu0
    %v1427 = vadd.f32 %v1378, %v1426
    %1428 = vmatmul.bf16.gmra.mxu0 %v1259
    %v1429 = vpop.f32.mrf.mxu0
    %v1430 = vadd.f32 %v1381, %v1429
    %v1431 = vpop.f32.mrf.mxu0
    %v1432 = vadd.f32 %v1383, %v1431
    %1433 = vmatmul.bf16.gmra.mxu0 %v1263
    %v1434 = vpop.f32.mrf.mxu0
    %v1435 = vadd.f32 %v1386, %v1434
    %v1436 = vpop.f32.mrf.mxu0
    %v1437 = vadd.f32 %v1388, %v1436
    %1438 = vmatmul.bf16.gmra.mxu0 %v1267
    %v1439 = vpop.f32.mrf.mxu0
    %v1440 = vadd.f32 %v1391, %v1439
    %v1441 = vpop.f32.mrf.mxu0
    %v1442 = vadd.f32 %v1393, %v1441
    %1443 = vmatmul.bf16.gmra.mxu0 %v1271
    %v1444 = vpop.f32.mrf.mxu0
    %v1445 = vadd.f32 %v1396, %v1444
    %v1446 = vpop.f32.mrf.mxu0
    %v1447 = vadd.f32 %v1398, %v1446
    %1448 = vmatmul.bf16.gmra.mxu0 %v1275
    %v1449 = vpop.f32.mrf.mxu0
    %v1450 = vadd.f32 %v1401, %v1449
    %v1451 = vpop.f32.mrf.mxu0
    %v1452 = vadd.f32 %v1403, %v1451
    %1453 = vmatmul.bf16.gmra.mxu0 %v1279
    %v1454 = vpop.f32.mrf.mxu0
    %v1455 = vadd.f32 %v1406, %v1454
    %v1456 = vpop.f32.mrf.mxu0
    %v1457 = vadd.f32 %v1408, %v1456
    %1458 = vmatmul.bf16.gmra.mxu0 %v1283
    %v1459 = vpop.f32.mrf.mxu0
    %v1460 = vadd.f32 %v1411, %v1459
    %v1461 = vpop.f32.mrf.mxu0
    %v1462 = vadd.f32 %v1413, %v1461
    %1463 = vdwg.mxu0
    %1464 = vmatpush.bf16.msra.mxu0 %v1156
    %1465 = vmatpush.bf16.msra.mxu0 %v1155
    %1466 = vmatpush.bf16.msra.mxu0 %v1154
    %1467 = vmatpush.bf16.msra.mxu0 %v1153
    %1468 = vmatpush.bf16.msra.mxu0 %v1152
    %1469 = vmatpush.bf16.msra.mxu0 %v1151
    %1470 = vmatpush.bf16.msra.mxu0 %v1150
    %1471 = vmatpush.bf16.msra.mxu0 %v1149
    %1472 = vmatmul.bf16.gmra.mxu0 %v1256
    %v1473 = vpop.f32.mrf.mxu0
    %v1474 = vadd.f32 %v1425, %v1473
    %v1475 = vpop.f32.mrf.mxu0
    %v1476 = vadd.f32 %v1427, %v1475
    %1477 = vmatmul.bf16.gmra.mxu0 %v1260
    %v1478 = vpop.f32.mrf.mxu0
    %v1479 = vadd.f32 %v1430, %v1478
    %v1480 = vpop.f32.mrf.mxu0
    %v1481 = vadd.f32 %v1432, %v1480
    %1482 = vmatmul.bf16.gmra.mxu0 %v1264
    %v1483 = vpop.f32.mrf.mxu0
    %v1484 = vadd.f32 %v1435, %v1483
    %v1485 = vpop.f32.mrf.mxu0
    %v1486 = vadd.f32 %v1437, %v1485
    %1487 = vmatmul.bf16.gmra.mxu0 %v1268
    %v1488 = vpop.f32.mrf.mxu0
    %v1489 = vadd.f32 %v1440, %v1488
    %v1490 = vpop.f32.mrf.mxu0
    %v1491 = vadd.f32 %v1442, %v1490
    %1492 = vmatmul.bf16.gmra.mxu0 %v1272
    %v1493 = vpop.f32.mrf.mxu0
    %v1494 = vadd.f32 %v1445, %v1493
    %v1495 = vpop.f32.mrf.mxu0
    %v1496 = vadd.f32 %v1447, %v1495
    %1497 = vmatmul.bf16.gmra.mxu0 %v1276
    %v1498 = vpop.f32.mrf.mxu0
    %v1499 = vadd.f32 %v1450, %v1498
    %v1500 = vpop.f32.mrf.mxu0
    %v1501 = vadd.f32 %v1452, %v1500
    %1502 = vmatmul.bf16.gmra.mxu0 %v1280
    %v1503 = vpop.f32.mrf.mxu0
    %v1504 = vadd.f32 %v1455, %v1503
    %v1505 = vpop.f32.mrf.mxu0
    %v1506 = vadd.f32 %v1457, %v1505
    %1507 = vmatmul.bf16.gmra.mxu0 %v1284
    %v1508 = vpop.f32.mrf.mxu0
    %v1509 = vadd.f32 %v1460, %v1508
    %v1510 = vpop.f32.mrf.mxu0
    %v1511 = vadd.f32 %v1462, %v1510
    %1512 = vdwg.mxu0
    %v1513 = vpack.c.bf16 %v1476, %v1474
    %v1514 = vpack.c.bf16 %v1481, %v1479
    %v1515 = vpack.c.bf16 %v1486, %v1484
    %v1516 = vpack.c.bf16 %v1491, %v1489
    %v1517 = vpack.c.bf16 %v1496, %v1494
    %v1518 = vpack.c.bf16 %v1501, %v1499
    %v1519 = vpack.c.bf16 %v1506, %v1504
    %v1520 = vpack.c.bf16 %v1511, %v1509
    %s1521 = scalar_lea.vmem %s1, 256
    %v1522 = vld [vmem:[%s1521] sm:$0xff]
    %v1523 = vld [vmem:[%s1521 + $0x8] sm:$0xff]
    %v1524 = vld [vmem:[%s1521 + $0x10] sm:$0xff]
    %v1525 = vld [vmem:[%s1521 + $0x18] sm:$0xff]
    %v1526 = vld [vmem:[%s1521 + $0x20] sm:$0xff]
    %v1527 = vld [vmem:[%s1521 + $0x28] sm:$0xff]
    %v1528 = vld [vmem:[%s1521 + $0x30] sm:$0xff]
    %v1529 = vld [vmem:[%s1521 + $0x38] sm:$0xff]
    %v1530 = vld [vmem:[%s1521 + $0x40] sm:$0xff]
    %v1531 = vld [vmem:[%s1521 + $0x48] sm:$0xff]
    %v1532 = vld [vmem:[%s1521 + $0x50] sm:$0xff]
    %v1533 = vld [vmem:[%s1521 + $0x58] sm:$0xff]
    %v1534 = vld [vmem:[%s1521 + $0x60] sm:$0xff]
    %v1535 = vld [vmem:[%s1521 + $0x68] sm:$0xff]
    %v1536 = vld [vmem:[%s1521 + $0x70] sm:$0xff]
    %v1537 = vld [vmem:[%s1521 + $0x78] sm:$0xff]
    %v1538 = vld [vmem:[%s1521 + $0x80] sm:$0xff]
    %v1539 = vld [vmem:[%s1521 + $0x88] sm:$0xff]
    %v1540 = vld [vmem:[%s1521 + $0x90] sm:$0xff]
    %v1541 = vld [vmem:[%s1521 + $0x98] sm:$0xff]
    %v1542 = vld [vmem:[%s1521 + $0xa0] sm:$0xff]
    %v1543 = vld [vmem:[%s1521 + $0xa8] sm:$0xff]
    %v1544 = vld [vmem:[%s1521 + $0xb0] sm:$0xff]
    %v1545 = vld [vmem:[%s1521 + $0xb8] sm:$0xff]
    %v1546 = vld [vmem:[%s1521 + $0xc0] sm:$0xff]
    %v1547 = vld [vmem:[%s1521 + $0xc8] sm:$0xff]
    %v1548 = vld [vmem:[%s1521 + $0xd0] sm:$0xff]
    %v1549 = vld [vmem:[%s1521 + $0xd8] sm:$0xff]
    %v1550 = vld [vmem:[%s1521 + $0xe0] sm:$0xff]
    %v1551 = vld [vmem:[%s1521 + $0xe8] sm:$0xff]
    %v1552 = vld [vmem:[%s1521 + $0xf0] sm:$0xff]
    %v1553 = vld [vmem:[%s1521 + $0xf8] sm:$0xff]
    %v1586 = vunpack.c.l.b16 %v1522
    %v1587 = vunpack.c.h.b16 %v1522
    %v1588 = vunpack.c.l.b16 %v1523
    %v1589 = vunpack.c.h.b16 %v1523
    %v1590 = vunpack.c.l.b16 %v1524
    %v1591 = vunpack.c.h.b16 %v1524
    %v1592 = vunpack.c.l.b16 %v1525
    %v1593 = vunpack.c.h.b16 %v1525
    %v1594 = vunpack.c.l.b16 %v1526
    %v1595 = vunpack.c.h.b16 %v1526
    %v1596 = vunpack.c.l.b16 %v1527
    %v1597 = vunpack.c.h.b16 %v1527
    %v1598 = vunpack.c.l.b16 %v1528
    %v1599 = vunpack.c.h.b16 %v1528
    %v1600 = vunpack.c.l.b16 %v1529
    %v1601 = vunpack.c.h.b16 %v1529
    %v1602 = vunpack.c.l.b16 %v1530
    %v1603 = vunpack.c.h.b16 %v1530
    %v1604 = vunpack.c.l.b16 %v1531
    %v1605 = vunpack.c.h.b16 %v1531
    %v1606 = vunpack.c.l.b16 %v1532
    %v1607 = vunpack.c.h.b16 %v1532
    %v1608 = vunpack.c.l.b16 %v1533
    %v1609 = vunpack.c.h.b16 %v1533
    %v1610 = vunpack.c.l.b16 %v1534
    %v1611 = vunpack.c.h.b16 %v1534
    %v1612 = vunpack.c.l.b16 %v1535
    %v1613 = vunpack.c.h.b16 %v1535
    %v1614 = vunpack.c.l.b16 %v1536
    %v1615 = vunpack.c.h.b16 %v1536
    %v1616 = vunpack.c.l.b16 %v1537
    %v1617 = vunpack.c.h.b16 %v1537
    %v1618 = vunpack.c.l.b16 %v1538
    %v1619 = vunpack.c.h.b16 %v1538
    %v1620 = vunpack.c.l.b16 %v1539
    %v1621 = vunpack.c.h.b16 %v1539
    %v1622 = vunpack.c.l.b16 %v1540
    %v1623 = vunpack.c.h.b16 %v1540
    %v1624 = vunpack.c.l.b16 %v1541
    %v1625 = vunpack.c.h.b16 %v1541
    %v1626 = vunpack.c.l.b16 %v1542
    %v1627 = vunpack.c.h.b16 %v1542
    %v1628 = vunpack.c.l.b16 %v1543
    %v1629 = vunpack.c.h.b16 %v1543
    %v1630 = vunpack.c.l.b16 %v1544
    %v1631 = vunpack.c.h.b16 %v1544
    %v1632 = vunpack.c.l.b16 %v1545
    %v1633 = vunpack.c.h.b16 %v1545
    %v1634 = vunpack.c.l.b16 %v1546
    %v1635 = vunpack.c.h.b16 %v1546
    %v1636 = vunpack.c.l.b16 %v1547
    %v1637 = vunpack.c.h.b16 %v1547
    %v1638 = vunpack.c.l.b16 %v1548
    %v1639 = vunpack.c.h.b16 %v1548
    %v1640 = vunpack.c.l.b16 %v1549
    %v1641 = vunpack.c.h.b16 %v1549
    %v1642 = vunpack.c.l.b16 %v1550
    %v1643 = vunpack.c.h.b16 %v1550
    %v1644 = vunpack.c.l.b16 %v1551
    %v1645 = vunpack.c.h.b16 %v1551
    %v1646 = vunpack.c.l.b16 %v1552
    %v1647 = vunpack.c.h.b16 %v1552
    %v1648 = vunpack.c.l.b16 %v1553
    %v1649 = vunpack.c.h.b16 %v1553
    %v1650 = vpack.c.b16 %v1590, %v1586
    %v1651 = vpack.c.b16 %v1591, %v1587
    %v1652 = vpack.c.b16 %v1592, %v1588
    %v1653 = vpack.c.b16 %v1593, %v1589
    %v1654 = vpack.c.b16 %v1598, %v1594
    %v1655 = vpack.c.b16 %v1599, %v1595
    %v1656 = vpack.c.b16 %v1600, %v1596
    %v1657 = vpack.c.b16 %v1601, %v1597
    %v1658 = vpack.c.b16 %v1606, %v1602
    %v1659 = vpack.c.b16 %v1607, %v1603
    %v1660 = vpack.c.b16 %v1608, %v1604
    %v1661 = vpack.c.b16 %v1609, %v1605
    %v1662 = vpack.c.b16 %v1614, %v1610
    %v1663 = vpack.c.b16 %v1615, %v1611
    %v1664 = vpack.c.b16 %v1616, %v1612
    %v1665 = vpack.c.b16 %v1617, %v1613
    %v1666 = vpack.c.b16 %v1622, %v1618
    %v1667 = vpack.c.b16 %v1623, %v1619
    %v1668 = vpack.c.b16 %v1624, %v1620
    %v1669 = vpack.c.b16 %v1625, %v1621
    %v1670 = vpack.c.b16 %v1630, %v1626
    %v1671 = vpack.c.b16 %v1631, %v1627
    %v1672 = vpack.c.b16 %v1632, %v1628
    %v1673 = vpack.c.b16 %v1633, %v1629
    %v1674 = vpack.c.b16 %v1638, %v1634
    %v1675 = vpack.c.b16 %v1639, %v1635
    %v1676 = vpack.c.b16 %v1640, %v1636
    %v1677 = vpack.c.b16 %v1641, %v1637
    %v1678 = vpack.c.b16 %v1646, %v1642
    %v1679 = vpack.c.b16 %v1647, %v1643
    %v1680 = vpack.c.b16 %v1648, %v1644
    %v1681 = vpack.c.b16 %v1649, %v1645
    %1714 = vmatpush.bf16.msra.mxu0 %v1132
    %1715 = vmatpush.bf16.msra.mxu0 %v1131
    %1716 = vmatpush.bf16.msra.mxu0 %v1130
    %1717 = vmatpush.bf16.msra.mxu0 %v1129
    %1718 = vmatpush.bf16.msra.mxu0 %v1128
    %1719 = vmatpush.bf16.msra.mxu0 %v1127
    %1720 = vmatpush.bf16.msra.mxu0 %v1126
    %1721 = vmatpush.bf16.msra.mxu0 %v1125
    %1722 = vmatmul.bf16.gmra.mxu0 %v1650
    %v1723 = vpop.f32.mrf.mxu0
    %v1724 = vadd.f32 0.0, %v1723
    %v1725 = vpop.f32.mrf.mxu0
    %v1726 = vadd.f32 0.0, %v1725
    %1727 = vmatmul.bf16.gmra.mxu0 %v1654
    %v1728 = vpop.f32.mrf.mxu0
    %v1729 = vadd.f32 0.0, %v1728
    %v1730 = vpop.f32.mrf.mxu0
    %v1731 = vadd.f32 0.0, %v1730
    %1732 = vmatmul.bf16.gmra.mxu0 %v1658
    %v1733 = vpop.f32.mrf.mxu0
    %v1734 = vadd.f32 0.0, %v1733
    %v1735 = vpop.f32.mrf.mxu0
    %v1736 = vadd.f32 0.0, %v1735
    %1737 = vmatmul.bf16.gmra.mxu0 %v1662
    %v1738 = vpop.f32.mrf.mxu0
    %v1739 = vadd.f32 0.0, %v1738
    %v1740 = vpop.f32.mrf.mxu0
    %v1741 = vadd.f32 0.0, %v1740
    %1742 = vmatmul.bf16.gmra.mxu0 %v1666
    %v1743 = vpop.f32.mrf.mxu0
    %v1744 = vadd.f32 0.0, %v1743
    %v1745 = vpop.f32.mrf.mxu0
    %v1746 = vadd.f32 0.0, %v1745
    %1747 = vmatmul.bf16.gmra.mxu0 %v1670
    %v1748 = vpop.f32.mrf.mxu0
    %v1749 = vadd.f32 0.0, %v1748
    %v1750 = vpop.f32.mrf.mxu0
    %v1751 = vadd.f32 0.0, %v1750
    %1752 = vmatmul.bf16.gmra.mxu0 %v1674
    %v1753 = vpop.f32.mrf.mxu0
    %v1754 = vadd.f32 0.0, %v1753
    %v1755 = vpop.f32.mrf.mxu0
    %v1756 = vadd.f32 0.0, %v1755
    %1757 = vmatmul.bf16.gmra.mxu0 %v1678
    %v1758 = vpop.f32.mrf.mxu0
    %v1759 = vadd.f32 0.0, %v1758
    %v1760 = vpop.f32.mrf.mxu0
    %v1761 = vadd.f32 0.0, %v1760
    %1762 = vdwg.mxu0
    %1763 = vmatpush.bf16.msra.mxu0 %v1140
    %1764 = vmatpush.bf16.msra.mxu0 %v1139
    %1765 = vmatpush.bf16.msra.mxu0 %v1138
    %1766 = vmatpush.bf16.msra.mxu0 %v1137
    %1767 = vmatpush.bf16.msra.mxu0 %v1136
    %1768 = vmatpush.bf16.msra.mxu0 %v1135
    %1769 = vmatpush.bf16.msra.mxu0 %v1134
    %1770 = vmatpush.bf16.msra.mxu0 %v1133
    %1771 = vmatmul.bf16.gmra.mxu0 %v1651
    %v1772 = vpop.f32.mrf.mxu0
    %v1773 = vadd.f32 %v1724, %v1772
    %v1774 = vpop.f32.mrf.mxu0
    %v1775 = vadd.f32 %v1726, %v1774
    %1776 = vmatmul.bf16.gmra.mxu0 %v1655
    %v1777 = vpop.f32.mrf.mxu0
    %v1778 = vadd.f32 %v1729, %v1777
    %v1779 = vpop.f32.mrf.mxu0
    %v1780 = vadd.f32 %v1731, %v1779
    %1781 = vmatmul.bf16.gmra.mxu0 %v1659
    %v1782 = vpop.f32.mrf.mxu0
    %v1783 = vadd.f32 %v1734, %v1782
    %v1784 = vpop.f32.mrf.mxu0
    %v1785 = vadd.f32 %v1736, %v1784
    %1786 = vmatmul.bf16.gmra.mxu0 %v1663
    %v1787 = vpop.f32.mrf.mxu0
    %v1788 = vadd.f32 %v1739, %v1787
    %v1789 = vpop.f32.mrf.mxu0
    %v1790 = vadd.f32 %v1741, %v1789
    %1791 = vmatmul.bf16.gmra.mxu0 %v1667
    %v1792 = vpop.f32.mrf.mxu0
    %v1793 = vadd.f32 %v1744, %v1792
    %v1794 = vpop.f32.mrf.mxu0
    %v1795 = vadd.f32 %v1746, %v1794
    %1796 = vmatmul.bf16.gmra.mxu0 %v1671
    %v1797 = vpop.f32.mrf.mxu0
    %v1798 = vadd.f32 %v1749, %v1797
    %v1799 = vpop.f32.mrf.mxu0
    %v1800 = vadd.f32 %v1751, %v1799
    %1801 = vmatmul.bf16.gmra.mxu0 %v1675
    %v1802 = vpop.f32.mrf.mxu0
    %v1803 = vadd.f32 %v1754, %v1802
    %v1804 = vpop.f32.mrf.mxu0
    %v1805 = vadd.f32 %v1756, %v1804
    %1806 = vmatmul.bf16.gmra.mxu0 %v1679
    %v1807 = vpop.f32.mrf.mxu0
    %v1808 = vadd.f32 %v1759, %v1807
    %v1809 = vpop.f32.mrf.mxu0
    %v1810 = vadd.f32 %v1761, %v1809
    %1811 = vdwg.mxu0
    %1812 = vmatpush.bf16.msra.mxu0 %v1148
    %1813 = vmatpush.bf16.msra.mxu0 %v1147
    %1814 = vmatpush.bf16.msra.mxu0 %v1146
    %1815 = vmatpush.bf16.msra.mxu0 %v1145
    %1816 = vmatpush.bf16.msra.mxu0 %v1144
    %1817 = vmatpush.bf16.msra.mxu0 %v1143
    %1818 = vmatpush.bf16.msra.mxu0 %v1142
    %1819 = vmatpush.bf16.msra.mxu0 %v1141
    %1820 = vmatmul.bf16.gmra.mxu0 %v1652
    %v1821 = vpop.f32.mrf.mxu0
    %v1822 = vadd.f32 %v1773, %v1821
    %v1823 = vpop.f32.mrf.mxu0
    %v1824 = vadd.f32 %v1775, %v1823
    %1825 = vmatmul.bf16.gmra.mxu0 %v1656
    %v1826 = vpop.f32.mrf.mxu0
    %v1827 = vadd.f32 %v1778, %v1826
    %v1828 = vpop.f32.mrf.mxu0
    %v1829 = vadd.f32 %v1780, %v1828
    %1830 = vmatmul.bf16.gmra.mxu0 %v1660
    %v1831 = vpop.f32.mrf.mxu0
    %v1832 = vadd.f32 %v1783, %v1831
    %v1833 = vpop.f32.mrf.mxu0
    %v1834 = vadd.f32 %v1785, %v1833
    %1835 = vmatmul.bf16.gmra.mxu0 %v1664
    %v1836 = vpop.f32.mrf.mxu0
    %v1837 = vadd.f32 %v1788, %v1836
    %v1838 = vpop.f32.mrf.mxu0
    %v1839 = vadd.f32 %v1790, %v1838
    %1840 = vmatmul.bf16.gmra.mxu0 %v1668
    %v1841 = vpop.f32.mrf.mxu0
    %v1842 = vadd.f32 %v1793, %v1841
    %v1843 = vpop.f32.mrf.mxu0
    %v1844 = vadd.f32 %v1795, %v1843
    %1845 = vmatmul.bf16.gmra.mxu0 %v1672
    %v1846 = vpop.f32.mrf.mxu0
    %v1847 = vadd.f32 %v1798, %v1846
    %v1848 = vpop.f32.mrf.mxu0
    %v1849 = vadd.f32 %v1800, %v1848
    %1850 = vmatmul.bf16.gmra.mxu0 %v1676
    %v1851 = vpop.f32.mrf.mxu0
    %v1852 = vadd.f32 %v1803, %v1851
    %v1853 = vpop.f32.mrf.mxu0
    %v1854 = vadd.f32 %v1805, %v1853
    %1855 = vmatmul.bf16.gmra.mxu0 %v1680
    %v1856 = vpop.f32.mrf.mxu0
    %v1857 = vadd.f32 %v1808, %v1856
    %v1858 = vpop.f32.mrf.mxu0
    %v1859 = vadd.f32 %v1810, %v1858
    %1860 = vdwg.mxu0
    %1861 = vmatpush.bf16.msra.mxu0 %v1156
    %1862 = vmatpush.bf16.msra.mxu0 %v1155
    %1863 = vmatpush.bf16.msra.mxu0 %v1154
    %1864 = vmatpush.bf16.msra.mxu0 %v1153
    %1865 = vmatpush.bf16.msra.mxu0 %v1152
    %1866 = vmatpush.bf16.msra.mxu0 %v1151
    %1867 = vmatpush.bf16.msra.mxu0 %v1150
    %1868 = vmatpush.bf16.msra.mxu0 %v1149
    %1869 = vmatmul.bf16.gmra.mxu0 %v1653
    %v1870 = vpop.f32.mrf.mxu0
    %v1871 = vadd.f32 %v1822, %v1870
    %v1872 = vpop.f32.mrf.mxu0
    %v1873 = vadd.f32 %v1824, %v1872
    %1874 = vmatmul.bf16.gmra.mxu0 %v1657
    %v1875 = vpop.f32.mrf.mxu0
    %v1876 = vadd.f32 %v1827, %v1875
    %v1877 = vpop.f32.mrf.mxu0
    %v1878 = vadd.f32 %v1829, %v1877
    %1879 = vmatmul.bf16.gmra.mxu0 %v1661
    %v1880 = vpop.f32.mrf.mxu0
    %v1881 = vadd.f32 %v1832, %v1880
    %v1882 = vpop.f32.mrf.mxu0
    %v1883 = vadd.f32 %v1834, %v1882
    %1884 = vmatmul.bf16.gmra.mxu0 %v1665
    %v1885 = vpop.f32.mrf.mxu0
    %v1886 = vadd.f32 %v1837, %v1885
    %v1887 = vpop.f32.mrf.mxu0
    %v1888 = vadd.f32 %v1839, %v1887
    %1889 = vmatmul.bf16.gmra.mxu0 %v1669
    %v1890 = vpop.f32.mrf.mxu0
    %v1891 = vadd.f32 %v1842, %v1890
    %v1892 = vpop.f32.mrf.mxu0
    %v1893 = vadd.f32 %v1844, %v1892
    %1894 = vmatmul.bf16.gmra.mxu0 %v1673
    %v1895 = vpop.f32.mrf.mxu0
    %v1896 = vadd.f32 %v1847, %v1895
    %v1897 = vpop.f32.mrf.mxu0
    %v1898 = vadd.f32 %v1849, %v1897
    %1899 = vmatmul.bf16.gmra.mxu0 %v1677
    %v1900 = vpop.f32.mrf.mxu0
    %v1901 = vadd.f32 %v1852, %v1900
    %v1902 = vpop.f32.mrf.mxu0
    %v1903 = vadd.f32 %v1854, %v1902
    %1904 = vmatmul.bf16.gmra.mxu0 %v1681
    %v1905 = vpop.f32.mrf.mxu0
    %v1906 = vadd.f32 %v1857, %v1905
    %v1907 = vpop.f32.mrf.mxu0
    %v1908 = vadd.f32 %v1859, %v1907
    %1909 = vdwg.mxu0
    %v1910 = vpack.c.bf16 %v1873, %v1871
    %v1911 = vpack.c.bf16 %v1878, %v1876
    %v1912 = vpack.c.bf16 %v1883, %v1881
    %v1913 = vpack.c.bf16 %v1888, %v1886
    %v1914 = vpack.c.bf16 %v1893, %v1891
    %v1915 = vpack.c.bf16 %v1898, %v1896
    %v1916 = vpack.c.bf16 %v1903, %v1901
    %v1917 = vpack.c.bf16 %v1908, %v1906
    %v1920 = vunpack.c.l.b16 %v1087
    %v1921 = vunpack.c.l.b16 %v1088
    %v1922 = vpack.c.b16 %v1921, %v1920
    %v1925 = vsel %vm691, %v1910, 0
    %v1928 = vsel %vm691, %v1911, 0
    %v1931 = vsel %vm691, %v1912, 0
    %v1934 = vsel %vm691, %v1913, 0
    %v1937 = vsel %vm691, %v1914, 0
    %v1940 = vsel %vm691, %v1915, 0
    %v1943 = vsel %vm691, %v1916, 0
    %v1946 = vsel %vm691, %v1917, 0
    %1948 = vmatpush.bf16.msra.mxu0 0
    %1949 = vmatpush.bf16.msra.mxu0 0
    %1950 = vmatpush.bf16.msra.mxu0 0
    %1951 = vmatpush.bf16.msra.mxu0 0
    %1952 = vmatpush.bf16.msra.mxu0 0
    %1953 = vmatpush.bf16.msra.mxu0 0
    %1954 = vmatpush.bf16.msra.mxu0 0
    %1955 = vmatpush.bf16.msra.mxu0 %v1922
    %1956 = vmatmul.bf16.gmra.mxu0 %v1925
    %v1957 = vpop.f32.mrf.mxu0
    %v1958 = vadd.f32 0.0, %v1957
    %v1959 = vpop.f32.mrf.mxu0
    %v1960 = vadd.f32 0.0, %v1959
    %1961 = vmatmul.bf16.gmra.mxu0 %v1928
    %v1962 = vpop.f32.mrf.mxu0
    %v1963 = vadd.f32 0.0, %v1962
    %v1964 = vpop.f32.mrf.mxu0
    %v1965 = vadd.f32 0.0, %v1964
    %1966 = vmatmul.bf16.gmra.mxu0 %v1931
    %v1967 = vpop.f32.mrf.mxu0
    %v1968 = vadd.f32 0.0, %v1967
    %v1969 = vpop.f32.mrf.mxu0
    %v1970 = vadd.f32 0.0, %v1969
    %1971 = vmatmul.bf16.gmra.mxu0 %v1934
    %v1972 = vpop.f32.mrf.mxu0
    %v1973 = vadd.f32 0.0, %v1972
    %v1974 = vpop.f32.mrf.mxu0
    %v1975 = vadd.f32 0.0, %v1974
    %1976 = vmatmul.bf16.gmra.mxu0 %v1937
    %v1977 = vpop.f32.mrf.mxu0
    %v1978 = vadd.f32 0.0, %v1977
    %v1979 = vpop.f32.mrf.mxu0
    %v1980 = vadd.f32 0.0, %v1979
    %1981 = vmatmul.bf16.gmra.mxu0 %v1940
    %v1982 = vpop.f32.mrf.mxu0
    %v1983 = vadd.f32 0.0, %v1982
    %v1984 = vpop.f32.mrf.mxu0
    %v1985 = vadd.f32 0.0, %v1984
    %1986 = vmatmul.bf16.gmra.mxu0 %v1943
    %v1987 = vpop.f32.mrf.mxu0
    %v1988 = vadd.f32 0.0, %v1987
    %v1989 = vpop.f32.mrf.mxu0
    %v1990 = vadd.f32 0.0, %v1989
    %1991 = vmatmul.bf16.gmra.mxu0 %v1946
    %v1992 = vpop.f32.mrf.mxu0
    %v1993 = vadd.f32 0.0, %v1992
    %v1994 = vpop.f32.mrf.mxu0
    %v1995 = vadd.f32 0.0, %v1994
    %1996 = vdwg.mxu0
    %v1999 = vunpack.c.l.b16 %v1085
    %v2000 = vunpack.c.l.b16 %v1086
    %v2001 = vpack.c.b16 %v2000, %v1999
    %v2004 = vsel %vm691, %v1513, 0
    %v2007 = vsel %vm691, %v1514, 0
    %v2010 = vsel %vm691, %v1515, 0
    %v2013 = vsel %vm691, %v1516, 0
    %v2016 = vsel %vm691, %v1517, 0
    %v2019 = vsel %vm691, %v1518, 0
    %v2022 = vsel %vm691, %v1519, 0
    %v2025 = vsel %vm691, %v1520, 0
    %2027 = vmatpush.bf16.msra.mxu0 0
    %2028 = vmatpush.bf16.msra.mxu0 0
    %2029 = vmatpush.bf16.msra.mxu0 0
    %2030 = vmatpush.bf16.msra.mxu0 0
    %2031 = vmatpush.bf16.msra.mxu0 0
    %2032 = vmatpush.bf16.msra.mxu0 0
    %2033 = vmatpush.bf16.msra.mxu0 0
    %2034 = vmatpush.bf16.msra.mxu0 %v2001
    %2035 = vmatmul.bf16.gmra.mxu0 %v2004
    %v2036 = vpop.f32.mrf.mxu0
    %v2037 = vadd.f32 %v1958, %v2036
    %v2038 = vpop.f32.mrf.mxu0
    %v2039 = vadd.f32 %v1960, %v2038
    %2040 = vmatmul.bf16.gmra.mxu0 %v2007
    %v2041 = vpop.f32.mrf.mxu0
    %v2042 = vadd.f32 %v1963, %v2041
    %v2043 = vpop.f32.mrf.mxu0
    %v2044 = vadd.f32 %v1965, %v2043
    %2045 = vmatmul.bf16.gmra.mxu0 %v2010
    %v2046 = vpop.f32.mrf.mxu0
    %v2047 = vadd.f32 %v1968, %v2046
    %v2048 = vpop.f32.mrf.mxu0
    %v2049 = vadd.f32 %v1970, %v2048
    %2050 = vmatmul.bf16.gmra.mxu0 %v2013
    %v2051 = vpop.f32.mrf.mxu0
    %v2052 = vadd.f32 %v1973, %v2051
    %v2053 = vpop.f32.mrf.mxu0
    %v2054 = vadd.f32 %v1975, %v2053
    %2055 = vmatmul.bf16.gmra.mxu0 %v2016
    %v2056 = vpop.f32.mrf.mxu0
    %v2057 = vadd.f32 %v1978, %v2056
    %v2058 = vpop.f32.mrf.mxu0
    %v2059 = vadd.f32 %v1980, %v2058
    %2060 = vmatmul.bf16.gmra.mxu0 %v2019
    %v2061 = vpop.f32.mrf.mxu0
    %v2062 = vadd.f32 %v1983, %v2061
    %v2063 = vpop.f32.mrf.mxu0
    %v2064 = vadd.f32 %v1985, %v2063
    %2065 = vmatmul.bf16.gmra.mxu0 %v2022
    %v2066 = vpop.f32.mrf.mxu0
    %v2067 = vadd.f32 %v1988, %v2066
    %v2068 = vpop.f32.mrf.mxu0
    %v2069 = vadd.f32 %v1990, %v2068
    %2070 = vmatmul.bf16.gmra.mxu0 %v2025
    %v2071 = vpop.f32.mrf.mxu0
    %v2072 = vadd.f32 %v1993, %v2071
    %v2073 = vpop.f32.mrf.mxu0
    %v2074 = vadd.f32 %v1995, %v2073
    %2075 = vdwg.mxu0
    %s2076 = scalar_lea.vmem %s1, 512
    %v2077 = vld [vmem:[%s2076] sm:$0xff]
    %v2078 = vld [vmem:[%s2076 + $0x8] sm:$0xff]
    %v2079 = vld [vmem:[%s2076 + $0x10] sm:$0xff]
    %v2080 = vld [vmem:[%s2076 + $0x18] sm:$0xff]
    %v2081 = vld [vmem:[%s2076 + $0x20] sm:$0xff]
    %v2082 = vld [vmem:[%s2076 + $0x28] sm:$0xff]
    %v2083 = vld [vmem:[%s2076 + $0x30] sm:$0xff]
    %v2084 = vld [vmem:[%s2076 + $0x38] sm:$0xff]
    %v2085 = vld [vmem:[%s2076 + $0x40] sm:$0xff]
    %v2086 = vld [vmem:[%s2076 + $0x48] sm:$0xff]
    %v2087 = vld [vmem:[%s2076 + $0x50] sm:$0xff]
    %v2088 = vld [vmem:[%s2076 + $0x58] sm:$0xff]
    %v2089 = vld [vmem:[%s2076 + $0x60] sm:$0xff]
    %v2090 = vld [vmem:[%s2076 + $0x68] sm:$0xff]
    %v2091 = vld [vmem:[%s2076 + $0x70] sm:$0xff]
    %v2092 = vld [vmem:[%s2076 + $0x78] sm:$0xff]
    %v2093 = vld [vmem:[%s2076 + $0x80] sm:$0xff]
    %v2094 = vld [vmem:[%s2076 + $0x88] sm:$0xff]
    %v2095 = vld [vmem:[%s2076 + $0x90] sm:$0xff]
    %v2096 = vld [vmem:[%s2076 + $0x98] sm:$0xff]
    %v2097 = vld [vmem:[%s2076 + $0xa0] sm:$0xff]
    %v2098 = vld [vmem:[%s2076 + $0xa8] sm:$0xff]
    %v2099 = vld [vmem:[%s2076 + $0xb0] sm:$0xff]
    %v2100 = vld [vmem:[%s2076 + $0xb8] sm:$0xff]
    %v2101 = vld [vmem:[%s2076 + $0xc0] sm:$0xff]
    %v2102 = vld [vmem:[%s2076 + $0xc8] sm:$0xff]
    %v2103 = vld [vmem:[%s2076 + $0xd0] sm:$0xff]
    %v2104 = vld [vmem:[%s2076 + $0xd8] sm:$0xff]
    %v2105 = vld [vmem:[%s2076 + $0xe0] sm:$0xff]
    %v2106 = vld [vmem:[%s2076 + $0xe8] sm:$0xff]
    %v2107 = vld [vmem:[%s2076 + $0xf0] sm:$0xff]
    %v2108 = vld [vmem:[%s2076 + $0xf8] sm:$0xff]
    %v2141 = vunpack.c.l.b16 %v2077
    %v2142 = vunpack.c.h.b16 %v2077
    %v2143 = vunpack.c.l.b16 %v2078
    %v2144 = vunpack.c.h.b16 %v2078
    %v2145 = vunpack.c.l.b16 %v2079
    %v2146 = vunpack.c.h.b16 %v2079
    %v2147 = vunpack.c.l.b16 %v2080
    %v2148 = vunpack.c.h.b16 %v2080
    %v2149 = vunpack.c.l.b16 %v2081
    %v2150 = vunpack.c.h.b16 %v2081
    %v2151 = vunpack.c.l.b16 %v2082
    %v2152 = vunpack.c.h.b16 %v2082
    %v2153 = vunpack.c.l.b16 %v2083
    %v2154 = vunpack.c.h.b16 %v2083
    %v2155 = vunpack.c.l.b16 %v2084
    %v2156 = vunpack.c.h.b16 %v2084
    %v2157 = vunpack.c.l.b16 %v2085
    %v2158 = vunpack.c.h.b16 %v2085
    %v2159 = vunpack.c.l.b16 %v2086
    %v2160 = vunpack.c.h.b16 %v2086
    %v2161 = vunpack.c.l.b16 %v2087
    %v2162 = vunpack.c.h.b16 %v2087
    %v2163 = vunpack.c.l.b16 %v2088
    %v2164 = vunpack.c.h.b16 %v2088
    %v2165 = vunpack.c.l.b16 %v2089
    %v2166 = vunpack.c.h.b16 %v2089
    %v2167 = vunpack.c.l.b16 %v2090
    %v2168 = vunpack.c.h.b16 %v2090
    %v2169 = vunpack.c.l.b16 %v2091
    %v2170 = vunpack.c.h.b16 %v2091
    %v2171 = vunpack.c.l.b16 %v2092
    %v2172 = vunpack.c.h.b16 %v2092
    %v2173 = vunpack.c.l.b16 %v2093
    %v2174 = vunpack.c.h.b16 %v2093
    %v2175 = vunpack.c.l.b16 %v2094
    %v2176 = vunpack.c.h.b16 %v2094
    %v2177 = vunpack.c.l.b16 %v2095
    %v2178 = vunpack.c.h.b16 %v2095
    %v2179 = vunpack.c.l.b16 %v2096
    %v2180 = vunpack.c.h.b16 %v2096
    %v2181 = vunpack.c.l.b16 %v2097
    %v2182 = vunpack.c.h.b16 %v2097
    %v2183 = vunpack.c.l.b16 %v2098
    %v2184 = vunpack.c.h.b16 %v2098
    %v2185 = vunpack.c.l.b16 %v2099
    %v2186 = vunpack.c.h.b16 %v2099
    %v2187 = vunpack.c.l.b16 %v2100
    %v2188 = vunpack.c.h.b16 %v2100
    %v2189 = vunpack.c.l.b16 %v2101
    %v2190 = vunpack.c.h.b16 %v2101
    %v2191 = vunpack.c.l.b16 %v2102
    %v2192 = vunpack.c.h.b16 %v2102
    %v2193 = vunpack.c.l.b16 %v2103
    %v2194 = vunpack.c.h.b16 %v2103
    %v2195 = vunpack.c.l.b16 %v2104
    %v2196 = vunpack.c.h.b16 %v2104
    %v2197 = vunpack.c.l.b16 %v2105
    %v2198 = vunpack.c.h.b16 %v2105
    %v2199 = vunpack.c.l.b16 %v2106
    %v2200 = vunpack.c.h.b16 %v2106
    %v2201 = vunpack.c.l.b16 %v2107
    %v2202 = vunpack.c.h.b16 %v2107
    %v2203 = vunpack.c.l.b16 %v2108
    %v2204 = vunpack.c.h.b16 %v2108
    %v2205 = vpack.c.b16 %v2145, %v2141
    %v2206 = vpack.c.b16 %v2146, %v2142
    %v2207 = vpack.c.b16 %v2147, %v2143
    %v2208 = vpack.c.b16 %v2148, %v2144
    %v2209 = vpack.c.b16 %v2153, %v2149
    %v2210 = vpack.c.b16 %v2154, %v2150
    %v2211 = vpack.c.b16 %v2155, %v2151
    %v2212 = vpack.c.b16 %v2156, %v2152
    %v2213 = vpack.c.b16 %v2161, %v2157
    %v2214 = vpack.c.b16 %v2162, %v2158
    %v2215 = vpack.c.b16 %v2163, %v2159
    %v2216 = vpack.c.b16 %v2164, %v2160
    %v2217 = vpack.c.b16 %v2169, %v2165
    %v2218 = vpack.c.b16 %v2170, %v2166
    %v2219 = vpack.c.b16 %v2171, %v2167
    %v2220 = vpack.c.b16 %v2172, %v2168
    %v2221 = vpack.c.b16 %v2177, %v2173
    %v2222 = vpack.c.b16 %v2178, %v2174
    %v2223 = vpack.c.b16 %v2179, %v2175
    %v2224 = vpack.c.b16 %v2180, %v2176
    %v2225 = vpack.c.b16 %v2185, %v2181
    %v2226 = vpack.c.b16 %v2186, %v2182
    %v2227 = vpack.c.b16 %v2187, %v2183
    %v2228 = vpack.c.b16 %v2188, %v2184
    %v2229 = vpack.c.b16 %v2193, %v2189
    %v2230 = vpack.c.b16 %v2194, %v2190
    %v2231 = vpack.c.b16 %v2195, %v2191
    %v2232 = vpack.c.b16 %v2196, %v2192
    %v2233 = vpack.c.b16 %v2201, %v2197
    %v2234 = vpack.c.b16 %v2202, %v2198
    %v2235 = vpack.c.b16 %v2203, %v2199
    %v2236 = vpack.c.b16 %v2204, %v2200
    %2269 = vmatpush.bf16.msra.mxu0 %v1132
    %2270 = vmatpush.bf16.msra.mxu0 %v1131
    %2271 = vmatpush.bf16.msra.mxu0 %v1130
    %2272 = vmatpush.bf16.msra.mxu0 %v1129
    %2273 = vmatpush.bf16.msra.mxu0 %v1128
    %2274 = vmatpush.bf16.msra.mxu0 %v1127
    %2275 = vmatpush.bf16.msra.mxu0 %v1126
    %2276 = vmatpush.bf16.msra.mxu0 %v1125
    %2277 = vmatmul.bf16.gmra.mxu0 %v2205
    %v2278 = vpop.f32.mrf.mxu0
    %v2279 = vadd.f32 0.0, %v2278
    %v2280 = vpop.f32.mrf.mxu0
    %v2281 = vadd.f32 0.0, %v2280
    %2282 = vmatmul.bf16.gmra.mxu0 %v2209
    %v2283 = vpop.f32.mrf.mxu0
    %v2284 = vadd.f32 0.0, %v2283
    %v2285 = vpop.f32.mrf.mxu0
    %v2286 = vadd.f32 0.0, %v2285
    %2287 = vmatmul.bf16.gmra.mxu0 %v2213
    %v2288 = vpop.f32.mrf.mxu0
    %v2289 = vadd.f32 0.0, %v2288
    %v2290 = vpop.f32.mrf.mxu0
    %v2291 = vadd.f32 0.0, %v2290
    %2292 = vmatmul.bf16.gmra.mxu0 %v2217
    %v2293 = vpop.f32.mrf.mxu0
    %v2294 = vadd.f32 0.0, %v2293
    %v2295 = vpop.f32.mrf.mxu0
    %v2296 = vadd.f32 0.0, %v2295
    %2297 = vmatmul.bf16.gmra.mxu0 %v2221
    %v2298 = vpop.f32.mrf.mxu0
    %v2299 = vadd.f32 0.0, %v2298
    %v2300 = vpop.f32.mrf.mxu0
    %v2301 = vadd.f32 0.0, %v2300
    %2302 = vmatmul.bf16.gmra.mxu0 %v2225
    %v2303 = vpop.f32.mrf.mxu0
    %v2304 = vadd.f32 0.0, %v2303
    %v2305 = vpop.f32.mrf.mxu0
    %v2306 = vadd.f32 0.0, %v2305
    %2307 = vmatmul.bf16.gmra.mxu0 %v2229
    %v2308 = vpop.f32.mrf.mxu0
    %v2309 = vadd.f32 0.0, %v2308
    %v2310 = vpop.f32.mrf.mxu0
    %v2311 = vadd.f32 0.0, %v2310
    %2312 = vmatmul.bf16.gmra.mxu0 %v2233
    %v2313 = vpop.f32.mrf.mxu0
    %v2314 = vadd.f32 0.0, %v2313
    %v2315 = vpop.f32.mrf.mxu0
    %v2316 = vadd.f32 0.0, %v2315
    %2317 = vdwg.mxu0
    %2318 = vmatpush.bf16.msra.mxu0 %v1140
    %2319 = vmatpush.bf16.msra.mxu0 %v1139
    %2320 = vmatpush.bf16.msra.mxu0 %v1138
    %2321 = vmatpush.bf16.msra.mxu0 %v1137
    %2322 = vmatpush.bf16.msra.mxu0 %v1136
    %2323 = vmatpush.bf16.msra.mxu0 %v1135
    %2324 = vmatpush.bf16.msra.mxu0 %v1134
    %2325 = vmatpush.bf16.msra.mxu0 %v1133
    %2326 = vmatmul.bf16.gmra.mxu0 %v2206
    %v2327 = vpop.f32.mrf.mxu0
    %v2328 = vadd.f32 %v2279, %v2327
    %v2329 = vpop.f32.mrf.mxu0
    %v2330 = vadd.f32 %v2281, %v2329
    %2331 = vmatmul.bf16.gmra.mxu0 %v2210
    %v2332 = vpop.f32.mrf.mxu0
    %v2333 = vadd.f32 %v2284, %v2332
    %v2334 = vpop.f32.mrf.mxu0
    %v2335 = vadd.f32 %v2286, %v2334
    %2336 = vmatmul.bf16.gmra.mxu0 %v2214
    %v2337 = vpop.f32.mrf.mxu0
    %v2338 = vadd.f32 %v2289, %v2337
    %v2339 = vpop.f32.mrf.mxu0
    %v2340 = vadd.f32 %v2291, %v2339
    %2341 = vmatmul.bf16.gmra.mxu0 %v2218
    %v2342 = vpop.f32.mrf.mxu0
    %v2343 = vadd.f32 %v2294, %v2342
    %v2344 = vpop.f32.mrf.mxu0
    %v2345 = vadd.f32 %v2296, %v2344
    %2346 = vmatmul.bf16.gmra.mxu0 %v2222
    %v2347 = vpop.f32.mrf.mxu0
    %v2348 = vadd.f32 %v2299, %v2347
    %v2349 = vpop.f32.mrf.mxu0
    %v2350 = vadd.f32 %v2301, %v2349
    %2351 = vmatmul.bf16.gmra.mxu0 %v2226
    %v2352 = vpop.f32.mrf.mxu0
    %v2353 = vadd.f32 %v2304, %v2352
    %v2354 = vpop.f32.mrf.mxu0
    %v2355 = vadd.f32 %v2306, %v2354
    %2356 = vmatmul.bf16.gmra.mxu0 %v2230
    %v2357 = vpop.f32.mrf.mxu0
    %v2358 = vadd.f32 %v2309, %v2357
    %v2359 = vpop.f32.mrf.mxu0
    %v2360 = vadd.f32 %v2311, %v2359
    %2361 = vmatmul.bf16.gmra.mxu0 %v2234
    %v2362 = vpop.f32.mrf.mxu0
    %v2363 = vadd.f32 %v2314, %v2362
    %v2364 = vpop.f32.mrf.mxu0
    %v2365 = vadd.f32 %v2316, %v2364
    %2366 = vdwg.mxu0
    %2367 = vmatpush.bf16.msra.mxu0 %v1148
    %2368 = vmatpush.bf16.msra.mxu0 %v1147
    %2369 = vmatpush.bf16.msra.mxu0 %v1146
    %2370 = vmatpush.bf16.msra.mxu0 %v1145
    %2371 = vmatpush.bf16.msra.mxu0 %v1144
    %2372 = vmatpush.bf16.msra.mxu0 %v1143
    %2373 = vmatpush.bf16.msra.mxu0 %v1142
    %2374 = vmatpush.bf16.msra.mxu0 %v1141
    %2375 = vmatmul.bf16.gmra.mxu0 %v2207
    %v2376 = vpop.f32.mrf.mxu0
    %v2377 = vadd.f32 %v2328, %v2376
    %v2378 = vpop.f32.mrf.mxu0
    %v2379 = vadd.f32 %v2330, %v2378
    %2380 = vmatmul.bf16.gmra.mxu0 %v2211
    %v2381 = vpop.f32.mrf.mxu0
    %v2382 = vadd.f32 %v2333, %v2381
    %v2383 = vpop.f32.mrf.mxu0
    %v2384 = vadd.f32 %v2335, %v2383
    %2385 = vmatmul.bf16.gmra.mxu0 %v2215
    %v2386 = vpop.f32.mrf.mxu0
    %v2387 = vadd.f32 %v2338, %v2386
    %v2388 = vpop.f32.mrf.mxu0
    %v2389 = vadd.f32 %v2340, %v2388
    %2390 = vmatmul.bf16.gmra.mxu0 %v2219
    %v2391 = vpop.f32.mrf.mxu0
    %v2392 = vadd.f32 %v2343, %v2391
    %v2393 = vpop.f32.mrf.mxu0
    %v2394 = vadd.f32 %v2345, %v2393
    %2395 = vmatmul.bf16.gmra.mxu0 %v2223
    %v2396 = vpop.f32.mrf.mxu0
    %v2397 = vadd.f32 %v2348, %v2396
    %v2398 = vpop.f32.mrf.mxu0
    %v2399 = vadd.f32 %v2350, %v2398
    %2400 = vmatmul.bf16.gmra.mxu0 %v2227
    %v2401 = vpop.f32.mrf.mxu0
    %v2402 = vadd.f32 %v2353, %v2401
    %v2403 = vpop.f32.mrf.mxu0
    %v2404 = vadd.f32 %v2355, %v2403
    %2405 = vmatmul.bf16.gmra.mxu0 %v2231
    %v2406 = vpop.f32.mrf.mxu0
    %v2407 = vadd.f32 %v2358, %v2406
    %v2408 = vpop.f32.mrf.mxu0
    %v2409 = vadd.f32 %v2360, %v2408
    %2410 = vmatmul.bf16.gmra.mxu0 %v2235
    %v2411 = vpop.f32.mrf.mxu0
    %v2412 = vadd.f32 %v2363, %v2411
    %v2413 = vpop.f32.mrf.mxu0
    %v2414 = vadd.f32 %v2365, %v2413
    %2415 = vdwg.mxu0
    %2416 = vmatpush.bf16.msra.mxu0 %v1156
    %2417 = vmatpush.bf16.msra.mxu0 %v1155
    %2418 = vmatpush.bf16.msra.mxu0 %v1154
    %2419 = vmatpush.bf16.msra.mxu0 %v1153
    %2420 = vmatpush.bf16.msra.mxu0 %v1152
    %2421 = vmatpush.bf16.msra.mxu0 %v1151
    %2422 = vmatpush.bf16.msra.mxu0 %v1150
    %2423 = vmatpush.bf16.msra.mxu0 %v1149
    %2424 = vmatmul.bf16.gmra.mxu0 %v2208
    %v2425 = vpop.f32.mrf.mxu0
    %v2426 = vadd.f32 %v2377, %v2425
    %v2427 = vpop.f32.mrf.mxu0
    %v2428 = vadd.f32 %v2379, %v2427
    %2429 = vmatmul.bf16.gmra.mxu0 %v2212
    %v2430 = vpop.f32.mrf.mxu0
    %v2431 = vadd.f32 %v2382, %v2430
    %v2432 = vpop.f32.mrf.mxu0
    %v2433 = vadd.f32 %v2384, %v2432
    %2434 = vmatmul.bf16.gmra.mxu0 %v2216
    %v2435 = vpop.f32.mrf.mxu0
    %v2436 = vadd.f32 %v2387, %v2435
    %v2437 = vpop.f32.mrf.mxu0
    %v2438 = vadd.f32 %v2389, %v2437
    %2439 = vmatmul.bf16.gmra.mxu0 %v2220
    %v2440 = vpop.f32.mrf.mxu0
    %v2441 = vadd.f32 %v2392, %v2440
    %v2442 = vpop.f32.mrf.mxu0
    %v2443 = vadd.f32 %v2394, %v2442
    %2444 = vmatmul.bf16.gmra.mxu0 %v2224
    %v2445 = vpop.f32.mrf.mxu0
    %v2446 = vadd.f32 %v2397, %v2445
    %v2447 = vpop.f32.mrf.mxu0
    %v2448 = vadd.f32 %v2399, %v2447
    %2449 = vmatmul.bf16.gmra.mxu0 %v2228
    %v2450 = vpop.f32.mrf.mxu0
    %v2451 = vadd.f32 %v2402, %v2450
    %v2452 = vpop.f32.mrf.mxu0
    %v2453 = vadd.f32 %v2404, %v2452
    %2454 = vmatmul.bf16.gmra.mxu0 %v2232
    %v2455 = vpop.f32.mrf.mxu0
    %v2456 = vadd.f32 %v2407, %v2455
    %v2457 = vpop.f32.mrf.mxu0
    %v2458 = vadd.f32 %v2409, %v2457
    %2459 = vmatmul.bf16.gmra.mxu0 %v2236
    %v2460 = vpop.f32.mrf.mxu0
    %v2461 = vadd.f32 %v2412, %v2460
    %v2462 = vpop.f32.mrf.mxu0
    %v2463 = vadd.f32 %v2414, %v2462
    %2464 = vdwg.mxu0
    %v2465 = vpack.c.bf16 %v2428, %v2426
    %v2466 = vpack.c.bf16 %v2433, %v2431
    %v2467 = vpack.c.bf16 %v2438, %v2436
    %v2468 = vpack.c.bf16 %v2443, %v2441
    %v2469 = vpack.c.bf16 %v2448, %v2446
    %v2470 = vpack.c.bf16 %v2453, %v2451
    %v2471 = vpack.c.bf16 %v2458, %v2456
    %v2472 = vpack.c.bf16 %v2463, %v2461
    %v2475 = vunpack.c.l.b16 %v1089
    %v2476 = vunpack.c.l.b16 %v1090
    %v2477 = vpack.c.b16 %v2476, %v2475
    %v2480 = vsel %vm691, %v2465, 0
    %v2483 = vsel %vm691, %v2466, 0
    %v2486 = vsel %vm691, %v2467, 0
    %v2489 = vsel %vm691, %v2468, 0
    %v2492 = vsel %vm691, %v2469, 0
    %v2495 = vsel %vm691, %v2470, 0
    %v2498 = vsel %vm691, %v2471, 0
    %v2501 = vsel %vm691, %v2472, 0
    %2503 = vmatpush.bf16.msra.mxu0 0
    %2504 = vmatpush.bf16.msra.mxu0 0
    %2505 = vmatpush.bf16.msra.mxu0 0
    %2506 = vmatpush.bf16.msra.mxu0 0
    %2507 = vmatpush.bf16.msra.mxu0 0
    %2508 = vmatpush.bf16.msra.mxu0 0
    %2509 = vmatpush.bf16.msra.mxu0 0
    %2510 = vmatpush.bf16.msra.mxu0 %v2477
    %2511 = vmatmul.bf16.gmra.mxu0 %v2480
    %v2512 = vpop.f32.mrf.mxu0
    %v2513 = vadd.f32 0.0, %v2512
    %v2514 = vpop.f32.mrf.mxu0
    %v2515 = vadd.f32 0.0, %v2514
    %2516 = vmatmul.bf16.gmra.mxu0 %v2483
    %v2517 = vpop.f32.mrf.mxu0
    %v2518 = vadd.f32 0.0, %v2517
    %v2519 = vpop.f32.mrf.mxu0
    %v2520 = vadd.f32 0.0, %v2519
    %2521 = vmatmul.bf16.gmra.mxu0 %v2486
    %v2522 = vpop.f32.mrf.mxu0
    %v2523 = vadd.f32 0.0, %v2522
    %v2524 = vpop.f32.mrf.mxu0
    %v2525 = vadd.f32 0.0, %v2524
    %2526 = vmatmul.bf16.gmra.mxu0 %v2489
    %v2527 = vpop.f32.mrf.mxu0
    %v2528 = vadd.f32 0.0, %v2527
    %v2529 = vpop.f32.mrf.mxu0
    %v2530 = vadd.f32 0.0, %v2529
    %2531 = vmatmul.bf16.gmra.mxu0 %v2492
    %v2532 = vpop.f32.mrf.mxu0
    %v2533 = vadd.f32 0.0, %v2532
    %v2534 = vpop.f32.mrf.mxu0
    %v2535 = vadd.f32 0.0, %v2534
    %2536 = vmatmul.bf16.gmra.mxu0 %v2495
    %v2537 = vpop.f32.mrf.mxu0
    %v2538 = vadd.f32 0.0, %v2537
    %v2539 = vpop.f32.mrf.mxu0
    %v2540 = vadd.f32 0.0, %v2539
    %2541 = vmatmul.bf16.gmra.mxu0 %v2498
    %v2542 = vpop.f32.mrf.mxu0
    %v2543 = vadd.f32 0.0, %v2542
    %v2544 = vpop.f32.mrf.mxu0
    %v2545 = vadd.f32 0.0, %v2544
    %2546 = vmatmul.bf16.gmra.mxu0 %v2501
    %v2547 = vpop.f32.mrf.mxu0
    %v2548 = vadd.f32 0.0, %v2547
    %v2549 = vpop.f32.mrf.mxu0
    %v2550 = vadd.f32 0.0, %v2549
    %2551 = vdwg.mxu0
    %v2552 = vadd.f32 %v2037, %v2513
    %v2553 = vadd.f32 %v2039, %v2515
    %v2554 = vadd.f32 %v2042, %v2518
    %v2555 = vadd.f32 %v2044, %v2520
    %v2556 = vadd.f32 %v2047, %v2523
    %v2557 = vadd.f32 %v2049, %v2525
    %v2558 = vadd.f32 %v2052, %v2528
    %v2559 = vadd.f32 %v2054, %v2530
    %v2560 = vadd.f32 %v2057, %v2533
    %v2561 = vadd.f32 %v2059, %v2535
    %v2562 = vadd.f32 %v2062, %v2538
    %v2563 = vadd.f32 %v2064, %v2540
    %v2564 = vadd.f32 %v2067, %v2543
    %v2565 = vadd.f32 %v2069, %v2545
    %v2566 = vadd.f32 %v2072, %v2548
    %v2567 = vadd.f32 %v2074, %v2550
    %s2568 = scalar_lea.vmem %s1, 768
    %v2569 = vld [vmem:[%s2568] sm:$0xff]
    %v2570 = vld [vmem:[%s2568 + $0x8] sm:$0xff]
    %v2571 = vld [vmem:[%s2568 + $0x10] sm:$0xff]
    %v2572 = vld [vmem:[%s2568 + $0x18] sm:$0xff]
    %v2573 = vld [vmem:[%s2568 + $0x20] sm:$0xff]
    %v2574 = vld [vmem:[%s2568 + $0x28] sm:$0xff]
    %v2575 = vld [vmem:[%s2568 + $0x30] sm:$0xff]
    %v2576 = vld [vmem:[%s2568 + $0x38] sm:$0xff]
    %v2577 = vld [vmem:[%s2568 + $0x40] sm:$0xff]
    %v2578 = vld [vmem:[%s2568 + $0x48] sm:$0xff]
    %v2579 = vld [vmem:[%s2568 + $0x50] sm:$0xff]
    %v2580 = vld [vmem:[%s2568 + $0x58] sm:$0xff]
    %v2581 = vld [vmem:[%s2568 + $0x60] sm:$0xff]
    %v2582 = vld [vmem:[%s2568 + $0x68] sm:$0xff]
    %v2583 = vld [vmem:[%s2568 + $0x70] sm:$0xff]
    %v2584 = vld [vmem:[%s2568 + $0x78] sm:$0xff]
    %v2585 = vld [vmem:[%s2568 + $0x80] sm:$0xff]
    %v2586 = vld [vmem:[%s2568 + $0x88] sm:$0xff]
    %v2587 = vld [vmem:[%s2568 + $0x90] sm:$0xff]
    %v2588 = vld [vmem:[%s2568 + $0x98] sm:$0xff]
    %v2589 = vld [vmem:[%s2568 + $0xa0] sm:$0xff]
    %v2590 = vld [vmem:[%s2568 + $0xa8] sm:$0xff]
    %v2591 = vld [vmem:[%s2568 + $0xb0] sm:$0xff]
    %v2592 = vld [vmem:[%s2568 + $0xb8] sm:$0xff]
    %v2593 = vld [vmem:[%s2568 + $0xc0] sm:$0xff]
    %v2594 = vld [vmem:[%s2568 + $0xc8] sm:$0xff]
    %v2595 = vld [vmem:[%s2568 + $0xd0] sm:$0xff]
    %v2596 = vld [vmem:[%s2568 + $0xd8] sm:$0xff]
    %v2597 = vld [vmem:[%s2568 + $0xe0] sm:$0xff]
    %v2598 = vld [vmem:[%s2568 + $0xe8] sm:$0xff]
    %v2599 = vld [vmem:[%s2568 + $0xf0] sm:$0xff]
    %v2600 = vld [vmem:[%s2568 + $0xf8] sm:$0xff]
    %v2633 = vunpack.c.l.b16 %v2569
    %v2634 = vunpack.c.h.b16 %v2569
    %v2635 = vunpack.c.l.b16 %v2570
    %v2636 = vunpack.c.h.b16 %v2570
    %v2637 = vunpack.c.l.b16 %v2571
    %v2638 = vunpack.c.h.b16 %v2571
    %v2639 = vunpack.c.l.b16 %v2572
    %v2640 = vunpack.c.h.b16 %v2572
    %v2641 = vunpack.c.l.b16 %v2573
    %v2642 = vunpack.c.h.b16 %v2573
    %v2643 = vunpack.c.l.b16 %v2574
    %v2644 = vunpack.c.h.b16 %v2574
    %v2645 = vunpack.c.l.b16 %v2575
    %v2646 = vunpack.c.h.b16 %v2575
    %v2647 = vunpack.c.l.b16 %v2576
    %v2648 = vunpack.c.h.b16 %v2576
    %v2649 = vunpack.c.l.b16 %v2577
    %v2650 = vunpack.c.h.b16 %v2577
    %v2651 = vunpack.c.l.b16 %v2578
    %v2652 = vunpack.c.h.b16 %v2578
    %v2653 = vunpack.c.l.b16 %v2579
    %v2654 = vunpack.c.h.b16 %v2579
    %v2655 = vunpack.c.l.b16 %v2580
    %v2656 = vunpack.c.h.b16 %v2580
    %v2657 = vunpack.c.l.b16 %v2581
    %v2658 = vunpack.c.h.b16 %v2581
    %v2659 = vunpack.c.l.b16 %v2582
    %v2660 = vunpack.c.h.b16 %v2582
    %v2661 = vunpack.c.l.b16 %v2583
    %v2662 = vunpack.c.h.b16 %v2583
    %v2663 = vunpack.c.l.b16 %v2584
    %v2664 = vunpack.c.h.b16 %v2584
    %v2665 = vunpack.c.l.b16 %v2585
    %v2666 = vunpack.c.h.b16 %v2585
    %v2667 = vunpack.c.l.b16 %v2586
    %v2668 = vunpack.c.h.b16 %v2586
    %v2669 = vunpack.c.l.b16 %v2587
    %v2670 = vunpack.c.h.b16 %v2587
    %v2671 = vunpack.c.l.b16 %v2588
    %v2672 = vunpack.c.h.b16 %v2588
    %v2673 = vunpack.c.l.b16 %v2589
    %v2674 = vunpack.c.h.b16 %v2589
    %v2675 = vunpack.c.l.b16 %v2590
    %v2676 = vunpack.c.h.b16 %v2590
    %v2677 = vunpack.c.l.b16 %v2591
    %v2678 = vunpack.c.h.b16 %v2591
    %v2679 = vunpack.c.l.b16 %v2592
    %v2680 = vunpack.c.h.b16 %v2592
    %v2681 = vunpack.c.l.b16 %v2593
    %v2682 = vunpack.c.h.b16 %v2593
    %v2683 = vunpack.c.l.b16 %v2594
    %v2684 = vunpack.c.h.b16 %v2594
    %v2685 = vunpack.c.l.b16 %v2595
    %v2686 = vunpack.c.h.b16 %v2595
    %v2687 = vunpack.c.l.b16 %v2596
    %v2688 = vunpack.c.h.b16 %v2596
    %v2689 = vunpack.c.l.b16 %v2597
    %v2690 = vunpack.c.h.b16 %v2597
    %v2691 = vunpack.c.l.b16 %v2598
    %v2692 = vunpack.c.h.b16 %v2598
    %v2693 = vunpack.c.l.b16 %v2599
    %v2694 = vunpack.c.h.b16 %v2599
    %v2695 = vunpack.c.l.b16 %v2600
    %v2696 = vunpack.c.h.b16 %v2600
    %v2697 = vpack.c.b16 %v2637, %v2633
    %v2698 = vpack.c.b16 %v2638, %v2634
    %v2699 = vpack.c.b16 %v2639, %v2635
    %v2700 = vpack.c.b16 %v2640, %v2636
    %v2701 = vpack.c.b16 %v2645, %v2641
    %v2702 = vpack.c.b16 %v2646, %v2642
    %v2703 = vpack.c.b16 %v2647, %v2643
    %v2704 = vpack.c.b16 %v2648, %v2644
    %v2705 = vpack.c.b16 %v2653, %v2649
    %v2706 = vpack.c.b16 %v2654, %v2650
    %v2707 = vpack.c.b16 %v2655, %v2651
    %v2708 = vpack.c.b16 %v2656, %v2652
    %v2709 = vpack.c.b16 %v2661, %v2657
    %v2710 = vpack.c.b16 %v2662, %v2658
    %v2711 = vpack.c.b16 %v2663, %v2659
    %v2712 = vpack.c.b16 %v2664, %v2660
    %v2713 = vpack.c.b16 %v2669, %v2665
    %v2714 = vpack.c.b16 %v2670, %v2666
    %v2715 = vpack.c.b16 %v2671, %v2667
    %v2716 = vpack.c.b16 %v2672, %v2668
    %v2717 = vpack.c.b16 %v2677, %v2673
    %v2718 = vpack.c.b16 %v2678, %v2674
    %v2719 = vpack.c.b16 %v2679, %v2675
    %v2720 = vpack.c.b16 %v2680, %v2676
    %v2721 = vpack.c.b16 %v2685, %v2681
    %v2722 = vpack.c.b16 %v2686, %v2682
    %v2723 = vpack.c.b16 %v2687, %v2683
    %v2724 = vpack.c.b16 %v2688, %v2684
    %v2725 = vpack.c.b16 %v2693, %v2689
    %v2726 = vpack.c.b16 %v2694, %v2690
    %v2727 = vpack.c.b16 %v2695, %v2691
    %v2728 = vpack.c.b16 %v2696, %v2692
    %2761 = vmatpush.bf16.msra.mxu0 %v1132
    %2762 = vmatpush.bf16.msra.mxu0 %v1131
    %2763 = vmatpush.bf16.msra.mxu0 %v1130
    %2764 = vmatpush.bf16.msra.mxu0 %v1129
    %2765 = vmatpush.bf16.msra.mxu0 %v1128
    %2766 = vmatpush.bf16.msra.mxu0 %v1127
    %2767 = vmatpush.bf16.msra.mxu0 %v1126
    %2768 = vmatpush.bf16.msra.mxu0 %v1125
    %2769 = vmatmul.bf16.gmra.mxu0 %v2697
    %v2770 = vpop.f32.mrf.mxu0
    %v2771 = vadd.f32 0.0, %v2770
    %v2772 = vpop.f32.mrf.mxu0
    %v2773 = vadd.f32 0.0, %v2772
    %2774 = vmatmul.bf16.gmra.mxu0 %v2701
    %v2775 = vpop.f32.mrf.mxu0
    %v2776 = vadd.f32 0.0, %v2775
    %v2777 = vpop.f32.mrf.mxu0
    %v2778 = vadd.f32 0.0, %v2777
    %2779 = vmatmul.bf16.gmra.mxu0 %v2705
    %v2780 = vpop.f32.mrf.mxu0
    %v2781 = vadd.f32 0.0, %v2780
    %v2782 = vpop.f32.mrf.mxu0
    %v2783 = vadd.f32 0.0, %v2782
    %2784 = vmatmul.bf16.gmra.mxu0 %v2709
    %v2785 = vpop.f32.mrf.mxu0
    %v2786 = vadd.f32 0.0, %v2785
    %v2787 = vpop.f32.mrf.mxu0
    %v2788 = vadd.f32 0.0, %v2787
    %2789 = vmatmul.bf16.gmra.mxu0 %v2713
    %v2790 = vpop.f32.mrf.mxu0
    %v2791 = vadd.f32 0.0, %v2790
    %v2792 = vpop.f32.mrf.mxu0
    %v2793 = vadd.f32 0.0, %v2792
    %2794 = vmatmul.bf16.gmra.mxu0 %v2717
    %v2795 = vpop.f32.mrf.mxu0
    %v2796 = vadd.f32 0.0, %v2795
    %v2797 = vpop.f32.mrf.mxu0
    %v2798 = vadd.f32 0.0, %v2797
    %2799 = vmatmul.bf16.gmra.mxu0 %v2721
    %v2800 = vpop.f32.mrf.mxu0
    %v2801 = vadd.f32 0.0, %v2800
    %v2802 = vpop.f32.mrf.mxu0
    %v2803 = vadd.f32 0.0, %v2802
    %2804 = vmatmul.bf16.gmra.mxu0 %v2725
    %v2805 = vpop.f32.mrf.mxu0
    %v2806 = vadd.f32 0.0, %v2805
    %v2807 = vpop.f32.mrf.mxu0
    %v2808 = vadd.f32 0.0, %v2807
    %2809 = vdwg.mxu0
    %2810 = vmatpush.bf16.msra.mxu0 %v1140
    %2811 = vmatpush.bf16.msra.mxu0 %v1139
    %2812 = vmatpush.bf16.msra.mxu0 %v1138
    %2813 = vmatpush.bf16.msra.mxu0 %v1137
    %2814 = vmatpush.bf16.msra.mxu0 %v1136
    %2815 = vmatpush.bf16.msra.mxu0 %v1135
    %2816 = vmatpush.bf16.msra.mxu0 %v1134
    %2817 = vmatpush.bf16.msra.mxu0 %v1133
    %2818 = vmatmul.bf16.gmra.mxu0 %v2698
    %v2819 = vpop.f32.mrf.mxu0
    %v2820 = vadd.f32 %v2771, %v2819
    %v2821 = vpop.f32.mrf.mxu0
    %v2822 = vadd.f32 %v2773, %v2821
    %2823 = vmatmul.bf16.gmra.mxu0 %v2702
    %v2824 = vpop.f32.mrf.mxu0
    %v2825 = vadd.f32 %v2776, %v2824
    %v2826 = vpop.f32.mrf.mxu0
    %v2827 = vadd.f32 %v2778, %v2826
    %2828 = vmatmul.bf16.gmra.mxu0 %v2706
    %v2829 = vpop.f32.mrf.mxu0
    %v2830 = vadd.f32 %v2781, %v2829
    %v2831 = vpop.f32.mrf.mxu0
    %v2832 = vadd.f32 %v2783, %v2831
    %2833 = vmatmul.bf16.gmra.mxu0 %v2710
    %v2834 = vpop.f32.mrf.mxu0
    %v2835 = vadd.f32 %v2786, %v2834
    %v2836 = vpop.f32.mrf.mxu0
    %v2837 = vadd.f32 %v2788, %v2836
    %2838 = vmatmul.bf16.gmra.mxu0 %v2714
    %v2839 = vpop.f32.mrf.mxu0
    %v2840 = vadd.f32 %v2791, %v2839
    %v2841 = vpop.f32.mrf.mxu0
    %v2842 = vadd.f32 %v2793, %v2841
    %2843 = vmatmul.bf16.gmra.mxu0 %v2718
    %v2844 = vpop.f32.mrf.mxu0
    %v2845 = vadd.f32 %v2796, %v2844
    %v2846 = vpop.f32.mrf.mxu0
    %v2847 = vadd.f32 %v2798, %v2846
    %2848 = vmatmul.bf16.gmra.mxu0 %v2722
    %v2849 = vpop.f32.mrf.mxu0
    %v2850 = vadd.f32 %v2801, %v2849
    %v2851 = vpop.f32.mrf.mxu0
    %v2852 = vadd.f32 %v2803, %v2851
    %2853 = vmatmul.bf16.gmra.mxu0 %v2726
    %v2854 = vpop.f32.mrf.mxu0
    %v2855 = vadd.f32 %v2806, %v2854
    %v2856 = vpop.f32.mrf.mxu0
    %v2857 = vadd.f32 %v2808, %v2856
    %2858 = vdwg.mxu0
    %2859 = vmatpush.bf16.msra.mxu0 %v1148
    %2860 = vmatpush.bf16.msra.mxu0 %v1147
    %2861 = vmatpush.bf16.msra.mxu0 %v1146
    %2862 = vmatpush.bf16.msra.mxu0 %v1145
    %2863 = vmatpush.bf16.msra.mxu0 %v1144
    %2864 = vmatpush.bf16.msra.mxu0 %v1143
    %2865 = vmatpush.bf16.msra.mxu0 %v1142
    %2866 = vmatpush.bf16.msra.mxu0 %v1141
    %2867 = vmatmul.bf16.gmra.mxu0 %v2699
    %v2868 = vpop.f32.mrf.mxu0
    %v2869 = vadd.f32 %v2820, %v2868
    %v2870 = vpop.f32.mrf.mxu0
    %v2871 = vadd.f32 %v2822, %v2870
    %2872 = vmatmul.bf16.gmra.mxu0 %v2703
    %v2873 = vpop.f32.mrf.mxu0
    %v2874 = vadd.f32 %v2825, %v2873
    %v2875 = vpop.f32.mrf.mxu0
    %v2876 = vadd.f32 %v2827, %v2875
    %2877 = vmatmul.bf16.gmra.mxu0 %v2707
    %v2878 = vpop.f32.mrf.mxu0
    %v2879 = vadd.f32 %v2830, %v2878
    %v2880 = vpop.f32.mrf.mxu0
    %v2881 = vadd.f32 %v2832, %v2880
    %2882 = vmatmul.bf16.gmra.mxu0 %v2711
    %v2883 = vpop.f32.mrf.mxu0
    %v2884 = vadd.f32 %v2835, %v2883
    %v2885 = vpop.f32.mrf.mxu0
    %v2886 = vadd.f32 %v2837, %v2885
    %2887 = vmatmul.bf16.gmra.mxu0 %v2715
    %v2888 = vpop.f32.mrf.mxu0
    %v2889 = vadd.f32 %v2840, %v2888
    %v2890 = vpop.f32.mrf.mxu0
    %v2891 = vadd.f32 %v2842, %v2890
    %2892 = vmatmul.bf16.gmra.mxu0 %v2719
    %v2893 = vpop.f32.mrf.mxu0
    %v2894 = vadd.f32 %v2845, %v2893
    %v2895 = vpop.f32.mrf.mxu0
    %v2896 = vadd.f32 %v2847, %v2895
    %2897 = vmatmul.bf16.gmra.mxu0 %v2723
    %v2898 = vpop.f32.mrf.mxu0
    %v2899 = vadd.f32 %v2850, %v2898
    %v2900 = vpop.f32.mrf.mxu0
    %v2901 = vadd.f32 %v2852, %v2900
    %2902 = vmatmul.bf16.gmra.mxu0 %v2727
    %v2903 = vpop.f32.mrf.mxu0
    %v2904 = vadd.f32 %v2855, %v2903
    %v2905 = vpop.f32.mrf.mxu0
    %v2906 = vadd.f32 %v2857, %v2905
    %2907 = vdwg.mxu0
    %2908 = vmatpush.bf16.msra.mxu0 %v1156
    %2909 = vmatpush.bf16.msra.mxu0 %v1155
    %2910 = vmatpush.bf16.msra.mxu0 %v1154
    %2911 = vmatpush.bf16.msra.mxu0 %v1153
    %2912 = vmatpush.bf16.msra.mxu0 %v1152
    %2913 = vmatpush.bf16.msra.mxu0 %v1151
    %2914 = vmatpush.bf16.msra.mxu0 %v1150
    %2915 = vmatpush.bf16.msra.mxu0 %v1149
    %2916 = vmatmul.bf16.gmra.mxu0 %v2700
    %v2917 = vpop.f32.mrf.mxu0
    %v2918 = vadd.f32 %v2869, %v2917
    %v2919 = vpop.f32.mrf.mxu0
    %v2920 = vadd.f32 %v2871, %v2919
    %2921 = vmatmul.bf16.gmra.mxu0 %v2704
    %v2922 = vpop.f32.mrf.mxu0
    %v2923 = vadd.f32 %v2874, %v2922
    %v2924 = vpop.f32.mrf.mxu0
    %v2925 = vadd.f32 %v2876, %v2924
    %2926 = vmatmul.bf16.gmra.mxu0 %v2708
    %v2927 = vpop.f32.mrf.mxu0
    %v2928 = vadd.f32 %v2879, %v2927
    %v2929 = vpop.f32.mrf.mxu0
    %v2930 = vadd.f32 %v2881, %v2929
    %2931 = vmatmul.bf16.gmra.mxu0 %v2712
    %v2932 = vpop.f32.mrf.mxu0
    %v2933 = vadd.f32 %v2884, %v2932
    %v2934 = vpop.f32.mrf.mxu0
    %v2935 = vadd.f32 %v2886, %v2934
    %2936 = vmatmul.bf16.gmra.mxu0 %v2716
    %v2937 = vpop.f32.mrf.mxu0
    %v2938 = vadd.f32 %v2889, %v2937
    %v2939 = vpop.f32.mrf.mxu0
    %v2940 = vadd.f32 %v2891, %v2939
    %2941 = vmatmul.bf16.gmra.mxu0 %v2720
    %v2942 = vpop.f32.mrf.mxu0
    %v2943 = vadd.f32 %v2894, %v2942
    %v2944 = vpop.f32.mrf.mxu0
    %v2945 = vadd.f32 %v2896, %v2944
    %2946 = vmatmul.bf16.gmra.mxu0 %v2724
    %v2947 = vpop.f32.mrf.mxu0
    %v2948 = vadd.f32 %v2899, %v2947
    %v2949 = vpop.f32.mrf.mxu0
    %v2950 = vadd.f32 %v2901, %v2949
    %2951 = vmatmul.bf16.gmra.mxu0 %v2728
    %v2952 = vpop.f32.mrf.mxu0
    %v2953 = vadd.f32 %v2904, %v2952
    %v2954 = vpop.f32.mrf.mxu0
    %v2955 = vadd.f32 %v2906, %v2954
    %2956 = vdwg.mxu0
    %v2957 = vpack.c.bf16 %v2920, %v2918
    %v2958 = vpack.c.bf16 %v2925, %v2923
    %v2959 = vpack.c.bf16 %v2930, %v2928
    %v2960 = vpack.c.bf16 %v2935, %v2933
    %v2961 = vpack.c.bf16 %v2940, %v2938
    %v2962 = vpack.c.bf16 %v2945, %v2943
    %v2963 = vpack.c.bf16 %v2950, %v2948
    %v2964 = vpack.c.bf16 %v2955, %v2953
    %v2967 = vunpack.c.l.b16 %v1091
    %v2968 = vunpack.c.l.b16 %v1092
    %v2969 = vpack.c.b16 %v2968, %v2967
    %v2972 = vsel %vm691, %v2957, 0
    %v2975 = vsel %vm691, %v2958, 0
    %v2978 = vsel %vm691, %v2959, 0
    %v2981 = vsel %vm691, %v2960, 0
    %v2984 = vsel %vm691, %v2961, 0
    %v2987 = vsel %vm691, %v2962, 0
    %v2990 = vsel %vm691, %v2963, 0
    %v2993 = vsel %vm691, %v2964, 0
    %2995 = vmatpush.bf16.msra.mxu0 0
    %2996 = vmatpush.bf16.msra.mxu0 0
    %2997 = vmatpush.bf16.msra.mxu0 0
    %2998 = vmatpush.bf16.msra.mxu0 0
    %2999 = vmatpush.bf16.msra.mxu0 0
    %3000 = vmatpush.bf16.msra.mxu0 0
    %3001 = vmatpush.bf16.msra.mxu0 0
    %3002 = vmatpush.bf16.msra.mxu0 %v2969
    %3003 = vmatmul.bf16.gmra.mxu0 %v2972
    %v3004 = vpop.f32.mrf.mxu0
    %v3005 = vadd.f32 0.0, %v3004
    %v3006 = vpop.f32.mrf.mxu0
    %v3007 = vadd.f32 0.0, %v3006
    %3008 = vmatmul.bf16.gmra.mxu0 %v2975
    %v3009 = vpop.f32.mrf.mxu0
    %v3010 = vadd.f32 0.0, %v3009
    %v3011 = vpop.f32.mrf.mxu0
    %v3012 = vadd.f32 0.0, %v3011
    %3013 = vmatmul.bf16.gmra.mxu0 %v2978
    %v3014 = vpop.f32.mrf.mxu0
    %v3015 = vadd.f32 0.0, %v3014
    %v3016 = vpop.f32.mrf.mxu0
    %v3017 = vadd.f32 0.0, %v3016
    %3018 = vmatmul.bf16.gmra.mxu0 %v2981
    %v3019 = vpop.f32.mrf.mxu0
    %v3020 = vadd.f32 0.0, %v3019
    %v3021 = vpop.f32.mrf.mxu0
    %v3022 = vadd.f32 0.0, %v3021
    %3023 = vmatmul.bf16.gmra.mxu0 %v2984
    %v3024 = vpop.f32.mrf.mxu0
    %v3025 = vadd.f32 0.0, %v3024
    %v3026 = vpop.f32.mrf.mxu0
    %v3027 = vadd.f32 0.0, %v3026
    %3028 = vmatmul.bf16.gmra.mxu0 %v2987
    %v3029 = vpop.f32.mrf.mxu0
    %v3030 = vadd.f32 0.0, %v3029
    %v3031 = vpop.f32.mrf.mxu0
    %v3032 = vadd.f32 0.0, %v3031
    %3033 = vmatmul.bf16.gmra.mxu0 %v2990
    %v3034 = vpop.f32.mrf.mxu0
    %v3035 = vadd.f32 0.0, %v3034
    %v3036 = vpop.f32.mrf.mxu0
    %v3037 = vadd.f32 0.0, %v3036
    %3038 = vmatmul.bf16.gmra.mxu0 %v2993
    %v3039 = vpop.f32.mrf.mxu0
    %v3040 = vadd.f32 0.0, %v3039
    %v3041 = vpop.f32.mrf.mxu0
    %v3042 = vadd.f32 0.0, %v3041
    %3043 = vdwg.mxu0
    %v3044 = vadd.f32 %v2552, %v3005
    %v3045 = vadd.f32 %v2553, %v3007
    %v3046 = vadd.f32 %v2554, %v3010
    %v3047 = vadd.f32 %v2555, %v3012
    %v3048 = vadd.f32 %v2556, %v3015
    %v3049 = vadd.f32 %v2557, %v3017
    %v3050 = vadd.f32 %v2558, %v3020
    %v3051 = vadd.f32 %v2559, %v3022
    %v3052 = vadd.f32 %v2560, %v3025
    %v3053 = vadd.f32 %v2561, %v3027
    %v3054 = vadd.f32 %v2562, %v3030
    %v3055 = vadd.f32 %v2563, %v3032
    %v3056 = vadd.f32 %v2564, %v3035
    %v3057 = vadd.f32 %v2565, %v3037
    %v3058 = vadd.f32 %v2566, %v3040
    %v3059 = vadd.f32 %v2567, %v3042
    %v3060 = vld [vmem:[%s10] sm:$0x1]
    %v3062 = vperm.slane %v3060, 0
    %v3064 = vadd.f32 %v3044, %v3062
    %v3065 = vadd.f32 %v3045, %v3062
    %v3066 = vadd.f32 %v3046, %v3062
    %v3067 = vadd.f32 %v3047, %v3062
    %v3068 = vadd.f32 %v3048, %v3062
    %v3069 = vadd.f32 %v3049, %v3062
    %v3070 = vadd.f32 %v3050, %v3062
    %v3071 = vadd.f32 %v3051, %v3062
    %v3072 = vadd.f32 %v3052, %v3062
    %v3073 = vadd.f32 %v3053, %v3062
    %v3074 = vadd.f32 %v3054, %v3062
    %v3075 = vadd.f32 %v3055, %v3062
    %v3076 = vadd.f32 %v3056, %v3062
    %v3077 = vadd.f32 %v3057, %v3062
    %v3078 = vadd.f32 %v3058, %v3062
    %v3079 = vadd.f32 %v3059, %v3062
    %v3080 = vld [vmem:[%s11] sm:$0xf]
    %v3081 = vld [vmem:[%s11 + $0x4] sm:$0xf]
    %v3082 = vld [vmem:[%s11 + $0x8] sm:$0xf]
    %v3083 = vld [vmem:[%s11 + $0xc] sm:$0xf]
    %v3084 = vpack.c.bf16 %v3065, %v3064
    %v3085 = vpack.c.bf16 %v3067, %v3066
    %v3086 = vpack.c.bf16 %v3069, %v3068
    %v3087 = vpack.c.bf16 %v3071, %v3070
    %v3088 = vpack.c.bf16 %v3073, %v3072
    %v3089 = vpack.c.bf16 %v3075, %v3074
    %v3090 = vpack.c.bf16 %v3077, %v3076
    %v3091 = vpack.c.bf16 %v3079, %v3078
    %v3092 = vld [vmem:[%s12] sm:$0x1]
    %v3094 = vperm.slane %v3092, 0
    %v3100 = vunpack.c.l.b16 %v3080
    %v3101 = vunpack.c.l.b16 %v3081
    %v3102 = vunpack.c.l.b16 %v3082
    %v3103 = vunpack.c.l.b16 %v3083
    %v3104 = vpack.c.b16 %v3101, %v3100
    %v3105 = vpack.c.b16 %v3103, %v3102
    %vm3108 = vcmask 261120
    %v3110 = vsel %vm3108, %v3084, 0
    %v3113 = vsel %vm3108, %v3085, 0
    %v3116 = vsel %vm3108, %v3086, 0
    %v3119 = vsel %vm3108, %v3087, 0
    %v3122 = vsel %vm3108, %v3088, 0
    %v3125 = vsel %vm3108, %v3089, 0
    %v3128 = vsel %vm3108, %v3090, 0
    %v3131 = vsel %vm3108, %v3091, 0
    %3133 = vmatpush.bf16.msra.mxu0 0
    %3134 = vmatpush.bf16.msra.mxu0 0
    %3135 = vmatpush.bf16.msra.mxu0 0
    %3136 = vmatpush.bf16.msra.mxu0 0
    %3137 = vmatpush.bf16.msra.mxu0 0
    %3138 = vmatpush.bf16.msra.mxu0 0
    %3139 = vmatpush.bf16.msra.mxu0 %v3105
    %3140 = vmatpush.bf16.msra.mxu0 %v3104
    %3141 = vmatmul.bf16.gmra.mxu0 %v3110
    %v3142 = vpop.f32.mrf.mxu0
    %v3143 = vadd.f32 %v3094, %v3142
    %v3144 = vpop.f32.mrf.mxu0
    %v3145 = vadd.f32 %v3094, %v3144
    %3146 = vmatmul.bf16.gmra.mxu0 %v3113
    %v3147 = vpop.f32.mrf.mxu0
    %v3148 = vadd.f32 %v3094, %v3147
    %v3149 = vpop.f32.mrf.mxu0
    %v3150 = vadd.f32 %v3094, %v3149
    %3151 = vmatmul.bf16.gmra.mxu0 %v3116
    %v3152 = vpop.f32.mrf.mxu0
    %v3153 = vadd.f32 %v3094, %v3152
    %v3154 = vpop.f32.mrf.mxu0
    %v3155 = vadd.f32 %v3094, %v3154
    %3156 = vmatmul.bf16.gmra.mxu0 %v3119
    %v3157 = vpop.f32.mrf.mxu0
    %v3158 = vadd.f32 %v3094, %v3157
    %v3159 = vpop.f32.mrf.mxu0
    %v3160 = vadd.f32 %v3094, %v3159
    %3161 = vmatmul.bf16.gmra.mxu0 %v3122
    %v3162 = vpop.f32.mrf.mxu0
    %v3163 = vadd.f32 %v3094, %v3162
    %v3164 = vpop.f32.mrf.mxu0
    %v3165 = vadd.f32 %v3094, %v3164
    %3166 = vmatmul.bf16.gmra.mxu0 %v3125
    %v3167 = vpop.f32.mrf.mxu0
    %v3168 = vadd.f32 %v3094, %v3167
    %v3169 = vpop.f32.mrf.mxu0
    %v3170 = vadd.f32 %v3094, %v3169
    %3171 = vmatmul.bf16.gmra.mxu0 %v3128
    %v3172 = vpop.f32.mrf.mxu0
    %v3173 = vadd.f32 %v3094, %v3172
    %v3174 = vpop.f32.mrf.mxu0
    %v3175 = vadd.f32 %v3094, %v3174
    %3176 = vmatmul.bf16.gmra.mxu0 %v3131
    %v3177 = vpop.f32.mrf.mxu0
    %v3178 = vadd.f32 %v3094, %v3177
    %v3179 = vpop.f32.mrf.mxu0
    %v3180 = vadd.f32 %v3094, %v3179
    %3181 = vdwg.mxu0
    %v3182 = vmax.f32 %v3143, 0.0
    %v3183 = vmax.f32 %v3145, 0.0
    %v3184 = vmax.f32 %v3148, 0.0
    %v3185 = vmax.f32 %v3150, 0.0
    %v3186 = vmax.f32 %v3153, 0.0
    %v3187 = vmax.f32 %v3155, 0.0
    %v3188 = vmax.f32 %v3158, 0.0
    %v3189 = vmax.f32 %v3160, 0.0
    %v3190 = vmax.f32 %v3163, 0.0
    %v3191 = vmax.f32 %v3165, 0.0
    %v3192 = vmax.f32 %v3168, 0.0
    %v3193 = vmax.f32 %v3170, 0.0
    %v3194 = vmax.f32 %v3173, 0.0
    %v3195 = vmax.f32 %v3175, 0.0
    %v3196 = vmax.f32 %v3178, 0.0
    %v3197 = vmax.f32 %v3180, 0.0
    %v3198 = vadd.f32 %v3064, %v3182
    %v3199 = vadd.f32 %v3065, %v3183
    %v3200 = vadd.f32 %v3066, %v3184
    %v3201 = vadd.f32 %v3067, %v3185
    %v3202 = vadd.f32 %v3068, %v3186
    %v3203 = vadd.f32 %v3069, %v3187
    %v3204 = vadd.f32 %v3070, %v3188
    %v3205 = vadd.f32 %v3071, %v3189
    %v3206 = vadd.f32 %v3072, %v3190
    %v3207 = vadd.f32 %v3073, %v3191
    %v3208 = vadd.f32 %v3074, %v3192
    %v3209 = vadd.f32 %v3075, %v3193
    %v3210 = vadd.f32 %v3076, %v3194
    %v3211 = vadd.f32 %v3077, %v3195
    %v3212 = vadd.f32 %v3078, %v3196
    %v3213 = vadd.f32 %v3079, %v3197
    %v3214 = vld [vmem:[%s13] sm:$0xf]
    %v3215 = vld [vmem:[%s13 + $0x4] sm:$0xf]
    %v3216 = vld [vmem:[%s13 + $0x8] sm:$0xf]
    %v3217 = vld [vmem:[%s13 + $0xc] sm:$0xf]
    %v3218 = vld [vmem:[%s13 + $0x10] sm:$0xf]
    %v3219 = vld [vmem:[%s13 + $0x14] sm:$0xf]
    %v3220 = vld [vmem:[%s13 + $0x18] sm:$0xf]
    %v3221 = vld [vmem:[%s13 + $0x1c] sm:$0xf]
    %v3222 = vld [vmem:[%s13 + $0x20] sm:$0xf]
    %v3223 = vld [vmem:[%s13 + $0x24] sm:$0xf]
    %v3224 = vld [vmem:[%s13 + $0x28] sm:$0xf]
    %v3225 = vld [vmem:[%s13 + $0x2c] sm:$0xf]
    %v3226 = vld [vmem:[%s13 + $0x30] sm:$0xf]
    %v3227 = vld [vmem:[%s13 + $0x34] sm:$0xf]
    %v3228 = vld [vmem:[%s13 + $0x38] sm:$0xf]
    %v3229 = vld [vmem:[%s13 + $0x3c] sm:$0xf]
    %v3230 = vld [vmem:[%s2] sm:$0xf]
    %v3231 = vld [vmem:[%s2 + $0x4] sm:$0xf]
    %v3232 = vld [vmem:[%s2 + $0x8] sm:$0xf]
    %v3233 = vld [vmem:[%s2 + $0xc] sm:$0xf]
    %v3234 = vpack.c.bf16 %v3199, %v3198
    %v3235 = vpack.c.bf16 %v3201, %v3200
    %v3236 = vpack.c.bf16 %v3203, %v3202
    %v3237 = vpack.c.bf16 %v3205, %v3204
    %v3238 = vpack.c.bf16 %v3207, %v3206
    %v3239 = vpack.c.bf16 %v3209, %v3208
    %v3240 = vpack.c.bf16 %v3211, %v3210
    %v3241 = vpack.c.bf16 %v3213, %v3212
    %v3246 = vunpack.c.l.b16 %v3230
    %v3247 = vunpack.c.l.b16 %v3231
    %v3248 = vunpack.c.l.b16 %v3232
    %v3249 = vunpack.c.l.b16 %v3233
    %v3250 = vpack.c.b16 %v3247, %v3246
    %v3251 = vpack.c.b16 %v3249, %v3248
    %3254 = vmatpush.bf16.msra.mxu0 %v3241
    %3255 = vmatpush.bf16.msra.mxu0 %v3240
    %3256 = vmatpush.bf16.msra.mxu0 %v3239
    %3257 = vmatpush.bf16.msra.mxu0 %v3238
    %3258 = vmatpush.bf16.msra.mxu0 %v3237
    %3259 = vmatpush.bf16.msra.mxu0 %v3236
    %3260 = vmatpush.bf16.msra.mxu0 %v3235
    %3261 = vmatpush.bf16.msra.mxu0 %v3234
    %3262 = vmatmul.bf16.gmra.mxu0 %v3250
    %v3263 = vpop.f32.mrf.mxu0
    %v3264 = vadd.f32 0.0, %v3263
    %v3265 = vpop.f32.mrf.mxu0
    %v3266 = vadd.f32 0.0, %v3265
    %3267 = vmatmul.bf16.gmra.mxu0 %v3251
    %v3268 = vpop.f32.mrf.mxu0
    %v3269 = vadd.f32 0.0, %v3268
    %v3270 = vpop.f32.mrf.mxu0
    %v3271 = vadd.f32 0.0, %v3270
    %3272 = vdwg.mxu0
    %v3273 = vpack.c.bf16 %v3266, %v3264
    %v3274 = vpack.c.bf16 %v3271, %v3269
    %s3275 = scalar_lea.vmem %s2, 16
    %v3276 = vld [vmem:[%s3275] sm:$0xf]
    %v3277 = vld [vmem:[%s3275 + $0x4] sm:$0xf]
    %v3278 = vld [vmem:[%s3275 + $0x8] sm:$0xf]
    %v3279 = vld [vmem:[%s3275 + $0xc] sm:$0xf]
    %v3284 = vunpack.c.l.b16 %v3276
    %v3285 = vunpack.c.l.b16 %v3277
    %v3286 = vunpack.c.l.b16 %v3278
    %v3287 = vunpack.c.l.b16 %v3279
    %v3288 = vpack.c.b16 %v3285, %v3284
    %v3289 = vpack.c.b16 %v3287, %v3286
    %3292 = vmatpush.bf16.msra.mxu0 %v3241
    %3293 = vmatpush.bf16.msra.mxu0 %v3240
    %3294 = vmatpush.bf16.msra.mxu0 %v3239
    %3295 = vmatpush.bf16.msra.mxu0 %v3238
    %3296 = vmatpush.bf16.msra.mxu0 %v3237
    %3297 = vmatpush.bf16.msra.mxu0 %v3236
    %3298 = vmatpush.bf16.msra.mxu0 %v3235
    %3299 = vmatpush.bf16.msra.mxu0 %v3234
    %3300 = vmatmul.bf16.gmra.mxu0 %v3288
    %v3301 = vpop.f32.mrf.mxu0
    %v3302 = vadd.f32 0.0, %v3301
    %v3303 = vpop.f32.mrf.mxu0
    %v3304 = vadd.f32 0.0, %v3303
    %3305 = vmatmul.bf16.gmra.mxu0 %v3289
    %v3306 = vpop.f32.mrf.mxu0
    %v3307 = vadd.f32 0.0, %v3306
    %v3308 = vpop.f32.mrf.mxu0
    %v3309 = vadd.f32 0.0, %v3308
    %3310 = vdwg.mxu0
    %v3311 = vpack.c.bf16 %v3304, %v3302
    %v3312 = vpack.c.bf16 %v3309, %v3307
    %v3317 = vunpack.c.l.b16 %v3218
    %v3318 = vunpack.c.l.b16 %v3219
    %v3319 = vunpack.c.l.b16 %v3220
    %v3320 = vunpack.c.l.b16 %v3221
    %v3321 = vpack.c.b16 %v3318, %v3317
    %v3322 = vpack.c.b16 %v3320, %v3319
    %v3326 = vsel %vm3108, %v3311, 0
    %v3329 = vsel %vm3108, %v3312, 0
    %3331 = vmatpush.bf16.msra.mxu0 0
    %3332 = vmatpush.bf16.msra.mxu0 0
    %3333 = vmatpush.bf16.msra.mxu0 0
    %3334 = vmatpush.bf16.msra.mxu0 0
    %3335 = vmatpush.bf16.msra.mxu0 0
    %3336 = vmatpush.bf16.msra.mxu0 0
    %3337 = vmatpush.bf16.msra.mxu0 %v3322
    %3338 = vmatpush.bf16.msra.mxu0 %v3321
    %3339 = vmatmul.bf16.gmra.mxu0 %v3326
    %v3340 = vpop.f32.mrf.mxu0
    %v3341 = vadd.f32 0.0, %v3340
    %v3342 = vpop.f32.mrf.mxu0
    %v3343 = vadd.f32 0.0, %v3342
    %3344 = vmatmul.bf16.gmra.mxu0 %v3329
    %v3345 = vpop.f32.mrf.mxu0
    %v3346 = vadd.f32 0.0, %v3345
    %v3347 = vpop.f32.mrf.mxu0
    %v3348 = vadd.f32 0.0, %v3347
    %3349 = vdwg.mxu0
    %v3354 = vunpack.c.l.b16 %v3214
    %v3355 = vunpack.c.l.b16 %v3215
    %v3356 = vunpack.c.l.b16 %v3216
    %v3357 = vunpack.c.l.b16 %v3217
    %v3358 = vpack.c.b16 %v3355, %v3354
    %v3359 = vpack.c.b16 %v3357, %v3356
    %v3363 = vsel %vm3108, %v3273, 0
    %v3366 = vsel %vm3108, %v3274, 0
    %3368 = vmatpush.bf16.msra.mxu0 0
    %3369 = vmatpush.bf16.msra.mxu0 0
    %3370 = vmatpush.bf16.msra.mxu0 0
    %3371 = vmatpush.bf16.msra.mxu0 0
    %3372 = vmatpush.bf16.msra.mxu0 0
    %3373 = vmatpush.bf16.msra.mxu0 0
    %3374 = vmatpush.bf16.msra.mxu0 %v3359
    %3375 = vmatpush.bf16.msra.mxu0 %v3358
    %3376 = vmatmul.bf16.gmra.mxu0 %v3363
    %v3377 = vpop.f32.mrf.mxu0
    %v3378 = vadd.f32 %v3341, %v3377
    %v3379 = vpop.f32.mrf.mxu0
    %v3380 = vadd.f32 %v3343, %v3379
    %3381 = vmatmul.bf16.gmra.mxu0 %v3366
    %v3382 = vpop.f32.mrf.mxu0
    %v3383 = vadd.f32 %v3346, %v3382
    %v3384 = vpop.f32.mrf.mxu0
    %v3385 = vadd.f32 %v3348, %v3384
    %3386 = vdwg.mxu0
    %s3387 = scalar_lea.vmem %s2, 32
    %v3388 = vld [vmem:[%s3387] sm:$0xf]
    %v3389 = vld [vmem:[%s3387 + $0x4] sm:$0xf]
    %v3390 = vld [vmem:[%s3387 + $0x8] sm:$0xf]
    %v3391 = vld [vmem:[%s3387 + $0xc] sm:$0xf]
    %v3396 = vunpack.c.l.b16 %v3388
    %v3397 = vunpack.c.l.b16 %v3389
    %v3398 = vunpack.c.l.b16 %v3390
    %v3399 = vunpack.c.l.b16 %v3391
    %v3400 = vpack.c.b16 %v3397, %v3396
    %v3401 = vpack.c.b16 %v3399, %v3398
    %3404 = vmatpush.bf16.msra.mxu0 %v3241
    %3405 = vmatpush.bf16.msra.mxu0 %v3240
    %3406 = vmatpush.bf16.msra.mxu0 %v3239
    %3407 = vmatpush.bf16.msra.mxu0 %v3238
    %3408 = vmatpush.bf16.msra.mxu0 %v3237
    %3409 = vmatpush.bf16.msra.mxu0 %v3236
    %3410 = vmatpush.bf16.msra.mxu0 %v3235
    %3411 = vmatpush.bf16.msra.mxu0 %v3234
    %3412 = vmatmul.bf16.gmra.mxu0 %v3400
    %v3413 = vpop.f32.mrf.mxu0
    %v3414 = vadd.f32 0.0, %v3413
    %v3415 = vpop.f32.mrf.mxu0
    %v3416 = vadd.f32 0.0, %v3415
    %3417 = vmatmul.bf16.gmra.mxu0 %v3401
    %v3418 = vpop.f32.mrf.mxu0
    %v3419 = vadd.f32 0.0, %v3418
    %v3420 = vpop.f32.mrf.mxu0
    %v3421 = vadd.f32 0.0, %v3420
    %3422 = vdwg.mxu0
    %v3423 = vpack.c.bf16 %v3416, %v3414
    %v3424 = vpack.c.bf16 %v3421, %v3419
    %v3429 = vunpack.c.l.b16 %v3222
    %v3430 = vunpack.c.l.b16 %v3223
    %v3431 = vunpack.c.l.b16 %v3224
    %v3432 = vunpack.c.l.b16 %v3225
    %v3433 = vpack.c.b16 %v3430, %v3429
    %v3434 = vpack.c.b16 %v3432, %v3431
    %v3438 = vsel %vm3108, %v3423, 0
    %v3441 = vsel %vm3108, %v3424, 0
    %3443 = vmatpush.bf16.msra.mxu0 0
    %3444 = vmatpush.bf16.msra.mxu0 0
    %3445 = vmatpush.bf16.msra.mxu0 0
    %3446 = vmatpush.bf16.msra.mxu0 0
    %3447 = vmatpush.bf16.msra.mxu0 0
    %3448 = vmatpush.bf16.msra.mxu0 0
    %3449 = vmatpush.bf16.msra.mxu0 %v3434
    %3450 = vmatpush.bf16.msra.mxu0 %v3433
    %3451 = vmatmul.bf16.gmra.mxu0 %v3438
    %v3452 = vpop.f32.mrf.mxu0
    %v3453 = vadd.f32 0.0, %v3452
    %v3454 = vpop.f32.mrf.mxu0
    %v3455 = vadd.f32 0.0, %v3454
    %3456 = vmatmul.bf16.gmra.mxu0 %v3441
    %v3457 = vpop.f32.mrf.mxu0
    %v3458 = vadd.f32 0.0, %v3457
    %v3459 = vpop.f32.mrf.mxu0
    %v3460 = vadd.f32 0.0, %v3459
    %3461 = vdwg.mxu0
    %v3462 = vadd.f32 %v3378, %v3453
    %v3463 = vadd.f32 %v3380, %v3455
    %v3464 = vadd.f32 %v3383, %v3458
    %v3465 = vadd.f32 %v3385, %v3460
    %s3466 = scalar_lea.vmem %s2, 48
    %v3467 = vld [vmem:[%s3466] sm:$0xf]
    %v3468 = vld [vmem:[%s3466 + $0x4] sm:$0xf]
    %v3469 = vld [vmem:[%s3466 + $0x8] sm:$0xf]
    %v3470 = vld [vmem:[%s3466 + $0xc] sm:$0xf]
    %v3475 = vunpack.c.l.b16 %v3467
    %v3476 = vunpack.c.l.b16 %v3468
    %v3477 = vunpack.c.l.b16 %v3469
    %v3478 = vunpack.c.l.b16 %v3470
    %v3479 = vpack.c.b16 %v3476, %v3475
    %v3480 = vpack.c.b16 %v3478, %v3477
    %3483 = vmatpush.bf16.msra.mxu0 %v3241
    %3484 = vmatpush.bf16.msra.mxu0 %v3240
    %3485 = vmatpush.bf16.msra.mxu0 %v3239
    %3486 = vmatpush.bf16.msra.mxu0 %v3238
    %3487 = vmatpush.bf16.msra.mxu0 %v3237
    %3488 = vmatpush.bf16.msra.mxu0 %v3236
    %3489 = vmatpush.bf16.msra.mxu0 %v3235
    %3490 = vmatpush.bf16.msra.mxu0 %v3234
    %3491 = vmatmul.bf16.gmra.mxu0 %v3479
    %v3492 = vpop.f32.mrf.mxu0
    %v3493 = vadd.f32 0.0, %v3492
    %v3494 = vpop.f32.mrf.mxu0
    %v3495 = vadd.f32 0.0, %v3494
    %3496 = vmatmul.bf16.gmra.mxu0 %v3480
    %v3497 = vpop.f32.mrf.mxu0
    %v3498 = vadd.f32 0.0, %v3497
    %v3499 = vpop.f32.mrf.mxu0
    %v3500 = vadd.f32 0.0, %v3499
    %3501 = vdwg.mxu0
    %v3502 = vpack.c.bf16 %v3495, %v3493
    %v3503 = vpack.c.bf16 %v3500, %v3498
    %v3508 = vunpack.c.l.b16 %v3226
    %v3509 = vunpack.c.l.b16 %v3227
    %v3510 = vunpack.c.l.b16 %v3228
    %v3511 = vunpack.c.l.b16 %v3229
    %v3512 = vpack.c.b16 %v3509, %v3508
    %v3513 = vpack.c.b16 %v3511, %v3510
    %v3517 = vsel %vm3108, %v3502, 0
    %v3520 = vsel %vm3108, %v3503, 0
    %3522 = vmatpush.bf16.msra.mxu0 0
    %3523 = vmatpush.bf16.msra.mxu0 0
    %3524 = vmatpush.bf16.msra.mxu0 0
    %3525 = vmatpush.bf16.msra.mxu0 0
    %3526 = vmatpush.bf16.msra.mxu0 0
    %3527 = vmatpush.bf16.msra.mxu0 0
    %3528 = vmatpush.bf16.msra.mxu0 %v3513
    %3529 = vmatpush.bf16.msra.mxu0 %v3512
    %3530 = vmatmul.bf16.gmra.mxu0 %v3517
    %v3531 = vpop.f32.mrf.mxu0
    %v3532 = vadd.f32 0.0, %v3531
    %v3533 = vpop.f32.mrf.mxu0
    %v3534 = vadd.f32 0.0, %v3533
    %3535 = vmatmul.bf16.gmra.mxu0 %v3520
    %v3536 = vpop.f32.mrf.mxu0
    %v3537 = vadd.f32 0.0, %v3536
    %v3538 = vpop.f32.mrf.mxu0
    %v3539 = vadd.f32 0.0, %v3538
    %3540 = vdwg.mxu0
    %v3541 = vadd.f32 %v3462, %v3532
    %v3542 = vadd.f32 %v3463, %v3534
    %v3543 = vadd.f32 %v3464, %v3537
    %v3544 = vadd.f32 %v3465, %v3539
    %v3545 = vld [vmem:[%s14] sm:$0x1]
    %v3547 = vperm.slane %v3545, 0
    %v3549 = vadd.f32 %v3541, %v3547
    %v3550 = vadd.f32 %v3542, %v3547
    %v3551 = vadd.f32 %v3543, %v3547
    %v3552 = vadd.f32 %v3544, %v3547
    %v3553 = vld [vmem:[%s15] sm:$0xf]
    %v3554 = vld [vmem:[%s15 + $0x4] sm:$0xf]
    %v3555 = vld [vmem:[%s15 + $0x8] sm:$0xf]
    %v3556 = vld [vmem:[%s15 + $0xc] sm:$0xf]
    %v3557 = vld [vmem:[%s15 + $0x10] sm:$0xf]
    %v3558 = vld [vmem:[%s15 + $0x14] sm:$0xf]
    %v3559 = vpack.c.bf16 %v3550, %v3549
    %v3560 = vpack.c.bf16 %v3552, %v3551
    %v3561 = vld [vmem:[%s16] sm:$0x1]
    %v3563 = vperm.slane %v3561, 0
    %v3571 = vunpack.c.l.b16 %v3553
    %v3572 = vunpack.c.l.b16 %v3554
    %v3573 = vunpack.c.l.b16 %v3555
    %v3574 = vunpack.c.l.b16 %v3556
    %v3575 = vunpack.c.l.b16 %v3557
    %v3576 = vunpack.c.l.b16 %v3558
    %v3577 = vpack.c.b16 %v3572, %v3571
    %v3578 = vpack.c.b16 %v3574, %v3573
    %v3579 = vpack.c.b16 %v3576, %v3575
    %vm3583 = vcmask 392192
    %v3585 = vsel %vm3583, %v3559, 0
    %v3588 = vsel %vm3583, %v3560, 0
    %3590 = vmatpush.bf16.msra.mxu0 0
    %3591 = vmatpush.bf16.msra.mxu0 0
    %3592 = vmatpush.bf16.msra.mxu0 0
    %3593 = vmatpush.bf16.msra.mxu0 0
    %3594 = vmatpush.bf16.msra.mxu0 0
    %3595 = vmatpush.bf16.msra.mxu0 %v3579
    %3596 = vmatpush.bf16.msra.mxu0 %v3578
    %3597 = vmatpush.bf16.msra.mxu0 %v3577
    %3598 = vmatmul.bf16.gmra.mxu0 %v3585
    %v3599 = vpop.f32.mrf.mxu0
    %v3600 = vadd.f32 %v3563, %v3599
    %v3601 = vpop.f32.mrf.mxu0
    %v3602 = vadd.f32 %v3563, %v3601
    %3603 = vmatmul.bf16.gmra.mxu0 %v3588
    %v3604 = vpop.f32.mrf.mxu0
    %v3605 = vadd.f32 %v3563, %v3604
    %v3606 = vpop.f32.mrf.mxu0
    %v3607 = vadd.f32 %v3563, %v3606
    %3608 = vdwg.mxu0
    %v3609 = vmax.f32 %v3600, 0.0
    %v3610 = vmax.f32 %v3602, 0.0
    %v3611 = vmax.f32 %v3605, 0.0
    %v3612 = vmax.f32 %v3607, 0.0
    %v3613 = vadd.f32 %v3549, %v3609
    %v3614 = vadd.f32 %v3550, %v3610
    %v3615 = vadd.f32 %v3551, %v3611
    %v3616 = vadd.f32 %v3552, %v3612
    %v3617 = vld [vmem:[%s17] sm:$0xf]
    %v3618 = vld [vmem:[%s17 + $0x4] sm:$0xf]
    %v3619 = vld [vmem:[%s17 + $0x8] sm:$0xf]
    %v3620 = vld [vmem:[%s17 + $0xc] sm:$0xf]
    %v3621 = vld [vmem:[%s17 + $0x10] sm:$0xf]
    %v3622 = vld [vmem:[%s17 + $0x14] sm:$0xf]
    %v3623 = vld [vmem:[%s17 + $0x18] sm:$0xf]
    %v3624 = vld [vmem:[%s17 + $0x1c] sm:$0xf]
    %v3625 = vld [vmem:[%s17 + $0x20] sm:$0xf]
    %v3626 = vld [vmem:[%s17 + $0x24] sm:$0xf]
    %v3627 = vld [vmem:[%s17 + $0x28] sm:$0xf]
    %v3628 = vld [vmem:[%s17 + $0x2c] sm:$0xf]
    %v3629 = vld [vmem:[%s17 + $0x30] sm:$0xf]
    %v3630 = vld [vmem:[%s17 + $0x34] sm:$0xf]
    %v3631 = vld [vmem:[%s17 + $0x38] sm:$0xf]
    %v3632 = vld [vmem:[%s17 + $0x3c] sm:$0xf]
    %v3633 = vld [vmem:[%s17 + $0x40] sm:$0xf]
    %v3634 = vld [vmem:[%s17 + $0x44] sm:$0xf]
    %v3635 = vld [vmem:[%s17 + $0x48] sm:$0xf]
    %v3636 = vld [vmem:[%s17 + $0x4c] sm:$0xf]
    %v3637 = vld [vmem:[%s17 + $0x50] sm:$0xf]
    %v3638 = vld [vmem:[%s17 + $0x54] sm:$0xf]
    %v3639 = vld [vmem:[%s17 + $0x58] sm:$0xf]
    %v3640 = vld [vmem:[%s17 + $0x5c] sm:$0xf]
    %v3641 = vld [vmem:[%s3] sm:$0xf]
    %v3642 = vpack.c.bf16 %v3614, %v3613
    %v3643 = vpack.c.bf16 %v3616, %v3615
    %v3645 = vsel %vm3108, %v3641, 0
    %3647 = vmatpush.bf16.msra.mxu0 0
    %3648 = vmatpush.bf16.msra.mxu0 0
    %3649 = vmatpush.bf16.msra.mxu0 0
    %3650 = vmatpush.bf16.msra.mxu0 0
    %3651 = vmatpush.bf16.msra.mxu0 0
    %3652 = vmatpush.bf16.msra.mxu0 0
    %3653 = vmatpush.bf16.msra.mxu0 %v3643
    %3654 = vmatpush.bf16.msra.mxu0 %v3642
    %3655 = vmatmul.bf16.gmra.mxu0 %v3645
    %v3656 = vpop.f32.mrf.mxu0
    %v3657 = vadd.f32 0.0, %v3656
    %v3658 = vpop.f32.mrf.mxu0
    %3659 = vdwg.mxu0
    %v3660 = vpack.c.bf16 %v3657, %v3657
    %s3661 = scalar_lea.vmem %s3, 4
    %v3662 = vld [vmem:[%s3661] sm:$0xf]
    %v3664 = vsel %vm3108, %v3662, 0
    %3666 = vmatpush.bf16.msra.mxu0 0
    %3667 = vmatpush.bf16.msra.mxu0 0
    %3668 = vmatpush.bf16.msra.mxu0 0
    %3669 = vmatpush.bf16.msra.mxu0 0
    %3670 = vmatpush.bf16.msra.mxu0 0
    %3671 = vmatpush.bf16.msra.mxu0 0
    %3672 = vmatpush.bf16.msra.mxu0 %v3643
    %3673 = vmatpush.bf16.msra.mxu0 %v3642
    %3674 = vmatmul.bf16.gmra.mxu0 %v3664
    %v3675 = vpop.f32.mrf.mxu0
    %v3676 = vadd.f32 0.0, %v3675
    %v3677 = vpop.f32.mrf.mxu0
    %3678 = vdwg.mxu0
    %v3679 = vpack.c.bf16 %v3676, %v3676
    %v3686 = vunpack.c.l.b16 %v3623
    %v3687 = vunpack.c.l.b16 %v3624
    %v3688 = vunpack.c.l.b16 %v3625
    %v3689 = vunpack.c.l.b16 %v3626
    %v3690 = vunpack.c.l.b16 %v3627
    %v3691 = vunpack.c.l.b16 %v3628
    %v3692 = vpack.c.b16 %v3687, %v3686
    %v3693 = vpack.c.b16 %v3689, %v3688
    %v3694 = vpack.c.b16 %v3691, %v3690
    %v3699 = vsel %vm3583, %v3679, 0
    %3701 = vmatpush.bf16.msra.mxu0 0
    %3702 = vmatpush.bf16.msra.mxu0 0
    %3703 = vmatpush.bf16.msra.mxu0 0
    %3704 = vmatpush.bf16.msra.mxu0 0
    %3705 = vmatpush.bf16.msra.mxu0 0
    %3706 = vmatpush.bf16.msra.mxu0 %v3694
    %3707 = vmatpush.bf16.msra.mxu0 %v3693
    %3708 = vmatpush.bf16.msra.mxu0 %v3692
    %3709 = vmatmul.bf16.gmra.mxu0 %v3699
    %v3710 = vpop.f32.mrf.mxu0
    %v3711 = vadd.f32 0.0, %v3710
    %v3712 = vpop.f32.mrf.mxu0
    %3713 = vdwg.mxu0
    %v3720 = vunpack.c.l.b16 %v3617
    %v3721 = vunpack.c.l.b16 %v3618
    %v3722 = vunpack.c.l.b16 %v3619
    %v3723 = vunpack.c.l.b16 %v3620
    %v3724 = vunpack.c.l.b16 %v3621
    %v3725 = vunpack.c.l.b16 %v3622
    %v3726 = vpack.c.b16 %v3721, %v3720
    %v3727 = vpack.c.b16 %v3723, %v3722
    %v3728 = vpack.c.b16 %v3725, %v3724
    %v3733 = vsel %vm3583, %v3660, 0
    %3735 = vmatpush.bf16.msra.mxu0 0
    %3736 = vmatpush.bf16.msra.mxu0 0
    %3737 = vmatpush.bf16.msra.mxu0 0
    %3738 = vmatpush.bf16.msra.mxu0 0
    %3739 = vmatpush.bf16.msra.mxu0 0
    %3740 = vmatpush.bf16.msra.mxu0 %v3728
    %3741 = vmatpush.bf16.msra.mxu0 %v3727
    %3742 = vmatpush.bf16.msra.mxu0 %v3726
    %3743 = vmatmul.bf16.gmra.mxu0 %v3733
    %v3744 = vpop.f32.mrf.mxu0
    %v3745 = vadd.f32 %v3711, %v3744
    %v3746 = vpop.f32.mrf.mxu0
    %3747 = vdwg.mxu0
    %s3748 = scalar_lea.vmem %s3, 8
    %v3749 = vld [vmem:[%s3748] sm:$0xf]
    %v3751 = vsel %vm3108, %v3749, 0
    %3753 = vmatpush.bf16.msra.mxu0 0
    %3754 = vmatpush.bf16.msra.mxu0 0
    %3755 = vmatpush.bf16.msra.mxu0 0
    %3756 = vmatpush.bf16.msra.mxu0 0
    %3757 = vmatpush.bf16.msra.mxu0 0
    %3758 = vmatpush.bf16.msra.mxu0 0
    %3759 = vmatpush.bf16.msra.mxu0 %v3643
    %3760 = vmatpush.bf16.msra.mxu0 %v3642
    %3761 = vmatmul.bf16.gmra.mxu0 %v3751
    %v3762 = vpop.f32.mrf.mxu0
    %v3763 = vadd.f32 0.0, %v3762
    %v3764 = vpop.f32.mrf.mxu0
    %3765 = vdwg.mxu0
    %v3766 = vpack.c.bf16 %v3763, %v3763
    %v3773 = vunpack.c.l.b16 %v3629
    %v3774 = vunpack.c.l.b16 %v3630
    %v3775 = vunpack.c.l.b16 %v3631
    %v3776 = vunpack.c.l.b16 %v3632
    %v3777 = vunpack.c.l.b16 %v3633
    %v3778 = vunpack.c.l.b16 %v3634
    %v3779 = vpack.c.b16 %v3774, %v3773
    %v3780 = vpack.c.b16 %v3776, %v3775
    %v3781 = vpack.c.b16 %v3778, %v3777
    %v3786 = vsel %vm3583, %v3766, 0
    %3788 = vmatpush.bf16.msra.mxu0 0
    %3789 = vmatpush.bf16.msra.mxu0 0
    %3790 = vmatpush.bf16.msra.mxu0 0
    %3791 = vmatpush.bf16.msra.mxu0 0
    %3792 = vmatpush.bf16.msra.mxu0 0
    %3793 = vmatpush.bf16.msra.mxu0 %v3781
    %3794 = vmatpush.bf16.msra.mxu0 %v3780
    %3795 = vmatpush.bf16.msra.mxu0 %v3779
    %3796 = vmatmul.bf16.gmra.mxu0 %v3786
    %v3797 = vpop.f32.mrf.mxu0
    %v3798 = vadd.f32 0.0, %v3797
    %v3799 = vpop.f32.mrf.mxu0
    %3800 = vdwg.mxu0
    %v3801 = vadd.f32 %v3745, %v3798
    %s3802 = scalar_lea.vmem %s3, 12
    %v3803 = vld [vmem:[%s3802] sm:$0xf]
    %v3805 = vsel %vm3108, %v3803, 0
    %3807 = vmatpush.bf16.msra.mxu0 0
    %3808 = vmatpush.bf16.msra.mxu0 0
    %3809 = vmatpush.bf16.msra.mxu0 0
    %3810 = vmatpush.bf16.msra.mxu0 0
    %3811 = vmatpush.bf16.msra.mxu0 0
    %3812 = vmatpush.bf16.msra.mxu0 0
    %3813 = vmatpush.bf16.msra.mxu0 %v3643
    %3814 = vmatpush.bf16.msra.mxu0 %v3642
    %3815 = vmatmul.bf16.gmra.mxu0 %v3805
    %v3816 = vpop.f32.mrf.mxu0
    %v3817 = vadd.f32 0.0, %v3816
    %v3818 = vpop.f32.mrf.mxu0
    %3819 = vdwg.mxu0
    %v3820 = vpack.c.bf16 %v3817, %v3817
    %v3827 = vunpack.c.l.b16 %v3635
    %v3828 = vunpack.c.l.b16 %v3636
    %v3829 = vunpack.c.l.b16 %v3637
    %v3830 = vunpack.c.l.b16 %v3638
    %v3831 = vunpack.c.l.b16 %v3639
    %v3832 = vunpack.c.l.b16 %v3640
    %v3833 = vpack.c.b16 %v3828, %v3827
    %v3834 = vpack.c.b16 %v3830, %v3829
    %v3835 = vpack.c.b16 %v3832, %v3831
    %v3840 = vsel %vm3583, %v3820, 0
    %3842 = vmatpush.bf16.msra.mxu0 0
    %3843 = vmatpush.bf16.msra.mxu0 0
    %3844 = vmatpush.bf16.msra.mxu0 0
    %3845 = vmatpush.bf16.msra.mxu0 0
    %3846 = vmatpush.bf16.msra.mxu0 0
    %3847 = vmatpush.bf16.msra.mxu0 %v3835
    %3848 = vmatpush.bf16.msra.mxu0 %v3834
    %3849 = vmatpush.bf16.msra.mxu0 %v3833
    %3850 = vmatmul.bf16.gmra.mxu0 %v3840
    %v3851 = vpop.f32.mrf.mxu0
    %v3852 = vadd.f32 0.0, %v3851
    %v3853 = vpop.f32.mrf.mxu0
    %3854 = vdwg.mxu0
    %v3855 = vadd.f32 %v3801, %v3852
    %v3856 = vld [vmem:[%s18] sm:$0x1]
    %v3858 = vperm.slane %v3856, 0
    %v3860 = vadd.f32 %v3855, %v3858
    %v3861 = vld [vmem:[%s19] sm:$0xf]
    %v3862 = vld [vmem:[%s19 + $0x4] sm:$0xf]
    %v3863 = vld [vmem:[%s19 + $0x8] sm:$0xf]
    %v3864 = vld [vmem:[%s19 + $0xc] sm:$0xf]
    %v3865 = vld [vmem:[%s19 + $0x10] sm:$0xf]
    %v3866 = vld [vmem:[%s19 + $0x14] sm:$0xf]
    %v3867 = vld [vmem:[%s19 + $0x18] sm:$0xf]
    %v3868 = vld [vmem:[%s19 + $0x1c] sm:$0xf]
    %v3869 = vpack.c.bf16 %v3860, %v3860
    %v3870 = vld [vmem:[%s20] sm:$0x1]
    %v3872 = vperm.slane %v3870, 0
    %v3882 = vunpack.c.l.b16 %v3861
    %v3883 = vunpack.c.l.b16 %v3862
    %v3884 = vunpack.c.l.b16 %v3863
    %v3885 = vunpack.c.l.b16 %v3864
    %v3886 = vunpack.c.l.b16 %v3865
    %v3887 = vunpack.c.l.b16 %v3866
    %v3888 = vunpack.c.l.b16 %v3867
    %v3889 = vunpack.c.l.b16 %v3868
    %v3890 = vpack.c.b16 %v3883, %v3882
    %v3891 = vpack.c.b16 %v3885, %v3884
    %v3892 = vpack.c.b16 %v3887, %v3886
    %v3893 = vpack.c.b16 %v3889, %v3888
    %vm3898 = vcmask 523264
    %v3900 = vsel %vm3898, %v3869, 0
    %3902 = vmatpush.bf16.msra.mxu0 0
    %3903 = vmatpush.bf16.msra.mxu0 0
    %3904 = vmatpush.bf16.msra.mxu0 0
    %3905 = vmatpush.bf16.msra.mxu0 0
    %3906 = vmatpush.bf16.msra.mxu0 %v3893
    %3907 = vmatpush.bf16.msra.mxu0 %v3892
    %3908 = vmatpush.bf16.msra.mxu0 %v3891
    %3909 = vmatpush.bf16.msra.mxu0 %v3890
    %3910 = vmatmul.bf16.gmra.mxu0 %v3900
    %v3911 = vpop.f32.mrf.mxu0
    %v3912 = vadd.f32 %v3872, %v3911
    %v3913 = vpop.f32.mrf.mxu0
    %3914 = vdwg.mxu0
    %v3915 = vmax.f32 %v3912, 0.0
    %v3916 = vadd.f32 %v3860, %v3915
    %3917 = vst.msk [vmem:[#allocation2] sm:$0xff] %vm3898, %v3916
    %v3918 = vld [vmem:[%s4] sm:$0x1]
    %v3919 = vpack.c.bf16 %v3916, %v3916
    %vm3920 = vcmask 64512
    %v3922 = vsel %vm3920, %v3918, 0
    %vm3924 = vcmask 1043456
    %v3926 = vsel %vm3924, %v3919, 0
    %3928 = vmatpush.bf16.msra.mxu0 0
    %3929 = vmatpush.bf16.msra.mxu0 0
    %3930 = vmatpush.bf16.msra.mxu0 0
    %3931 = vmatpush.bf16.msra.mxu0 0
    %3932 = vmatpush.bf16.msra.mxu0 0
    %3933 = vmatpush.bf16.msra.mxu0 0
    %3934 = vmatpush.bf16.msra.mxu0 0
    %3935 = vmatpush.bf16.msra.mxu0 %v3926
    %3936 = vmatmul.bf16.gmra.mxu0 %v3922
    %v3937 = vpop.f32.mrf.mxu0
    %v3938 = vadd.f32 0.0, %v3937
    %v3939 = vpop.f32.mrf.mxu0
    %3940 = vdwg.mxu0
    %v3941 = vld [vmem:[%s21] sm:$0xf]
    %v3942 = vld [vmem:[%s21 + $0x4] sm:$0xf]
    %v3943 = vld [vmem:[%s21 + $0x8] sm:$0xf]
    %v3944 = vld [vmem:[%s21 + $0xc] sm:$0xf]
    %v3945 = vld [vmem:[%s21 + $0x10] sm:$0xf]
    %v3946 = vld [vmem:[%s21 + $0x14] sm:$0xf]
    %v3947 = vld [vmem:[%s21 + $0x18] sm:$0xf]
    %v3948 = vld [vmem:[%s21 + $0x1c] sm:$0xf]
    %v3949 = vpack.c.bf16 %v3938, %v3938
    %v3950 = vld [vmem:[%s22] sm:$0x1]
    %v3952 = vperm.slane %v3950, 0
    %v3962 = vunpack.c.l.b16 %v3941
    %v3963 = vunpack.c.l.b16 %v3942
    %v3964 = vunpack.c.l.b16 %v3943
    %v3965 = vunpack.c.l.b16 %v3944
    %v3966 = vunpack.c.l.b16 %v3945
    %v3967 = vunpack.c.l.b16 %v3946
    %v3968 = vunpack.c.l.b16 %v3947
    %v3969 = vunpack.c.l.b16 %v3948
    %v3970 = vpack.c.b16 %v3963, %v3962
    %v3971 = vpack.c.b16 %v3965, %v3964
    %v3972 = vpack.c.b16 %v3967, %v3966
    %v3973 = vpack.c.b16 %v3969, %v3968
    %v3979 = vsel %vm3898, %v3949, 0
    %3981 = vmatpush.bf16.msra.mxu0 0
    %3982 = vmatpush.bf16.msra.mxu0 0
    %3983 = vmatpush.bf16.msra.mxu0 0
    %3984 = vmatpush.bf16.msra.mxu0 0
    %3985 = vmatpush.bf16.msra.mxu0 %v3973
    %3986 = vmatpush.bf16.msra.mxu0 %v3972
    %3987 = vmatpush.bf16.msra.mxu0 %v3971
    %3988 = vmatpush.bf16.msra.mxu0 %v3970
    %3989 = vmatmul.bf16.gmra.mxu0 %v3979
    %v3990 = vpop.f32.mrf.mxu0
    %v3991 = vadd.f32 %v3952, %v3990
    %v3992 = vpop.f32.mrf.mxu0
    %3993 = vdwg.mxu0
    %v3994 = vlaneseq
    %v3995 = vand.u32 %v3994, 127
    %vm3996 = vcmp.ge.s32.totalorder %v3995, 5
    %v3997 = vxor.u32 %v3991, 2147483648
    %v3998 = vmul.f32 %v3997, 1.442695
    %v3999 = vpow.pop %v3998
    %v4000 = vadd.f32 %v3999, 1.0
    %v4001 = vrcp.pop %v4000
    %v4002 = vmul.f32 %v4000, %v4001
    %v4003 = vsub.f32 1.0, %v4002
    %v4004 = vmul.f32 %v4001, %v4003
    %v4005 = vadd.f32 %v4001, %v4004
    %vm4006 = vweird.f32 %v4000
    %vm4007 = vweird.f32 %v4001
    %vm4008 = vmor %vm4006, %vm4007
    %v4009 = vsel %vm4008, %v4001, %v4005
    %v4010 = vand.u32 2147483647, %v4000
    %vm4011 = vcmp.eq.f32.partialorder %v4010, 8.507059e+37
    %v4012 = vand.u32 %v4000, 2147483648
    %v4013 = vor.u32 1.1754944e-38, %v4012
    %v4014 = vsel %vm4011, %v4013, %v4009
    %v4015 = vmul.f32 1.0, %v4014
    %v4016 = vsel %vm3996, %v4015, %v3991
    %vm4017 = vcmask 41984
    %4018 = vst.msk [vmem:[%s24] sm:$0x3] %vm4017, %v4016
    // Predicated region
    $region94: #{lsnet_multi_task_forward.1} parent=1 // pred_check
      _
    $region95: #{lsnet_multi_task_forward.1} parent=1 // pred_check_branch
      %4020 = sbr.rel (0) target = $region97
    $region96: #{lsnet_multi_task_forward.1} parent=1 // pred_region
      %4022 = vsyncadd [#allocation3], 0
      %s4024 = sshll.u32 [#allocation2], 4
      %s4025 = int_to_ptr.vmem [resolvable:$true] %s4024
      %s4026 = sshll.u32 %s23, 4
      %s4027 = int_to_ptr.hbm [resolvable:$true] %s4026
      %4029 = dma.vmem_to_hbm [thread:$0]  %s4025, 128, %s4027, [#allocation3]
    $region97: #{lsnet_multi_task_forward.1} parent=1 // pred_fallthru
      _
    // Predicated region
    $region98: #{lsnet_multi_task_forward.1} parent=1 // pred_check
      _
    $region99: #{lsnet_multi_task_forward.1} parent=1 // pred_check_branch
      %4031 = sbr.rel (0) target = $region101
    $region100: #{lsnet_multi_task_forward.1} parent=1 // pred_region
      _
    $region101: #{lsnet_multi_task_forward.1} parent=1 // pred_fallthru
      _
    // Predicated region
    $region102: #{lsnet_multi_task_forward.1} parent=1 // pred_check
      _
    $region103: #{lsnet_multi_task_forward.1} parent=1 // pred_check_branch
      %4033 = sbr.rel (0) target = $region105
    $region104: #{lsnet_multi_task_forward.1} parent=1 // pred_region
      %4035 = dma.done [#allocation3], 128
    $region105: #{lsnet_multi_task_forward.1} parent=1 // pred_fallthru
      _
    // Predicated region
    $region106: #{lsnet_multi_task_forward.1} parent=1 // pred_check
      _
    $region107: #{lsnet_multi_task_forward.1} parent=1 // pred_check_branch
      %4037 = sbr.rel (0) target = $region109
    $region108: #{lsnet_multi_task_forward.1} parent=1 // pred_region
      _
    $region109: #{lsnet_multi_task_forward.1} parent=1 // pred_fallthru
      _
    %4038 = vsyncpa [#allocation3], 1

</llo_original>
